<compile_context>
chip_gen: v7x
topology: tpu7x:2x2x1
jax: 0.10.0
libtpu: 0.0.40
codegen_flags: <defaults>
</compile_context>

<pallas_src>
import jax
import jax.numpy as jnp
from jax.experimental import pallas as pl
from jax.experimental.pallas import tpu as pltpu


# ----------------------------------------------------------------------------
# Fused kernel: all GRU layers + fc in one invocation (no grid).
# ----------------------------------------------------------------------------
def _make_charrnn_kernel(T, B_pad, H_pad, GPAD, num_layers):
    """Builds the fused kernel body.

    Ref layout (positional):
      x_ref (T*B_pad, D_pad), h0_ref (L, B_pad, H_pad),
      per layer l: wih_t (D_pad_l, 3*GPAD), whh_t (H_pad, 3*GPAD),
                   bih (1, 3*GPAD)  [b_hh_r, b_hh_z already folded in],
                   bhn (1, GPAD)    [b_hh_n only],
      wfc_pad (H_pad, NPAD), bfc_pad (1, NPAD),
      outputs: logits_ref (T*B_pad, NPAD), hfin_ref (L, B_pad, H_pad),
      scratch: gi_ref (T, B_pad, 3*GPAD), seq_ref (T, B_pad, H_pad).
    """

    def kernel(*refs):
        x_ref, h0_ref = refs[0], refs[1]
        w_refs = refs[2:2 + 4 * num_layers]
        wfc_ref = refs[2 + 4 * num_layers]
        bfc_ref = refs[3 + 4 * num_layers]
        logits_ref = refs[4 + 4 * num_layers]
        hfin_ref = refs[5 + 4 * num_layers]
        gi_ref = refs[6 + 4 * num_layers]          # (T, B_pad, 3*GPAD) scratch
        seq_ref = refs[7 + 4 * num_layers]         # (T, B_pad, H_pad)  scratch

        for l in range(num_layers):
            # Load this layer's weights once (hoisted out of the time loop).
            wih = w_refs[4 * l][...]               # (D_pad_l, 3*GPAD)
            whh = w_refs[4 * l + 1][...]           # (H_pad, 3*GPAD)
            bih = w_refs[4 * l + 2][...]           # (1, 3*GPAD)
            bhn = w_refs[4 * l + 3][...]           # (1, GPAD)

            # Layer input: raw x for layer 0, previous layer's hidden sequence
            # (held in VMEM scratch) otherwise.  Reshape only splits/merges the
            # leading (sublane-major) axis at tile boundaries -> layout-free.
            if l == 0:
                src = x_ref[...]                   # (T*B_pad, D_pad)
            else:
                src = seq_ref[...].reshape(T * B_pad, H_pad)

            # Input projection for ALL timesteps: one MXU pass, written to an
            # aligned VMEM scratch so the serial loop only does leading-axis
            # loads (no register-resident slicing, no vreg pressure).
            gi_ref[...] = (jnp.dot(src, wih, preferred_element_type=jnp.float32)
                           + bih).reshape(T, B_pad, 3 * GPAD)

            # Hoisted broadcast (JAX does not CSE broadcast_in_dim in loops).
            bhn_b = jnp.broadcast_to(bhn, (B_pad, GPAD))

            h = h0_ref[l]                          # (B_pad, H_pad)
            for t in range(T):                     # static unroll; T is small
                gi = gi_ref[t]                     # (B_pad, 3*GPAD) aligned vld
                # One fused MXU push per step (do not split per gate).
                gh = jnp.dot(h, whh, preferred_element_type=jnp.float32)
                r = jax.nn.sigmoid(gi[:, 0:GPAD] + gh[:, 0:GPAD])
                z = jax.nn.sigmoid(gi[:, GPAD:2 * GPAD] + gh[:, GPAD:2 * GPAD])
                n = jnp.tanh(gi[:, 2 * GPAD:] + r * (gh[:, 2 * GPAD:] + bhn_b))
                h = n + z * (h - n)                # == (1 - z) * n + z * h
                seq_ref[t] = h                     # aligned, unmasked vst

            hfin_ref[l] = h.astype(hfin_ref.dtype)

        # Final fc over the whole (T*B_pad, H_pad) sequence; lane-dense output.
        logits_ref[...] = (
            jnp.dot(seq_ref[...].reshape(T * B_pad, H_pad), wfc_ref[...],
                    preferred_element_type=jnp.float32)
            + bfc_ref[...]).astype(logits_ref.dtype)

    return kernel


# ----------------------------------------------------------------------------
# Full CharRNN forward (eval mode).
# ----------------------------------------------------------------------------
@jax.jit
def char_rnn_forward(x_btd, kparams, hidden0):
    """x_btd: (B, T, n_chars) batch_first. hidden0: (num_layers, B, H).
    kparams: output of prepare_kernel_params (pre-transposed / padded weights).
    Returns (out (B, T, n_chars), hidden (num_layers, B, H))."""
    B, T, D = x_btd.shape
    L, _, H = hidden0.shape
    num_layers = L

    D_pad = kparams[0].shape[0]                    # layer-0 input lanes (128-pad)
    H_pad = kparams[1].shape[0]                    # hidden lanes (128-pad)
    GPAD = kparams[1].shape[1] // 3                # per-gate lane block (== H_pad)
    NPAD = kparams[-1].shape[-1]                   # fc output lanes (128-pad)
    B_pad = -(-B // 8) * 8                         # batch rows -> 8 sublanes

    # Time-major, zero-pad batch rows and feature lanes; cast fused in.
    x_tbd = jnp.transpose(x_btd, (1, 0, 2)).astype(jnp.float32)
    x_pad = jnp.zeros((T, B_pad, D_pad), jnp.float32).at[:, :B, :D].set(x_tbd)
    x2d = x_pad.reshape(T * B_pad, D_pad)
    h0_pad = jnp.zeros((L, B_pad, H_pad), jnp.float32).at[:, :B, :H].set(
        hidden0.astype(jnp.float32))

    kernel = _make_charrnn_kernel(T, B_pad, H_pad, GPAD, num_layers)

    n_inputs = 2 + len(kparams)
    vmem = pltpu.MemorySpace.VMEM
    logits_pad, h_final = pl.pallas_call(
        kernel,
        out_shape=(
            jax.ShapeDtypeStruct((T * B_pad, NPAD), jnp.float32),
            jax.ShapeDtypeStruct((L, B_pad, H_pad), jnp.float32),
        ),
        in_specs=[pl.BlockSpec(memory_space=vmem)] * n_inputs,
        out_specs=(pl.BlockSpec(memory_space=vmem),
                   pl.BlockSpec(memory_space=vmem)),
        scratch_shapes=[
            pltpu.VMEM((T, B_pad, 3 * GPAD), jnp.float32),   # hoisted gi
            pltpu.VMEM((T, B_pad, H_pad), jnp.float32),      # layer output seq
        ],
    )(x2d, h0_pad, *kparams)

    logits = logits_pad.reshape(T, B_pad, NPAD)[:, :B, :D]   # drop padding
    out_bth = jnp.transpose(logits, (1, 0, 2))               # (B, T, n_chars)
    hidden = h_final[:, :B, :H]
    return out_bth, hidden


# ----------------------------------------------------------------------------
# One-time parameter preparation (transpose, gate-block lane padding, bias
# folding, fc lane padding).  Done once, outside jit.
# ----------------------------------------------------------------------------
def prepare_kernel_params(params, num_layers, n_chars, hidden_size, lane=128):
    H = hidden_size
    GPAD = -(-H // lane) * lane                    # per-gate lane block
    H_pad = GPAD
    flat = []
    for l in range(num_layers):
        w_ih, w_hh, b_ih, b_hh = params[f"gru_l{l}"]   # (3H,Din),(3H,H),(3H,),(3H,)
        d_in = w_ih.shape[1]
        d_pad = (-(-d_in // lane) * lane) if l == 0 else H_pad

        wih_t = jnp.zeros((d_pad, 3 * GPAD), jnp.float32)
        whh_t = jnp.zeros((H_pad, 3 * GPAD), jnp.float32)
        bih_f = jnp.zeros((1, 3 * GPAD), jnp.float32)
        bhn = jnp.zeros((1, GPAD), jnp.float32)
        for g in range(3):                         # gate order r, z, n
            wih_t = wih_t.at[:d_in, g * GPAD:g * GPAD + H].set(
                jnp.transpose(w_ih[g * H:(g + 1) * H, :]))
            whh_t = whh_t.at[:H, g * GPAD:g * GPAD + H].set(
                jnp.transpose(w_hh[g * H:(g + 1) * H, :]))
        # Fold b_hh_r / b_hh_z into b_ih (they are only ever added to gi);
        # keep b_hh_n separate — PyTorch applies it inside the r*(...) term.
        bih_f = bih_f.at[0, 0 * GPAD:0 * GPAD + H].set(b_ih[0:H] + b_hh[0:H])
        bih_f = bih_f.at[0, 1 * GPAD:1 * GPAD + H].set(b_ih[H:2 * H] + b_hh[H:2 * H])
        bih_f = bih_f.at[0, 2 * GPAD:2 * GPAD + H].set(b_ih[2 * H:3 * H])
        bhn = bhn.at[0, :H].set(b_hh[2 * H:3 * H])
        flat += [wih_t, whh_t, bih_f, bhn]

    w_fc, b_fc = params["fc"]                      # (n_chars, H), (n_chars,)
    NPAD = -(-n_chars // lane) * lane
    wfc = jnp.zeros((H_pad, NPAD), jnp.float32).at[:H, :n_chars].set(
        jnp.transpose(w_fc))
    bfc = jnp.zeros((1, NPAD), jnp.float32).at[0, :n_chars].set(b_fc)
    flat += [wfc, bfc]
    return tuple(flat)


# ----------------------------------------------------------------------------
# Deterministic parameter init (mirrors nn.GRU / nn.Linear shapes).
# ----------------------------------------------------------------------------
def init_params(key, n_chars, hidden_size, num_layers):
    params = {}
    bound = 1.0 / jnp.sqrt(hidden_size)
    for l in range(num_layers):
        d_in = n_chars if l == 0 else hidden_size
        key, k1, k2, k3, k4 = jax.random.split(key, 5)
        w_ih = jax.random.uniform(k1, (3 * hidden_size, d_in), jnp.float32, -bound, bound)
        w_hh = jax.random.uniform(k2, (3 * hidden_size, hidden_size), jnp.float32, -bound, bound)
        b_ih = jax.random.uniform(k3, (3 * hidden_size,), jnp.float32, -bound, bound)
        b_hh = jax.random.uniform(k4, (3 * hidden_size,), jnp.float32, -bound, bound)
        params[f"gru_l{l}"] = (w_ih, w_hh, b_ih, b_hh)
    key, k1, k2 = jax.random.split(key, 3)
    w_fc = jax.random.uniform(k1, (n_chars, hidden_size), jnp.float32, -bound, bound)
    b_fc = jax.random.uniform(k2, (n_chars,), jnp.float32, -bound, bound)
    params["fc"] = (w_fc, b_fc)
    return params


# ----------------------------------------------------------------------------
# Pure-JAX reference (for correctness check).
# ----------------------------------------------------------------------------
def reference_forward(x_btd, params, hidden0, num_layers):
    x = jnp.transpose(x_btd, (1, 0, 2)).astype(jnp.float32)
    h_finals = []
    layer_in = x
    for l in range(num_layers):
        w_ih, w_hh, b_ih, b_hh = params[f"gru_l{l}"]
        H = w_hh.shape[1]

        def step(h, x_t):
            gi = x_t @ w_ih.T + b_ih
            gh = h @ w_hh.T + b_hh
            r = jax.nn.sigmoid(gi[:, :H] + gh[:, :H])
            z = jax.nn.sigmoid(gi[:, H:2 * H] + gh[:, H:2 * H])
            n = jnp.tanh(gi[:, 2 * H:] + r * gh[:, 2 * H:])
            h_new = (1 - z) * n + z * h
            return h_new, h_new

        h_last, outs = jax.lax.scan(step, hidden0[l], layer_in)
        h_finals.append(h_last)
        layer_in = outs
    hidden = jnp.stack(h_finals, 0)
    w_fc, b_fc = params["fc"]
    out = jnp.transpose(layer_in, (1, 0, 2)) @ w_fc.T + b_fc
    return out, hidden


if __name__ == "__main__":
    n_chars, hidden_size, num_layers = 20, 32, 2
    B, T = 2, 8

    key = jax.random.PRNGKey(0)
    kx, kp = jax.random.split(key)
    x = jax.random.normal(kx, (B, T, n_chars), jnp.float32)
    params = init_params(kp, n_chars, hidden_size, num_layers)
    kparams = prepare_kernel_params(params, num_layers, n_chars, hidden_size)
    hidden0 = jnp.zeros((num_layers, B, hidden_size), jnp.float32)  # hidden=None

    out, hidden = char_rnn_forward(x, kparams, hidden0)
    out = jax.block_until_ready(out)
    hidden = jax.block_until_ready(hidden)

    ref_out, ref_hidden = reference_forward(x, params, hidden0, num_layers)
    assert out.shape == (B, T, n_chars)
    assert hidden.shape == (num_layers, B, hidden_size)
    assert jnp.allclose(out, ref_out, atol=1e-4, rtol=1e-4)
    assert jnp.allclose(hidden, ref_hidden, atol=1e-4, rtol=1e-4)

    print("KERNEL_OK")
</pallas_src>

<mosaic_0001>
module attributes {stable_mosaic.version = 11 : i64} {
  func.func @kernel(%arg0: memref<64x128xf32, #tpu.memory_space<vmem>>, %arg1: memref<2x8x128xf32, #tpu.memory_space<vmem>>, %arg2: memref<128x384xf32, #tpu.memory_space<vmem>>, %arg3: memref<128x384xf32, #tpu.memory_space<vmem>>, %arg4: memref<1x384xf32, #tpu.memory_space<vmem>>, %arg5: memref<1x128xf32, #tpu.memory_space<vmem>>, %arg6: memref<128x384xf32, #tpu.memory_space<vmem>>, %arg7: memref<128x384xf32, #tpu.memory_space<vmem>>, %arg8: memref<1x384xf32, #tpu.memory_space<vmem>>, %arg9: memref<1x128xf32, #tpu.memory_space<vmem>>, %arg10: memref<128x128xf32, #tpu.memory_space<vmem>>, %arg11: memref<1x128xf32, #tpu.memory_space<vmem>>, %arg12: memref<64x128xf32, #tpu.memory_space<vmem>>, %arg13: memref<2x8x128xf32, #tpu.memory_space<vmem>>, %arg14: memref<8x8x384xf32, #tpu.memory_space<vmem>>, %arg15: memref<8x8x128xf32, #tpu.memory_space<vmem>>) attributes {dimension_semantics = [], scalar_prefetch = 0 : i64, scratch_operands = 2 : i64, tpu.core_type = #tpu.core_type<tc>} {
    %c0 = arith.constant 0 : index
    %c0_0 = arith.constant 0 : index
    %0 = vector.load %arg2[%c0, %c0_0] : memref<128x384xf32, #tpu.memory_space<vmem>>, vector<128x384xf32>
    %c0_1 = arith.constant 0 : index
    %c0_2 = arith.constant 0 : index
    %1 = vector.load %arg3[%c0_1, %c0_2] : memref<128x384xf32, #tpu.memory_space<vmem>>, vector<128x384xf32>
    %c0_3 = arith.constant 0 : index
    %c0_4 = arith.constant 0 : index
    %2 = vector.load %arg4[%c0_3, %c0_4] : memref<1x384xf32, #tpu.memory_space<vmem>>, vector<1x384xf32>
    %c0_5 = arith.constant 0 : index
    %c0_6 = arith.constant 0 : index
    %3 = vector.load %arg5[%c0_5, %c0_6] : memref<1x128xf32, #tpu.memory_space<vmem>>, vector<1x128xf32>
    %c0_7 = arith.constant 0 : index
    %c0_8 = arith.constant 0 : index
    %4 = vector.load %arg0[%c0_7, %c0_8] : memref<64x128xf32, #tpu.memory_space<vmem>>, vector<64x128xf32>
    %cst = arith.constant dense<0.000000e+00> : vector<64x384xf32>
    %5 = tpu.matmul %4, %0, %cst {dimension_numbers = #tpu.dot_dimension_numbers<[1], [0], [0], [1], [0, 0, 1, 1], [], []>} : vector<64x128xf32>, vector<128x384xf32>, vector<64x384xf32> -> vector<64x384xf32>
    %6 = vector.broadcast %2 : vector<1x384xf32> to vector<64x384xf32>
    %7 = arith.addf %5, %6 : vector<64x384xf32>
    %8 = vector.shape_cast %7 : vector<64x384xf32> to vector<8x8x384xf32>
    %c0_9 = arith.constant 0 : index
    %c0_10 = arith.constant 0 : index
    %c0_11 = arith.constant 0 : index
    %9 = vector.load %arg14[%c0_9, %c0_10, %c0_11] : memref<8x8x384xf32, #tpu.memory_space<vmem>>, vector<8x8x384xf32>
    tpu.vector_store %arg14[%c0_9, %c0_10, %c0_11], %8 {strides = array<i32>} : memref<8x8x384xf32, #tpu.memory_space<vmem>>, vector<8x8x384xf32>,
    %10 = vector.shape_cast %3 : vector<1x128xf32> to vector<1x128xf32>
    %11 = vector.broadcast %10 : vector<1x128xf32> to vector<8x128xf32>
    %c0_12 = arith.constant 0 : index
    %c0_13 = arith.constant 0 : index
    %c0_14 = arith.constant 0 : index
    %12 = vector.load %arg1[%c0_12, %c0_13, %c0_14] : memref<2x8x128xf32, #tpu.memory_space<vmem>>, vector<1x8x128xf32>
    %13 = vector.shape_cast %12 : vector<1x8x128xf32> to vector<8x128xf32>
    %c0_15 = arith.constant 0 : index
    %c0_16 = arith.constant 0 : index
    %c0_17 = arith.constant 0 : index
    %14 = vector.load %arg14[%c0_15, %c0_16, %c0_17] : memref<8x8x384xf32, #tpu.memory_space<vmem>>, vector<1x8x384xf32>
    %15 = vector.shape_cast %14 : vector<1x8x384xf32> to vector<8x384xf32>
    %cst_18 = arith.constant dense<0.000000e+00> : vector<8x384xf32>
    %16 = tpu.matmul %13, %1, %cst_18 {dimension_numbers = #tpu.dot_dimension_numbers<[1], [0], [0], [1], [0, 0, 1, 1], [], []>} : vector<8x128xf32>, vector<128x384xf32>, vector<8x384xf32> -> vector<8x384xf32>
    %17 = vector.extract_strided_slice %15 {offsets = [0, 0], sizes = [8, 128], strides = [1, 1]} : vector<8x384xf32> to vector<8x128xf32>
    %18 = vector.extract_strided_slice %16 {offsets = [0, 0], sizes = [8, 128], strides = [1, 1]} : vector<8x384xf32> to vector<8x128xf32>
    %19 = arith.addf %17, %18 : vector<8x128xf32>
    %20 = arith.negf %19 : vector<8x128xf32>
    %21 = math.exp %20 : vector<8x128xf32>
    %cst_19 = arith.constant 1.000000e+00 : f32
    %22 = vector.broadcast %cst_19 : f32 to vector<8x128xf32>
    %23 = arith.addf %22, %21 : vector<8x128xf32>
    %24 = arith.divf %22, %23 : vector<8x128xf32>
    %25 = vector.extract_strided_slice %15 {offsets = [0, 128], sizes = [8, 128], strides = [1, 1]} : vector<8x384xf32> to vector<8x128xf32>
    %26 = vector.extract_strided_slice %16 {offsets = [0, 128], sizes = [8, 128], strides = [1, 1]} : vector<8x384xf32> to vector<8x128xf32>
    %27 = arith.addf %25, %26 : vector<8x128xf32>
    %28 = arith.negf %27 : vector<8x128xf32>
    %29 = math.exp %28 : vector<8x128xf32>
    %cst_20 = arith.constant 1.000000e+00 : f32
    %30 = vector.broadcast %cst_20 : f32 to vector<8x128xf32>
    %31 = arith.addf %30, %29 : vector<8x128xf32>
    %32 = arith.divf %30, %31 : vector<8x128xf32>
    %33 = vector.extract_strided_slice %15 {offsets = [0, 256], sizes = [8, 128], strides = [1, 1]} : vector<8x384xf32> to vector<8x128xf32>
    %34 = vector.extract_strided_slice %16 {offsets = [0, 256], sizes = [8, 128], strides = [1, 1]} : vector<8x384xf32> to vector<8x128xf32>
    %35 = arith.addf %34, %11 : vector<8x128xf32>
    %36 = arith.mulf %24, %35 : vector<8x128xf32>
    %37 = arith.addf %33, %36 : vector<8x128xf32>
    %38 = math.tanh %37 : vector<8x128xf32>
    %39 = arith.subf %13, %38 : vector<8x128xf32>
    %40 = arith.mulf %32, %39 : vector<8x128xf32>
    %41 = arith.addf %38, %40 : vector<8x128xf32>
    %c0_21 = arith.constant 0 : index
    %c0_22 = arith.constant 0 : index
    %c0_23 = arith.constant 0 : index
    %42 = vector.load %arg15[%c0_21, %c0_22, %c0_23] : memref<8x8x128xf32, #tpu.memory_space<vmem>>, vector<1x8x128xf32>
    %43 = vector.shape_cast %42 : vector<1x8x128xf32> to vector<8x128xf32>
    %44 = vector.shape_cast %41 : vector<8x128xf32> to vector<1x8x128xf32>
    tpu.vector_store %arg15[%c0_21, %c0_22, %c0_23], %44 {strides = array<i32>} : memref<8x8x128xf32, #tpu.memory_space<vmem>>, vector<1x8x128xf32>,
    %c1 = arith.constant 1 : index
    %c0_24 = arith.constant 0 : index
    %c0_25 = arith.constant 0 : index
    %45 = vector.load %arg14[%c1, %c0_24, %c0_25] : memref<8x8x384xf32, #tpu.memory_space<vmem>>, vector<1x8x384xf32>
    %46 = vector.shape_cast %45 : vector<1x8x384xf32> to vector<8x384xf32>
    %cst_26 = arith.constant dense<0.000000e+00> : vector<8x384xf32>
    %47 = tpu.matmul %41, %1, %cst_26 {dimension_numbers = #tpu.dot_dimension_numbers<[1], [0], [0], [1], [0, 0, 1, 1], [], []>} : vector<8x128xf32>, vector<128x384xf32>, vector<8x384xf32> -> vector<8x384xf32>
    %48 = vector.extract_strided_slice %46 {offsets = [0, 0], sizes = [8, 128], strides = [1, 1]} : vector<8x384xf32> to vector<8x128xf32>
    %49 = vector.extract_strided_slice %47 {offsets = [0, 0], sizes = [8, 128], strides = [1, 1]} : vector<8x384xf32> to vector<8x128xf32>
    %50 = arith.addf %48, %49 : vector<8x128xf32>
    %51 = arith.negf %50 : vector<8x128xf32>
    %52 = math.exp %51 : vector<8x128xf32>
    %cst_27 = arith.constant 1.000000e+00 : f32
    %53 = vector.broadcast %cst_27 : f32 to vector<8x128xf32>
    %54 = arith.addf %53, %52 : vector<8x128xf32>
    %55 = arith.divf %53, %54 : vector<8x128xf32>
    %56 = vector.extract_strided_slice %46 {offsets = [0, 128], sizes = [8, 128], strides = [1, 1]} : vector<8x384xf32> to vector<8x128xf32>
    %57 = vector.extract_strided_slice %47 {offsets = [0, 128], sizes = [8, 128], strides = [1, 1]} : vector<8x384xf32> to vector<8x128xf32>
    %58 = arith.addf %56, %57 : vector<8x128xf32>
    %59 = arith.negf %58 : vector<8x128xf32>
    %60 = math.exp %59 : vector<8x128xf32>
    %cst_28 = arith.constant 1.000000e+00 : f32
    %61 = vector.broadcast %cst_28 : f32 to vector<8x128xf32>
    %62 = arith.addf %61, %60 : vector<8x128xf32>
    %63 = arith.divf %61, %62 : vector<8x128xf32>
    %64 = vector.extract_strided_slice %46 {offsets = [0, 256], sizes = [8, 128], strides = [1, 1]} : vector<8x384xf32> to vector<8x128xf32>
    %65 = vector.extract_strided_slice %47 {offsets = [0, 256], sizes = [8, 128], strides = [1, 1]} : vector<8x384xf32> to vector<8x128xf32>
    %66 = arith.addf %65, %11 : vector<8x128xf32>
    %67 = arith.mulf %55, %66 : vector<8x128xf32>
    %68 = arith.addf %64, %67 : vector<8x128xf32>
    %69 = math.tanh %68 : vector<8x128xf32>
    %70 = arith.subf %41, %69 : vector<8x128xf32>
    %71 = arith.mulf %63, %70 : vector<8x128xf32>
    %72 = arith.addf %69, %71 : vector<8x128xf32>
    %c1_29 = arith.constant 1 : index
    %c0_30 = arith.constant 0 : index
    %c0_31 = arith.constant 0 : index
    %73 = vector.load %arg15[%c1_29, %c0_30, %c0_31] : memref<8x8x128xf32, #tpu.memory_space<vmem>>, vector<1x8x128xf32>
    %74 = vector.shape_cast %73 : vector<1x8x128xf32> to vector<8x128xf32>
    %75 = vector.shape_cast %72 : vector<8x128xf32> to vector<1x8x128xf32>
    tpu.vector_store %arg15[%c1_29, %c0_30, %c0_31], %75 {strides = array<i32>} : memref<8x8x128xf32, #tpu.memory_space<vmem>>, vector<1x8x128xf32>,
    %c2 = arith.constant 2 : index
    %c0_32 = arith.constant 0 : index
    %c0_33 = arith.constant 0 : index
    %76 = vector.load %arg14[%c2, %c0_32, %c0_33] : memref<8x8x384xf32, #tpu.memory_space<vmem>>, vector<1x8x384xf32>
    %77 = vector.shape_cast %76 : vector<1x8x384xf32> to vector<8x384xf32>
    %cst_34 = arith.constant dense<0.000000e+00> : vector<8x384xf32>
    %78 = tpu.matmul %72, %1, %cst_34 {dimension_numbers = #tpu.dot_dimension_numbers<[1], [0], [0], [1], [0, 0, 1, 1], [], []>} : vector<8x128xf32>, vector<128x384xf32>, vector<8x384xf32> -> vector<8x384xf32>
    %79 = vector.extract_strided_slice %77 {offsets = [0, 0], sizes = [8, 128], strides = [1, 1]} : vector<8x384xf32> to vector<8x128xf32>
    %80 = vector.extract_strided_slice %78 {offsets = [0, 0], sizes = [8, 128], strides = [1, 1]} : vector<8x384xf32> to vector<8x128xf32>
    %81 = arith.addf %79, %80 : vector<8x128xf32>
    %82 = arith.negf %81 : vector<8x128xf32>
    %83 = math.exp %82 : vector<8x128xf32>
    %cst_35 = arith.constant 1.000000e+00 : f32
    %84 = vector.broadcast %cst_35 : f32 to vector<8x128xf32>
    %85 = arith.addf %84, %83 : vector<8x128xf32>
    %86 = arith.divf %84, %85 : vector<8x128xf32>
    %87 = vector.extract_strided_slice %77 {offsets = [0, 128], sizes = [8, 128], strides = [1, 1]} : vector<8x384xf32> to vector<8x128xf32>
    %88 = vector.extract_strided_slice %78 {offsets = [0, 128], sizes = [8, 128], strides = [1, 1]} : vector<8x384xf32> to vector<8x128xf32>
    %89 = arith.addf %87, %88 : vector<8x128xf32>
    %90 = arith.negf %89 : vector<8x128xf32>
    %91 = math.exp %90 : vector<8x128xf32>
    %cst_36 = arith.constant 1.000000e+00 : f32
    %92 = vector.broadcast %cst_36 : f32 to vector<8x128xf32>
    %93 = arith.addf %92, %91 : vector<8x128xf32>
    %94 = arith.divf %92, %93 : vector<8x128xf32>
    %95 = vector.extract_strided_slice %77 {offsets = [0, 256], sizes = [8, 128], strides = [1, 1]} : vector<8x384xf32> to vector<8x128xf32>
    %96 = vector.extract_strided_slice %78 {offsets = [0, 256], sizes = [8, 128], strides = [1, 1]} : vector<8x384xf32> to vector<8x128xf32>
    %97 = arith.addf %96, %11 : vector<8x128xf32>
    %98 = arith.mulf %86, %97 : vector<8x128xf32>
    %99 = arith.addf %95, %98 : vector<8x128xf32>
    %100 = math.tanh %99 : vector<8x128xf32>
    %101 = arith.subf %72, %100 : vector<8x128xf32>
    %102 = arith.mulf %94, %101 : vector<8x128xf32>
    %103 = arith.addf %100, %102 : vector<8x128xf32>
    %c2_37 = arith.constant 2 : index
    %c0_38 = arith.constant 0 : index
    %c0_39 = arith.constant 0 : index
    %104 = vector.load %arg15[%c2_37, %c0_38, %c0_39] : memref<8x8x128xf32, #tpu.memory_space<vmem>>, vector<1x8x128xf32>
    %105 = vector.shape_cast %104 : vector<1x8x128xf32> to vector<8x128xf32>
    %106 = vector.shape_cast %103 : vector<8x128xf32> to vector<1x8x128xf32>
    tpu.vector_store %arg15[%c2_37, %c0_38, %c0_39], %106 {strides = array<i32>} : memref<8x8x128xf32, #tpu.memory_space<vmem>>, vector<1x8x128xf32>,
    %c3 = arith.constant 3 : index
    %c0_40 = arith.constant 0 : index
    %c0_41 = arith.constant 0 : index
    %107 = vector.load %arg14[%c3, %c0_40, %c0_41] : memref<8x8x384xf32, #tpu.memory_space<vmem>>, vector<1x8x384xf32>
    %108 = vector.shape_cast %107 : vector<1x8x384xf32> to vector<8x384xf32>
    %cst_42 = arith.constant dense<0.000000e+00> : vector<8x384xf32>
    %109 = tpu.matmul %103, %1, %cst_42 {dimension_numbers = #tpu.dot_dimension_numbers<[1], [0], [0], [1], [0, 0, 1, 1], [], []>} : vector<8x128xf32>, vector<128x384xf32>, vector<8x384xf32> -> vector<8x384xf32>
    %110 = vector.extract_strided_slice %108 {offsets = [0, 0], sizes = [8, 128], strides = [1, 1]} : vector<8x384xf32> to vector<8x128xf32>
    %111 = vector.extract_strided_slice %109 {offsets = [0, 0], sizes = [8, 128], strides = [1, 1]} : vector<8x384xf32> to vector<8x128xf32>
    %112 = arith.addf %110, %111 : vector<8x128xf32>
    %113 = arith.negf %112 : vector<8x128xf32>
    %114 = math.exp %113 : vector<8x128xf32>
    %cst_43 = arith.constant 1.000000e+00 : f32
    %115 = vector.broadcast %cst_43 : f32 to vector<8x128xf32>
    %116 = arith.addf %115, %114 : vector<8x128xf32>
    %117 = arith.divf %115, %116 : vector<8x128xf32>
    %118 = vector.extract_strided_slice %108 {offsets = [0, 128], sizes = [8, 128], strides = [1, 1]} : vector<8x384xf32> to vector<8x128xf32>
    %119 = vector.extract_strided_slice %109 {offsets = [0, 128], sizes = [8, 128], strides = [1, 1]} : vector<8x384xf32> to vector<8x128xf32>
    %120 = arith.addf %118, %119 : vector<8x128xf32>
    %121 = arith.negf %120 : vector<8x128xf32>
    %122 = math.exp %121 : vector<8x128xf32>
    %cst_44 = arith.constant 1.000000e+00 : f32
    %123 = vector.broadcast %cst_44 : f32 to vector<8x128xf32>
    %124 = arith.addf %123, %122 : vector<8x128xf32>
    %125 = arith.divf %123, %124 : vector<8x128xf32>
    %126 = vector.extract_strided_slice %108 {offsets = [0, 256], sizes = [8, 128], strides = [1, 1]} : vector<8x384xf32> to vector<8x128xf32>
    %127 = vector.extract_strided_slice %109 {offsets = [0, 256], sizes = [8, 128], strides = [1, 1]} : vector<8x384xf32> to vector<8x128xf32>
    %128 = arith.addf %127, %11 : vector<8x128xf32>
    %129 = arith.mulf %117, %128 : vector<8x128xf32>
    %130 = arith.addf %126, %129 : vector<8x128xf32>
    %131 = math.tanh %130 : vector<8x128xf32>
    %132 = arith.subf %103, %131 : vector<8x128xf32>
    %133 = arith.mulf %125, %132 : vector<8x128xf32>
    %134 = arith.addf %131, %133 : vector<8x128xf32>
    %c3_45 = arith.constant 3 : index
    %c0_46 = arith.constant 0 : index
    %c0_47 = arith.constant 0 : index
    %135 = vector.load %arg15[%c3_45, %c0_46, %c0_47] : memref<8x8x128xf32, #tpu.memory_space<vmem>>, vector<1x8x128xf32>
    %136 = vector.shape_cast %135 : vector<1x8x128xf32> to vector<8x128xf32>
    %137 = vector.shape_cast %134 : vector<8x128xf32> to vector<1x8x128xf32>
    tpu.vector_store %arg15[%c3_45, %c0_46, %c0_47], %137 {strides = array<i32>} : memref<8x8x128xf32, #tpu.memory_space<vmem>>, vector<1x8x128xf32>,
    %c4 = arith.constant 4 : index
    %c0_48 = arith.constant 0 : index
    %c0_49 = arith.constant 0 : index
    %138 = vector.load %arg14[%c4, %c0_48, %c0_49] : memref<8x8x384xf32, #tpu.memory_space<vmem>>, vector<1x8x384xf32>
    %139 = vector.shape_cast %138 : vector<1x8x384xf32> to vector<8x384xf32>
    %cst_50 = arith.constant dense<0.000000e+00> : vector<8x384xf32>
    %140 = tpu.matmul %134, %1, %cst_50 {dimension_numbers = #tpu.dot_dimension_numbers<[1], [0], [0], [1], [0, 0, 1, 1], [], []>} : vector<8x128xf32>, vector<128x384xf32>, vector<8x384xf32> -> vector<8x384xf32>
    %141 = vector.extract_strided_slice %139 {offsets = [0, 0], sizes = [8, 128], strides = [1, 1]} : vector<8x384xf32> to vector<8x128xf32>
    %142 = vector.extract_strided_slice %140 {offsets = [0, 0], sizes = [8, 128], strides = [1, 1]} : vector<8x384xf32> to vector<8x128xf32>
    %143 = arith.addf %141, %142 : vector<8x128xf32>
    %144 = arith.negf %143 : vector<8x128xf32>
    %145 = math.exp %144 : vector<8x128xf32>
    %cst_51 = arith.constant 1.000000e+00 : f32
    %146 = vector.broadcast %cst_51 : f32 to vector<8x128xf32>
    %147 = arith.addf %146, %145 : vector<8x128xf32>
    %148 = arith.divf %146, %147 : vector<8x128xf32>
    %149 = vector.extract_strided_slice %139 {offsets = [0, 128], sizes = [8, 128], strides = [1, 1]} : vector<8x384xf32> to vector<8x128xf32>
    %150 = vector.extract_strided_slice %140 {offsets = [0, 128], sizes = [8, 128], strides = [1, 1]} : vector<8x384xf32> to vector<8x128xf32>
    %151 = arith.addf %149, %150 : vector<8x128xf32>
    %152 = arith.negf %151 : vector<8x128xf32>
    %153 = math.exp %152 : vector<8x128xf32>
    %cst_52 = arith.constant 1.000000e+00 : f32
    %154 = vector.broadcast %cst_52 : f32 to vector<8x128xf32>
    %155 = arith.addf %154, %153 : vector<8x128xf32>
    %156 = arith.divf %154, %155 : vector<8x128xf32>
    %157 = vector.extract_strided_slice %139 {offsets = [0, 256], sizes = [8, 128], strides = [1, 1]} : vector<8x384xf32> to vector<8x128xf32>
    %158 = vector.extract_strided_slice %140 {offsets = [0, 256], sizes = [8, 128], strides = [1, 1]} : vector<8x384xf32> to vector<8x128xf32>
    %159 = arith.addf %158, %11 : vector<8x128xf32>
    %160 = arith.mulf %148, %159 : vector<8x128xf32>
    %161 = arith.addf %157, %160 : vector<8x128xf32>
    %162 = math.tanh %161 : vector<8x128xf32>
    %163 = arith.subf %134, %162 : vector<8x128xf32>
    %164 = arith.mulf %156, %163 : vector<8x128xf32>
    %165 = arith.addf %162, %164 : vector<8x128xf32>
    %c4_53 = arith.constant 4 : index
    %c0_54 = arith.constant 0 : index
    %c0_55 = arith.constant 0 : index
    %166 = vector.load %arg15[%c4_53, %c0_54, %c0_55] : memref<8x8x128xf32, #tpu.memory_space<vmem>>, vector<1x8x128xf32>
    %167 = vector.shape_cast %166 : vector<1x8x128xf32> to vector<8x128xf32>
    %168 = vector.shape_cast %165 : vector<8x128xf32> to vector<1x8x128xf32>
    tpu.vector_store %arg15[%c4_53, %c0_54, %c0_55], %168 {strides = array<i32>} : memref<8x8x128xf32, #tpu.memory_space<vmem>>, vector<1x8x128xf32>,
    %c5 = arith.constant 5 : index
    %c0_56 = arith.constant 0 : index
    %c0_57 = arith.constant 0 : index
    %169 = vector.load %arg14[%c5, %c0_56, %c0_57] : memref<8x8x384xf32, #tpu.memory_space<vmem>>, vector<1x8x384xf32>
    %170 = vector.shape_cast %169 : vector<1x8x384xf32> to vector<8x384xf32>
    %cst_58 = arith.constant dense<0.000000e+00> : vector<8x384xf32>
    %171 = tpu.matmul %165, %1, %cst_58 {dimension_numbers = #tpu.dot_dimension_numbers<[1], [0], [0], [1], [0, 0, 1, 1], [], []>} : vector<8x128xf32>, vector<128x384xf32>, vector<8x384xf32> -> vector<8x384xf32>
    %172 = vector.extract_strided_slice %170 {offsets = [0, 0], sizes = [8, 128], strides = [1, 1]} : vector<8x384xf32> to vector<8x128xf32>
    %173 = vector.extract_strided_slice %171 {offsets = [0, 0], sizes = [8, 128], strides = [1, 1]} : vector<8x384xf32> to vector<8x128xf32>
    %174 = arith.addf %172, %173 : vector<8x128xf32>
    %175 = arith.negf %174 : vector<8x128xf32>
    %176 = math.exp %175 : vector<8x128xf32>
    %cst_59 = arith.constant 1.000000e+00 : f32
    %177 = vector.broadcast %cst_59 : f32 to vector<8x128xf32>
    %178 = arith.addf %177, %176 : vector<8x128xf32>
    %179 = arith.divf %177, %178 : vector<8x128xf32>
    %180 = vector.extract_strided_slice %170 {offsets = [0, 128], sizes = [8, 128], strides = [1, 1]} : vector<8x384xf32> to vector<8x128xf32>
    %181 = vector.extract_strided_slice %171 {offsets = [0, 128], sizes = [8, 128], strides = [1, 1]} : vector<8x384xf32> to vector<8x128xf32>
    %182 = arith.addf %180, %181 : vector<8x128xf32>
    %183 = arith.negf %182 : vector<8x128xf32>
    %184 = math.exp %183 : vector<8x128xf32>
    %cst_60 = arith.constant 1.000000e+00 : f32
    %185 = vector.broadcast %cst_60 : f32 to vector<8x128xf32>
    %186 = arith.addf %185, %184 : vector<8x128xf32>
    %187 = arith.divf %185, %186 : vector<8x128xf32>
    %188 = vector.extract_strided_slice %170 {offsets = [0, 256], sizes = [8, 128], strides = [1, 1]} : vector<8x384xf32> to vector<8x128xf32>
    %189 = vector.extract_strided_slice %171 {offsets = [0, 256], sizes = [8, 128], strides = [1, 1]} : vector<8x384xf32> to vector<8x128xf32>
    %190 = arith.addf %189, %11 : vector<8x128xf32>
    %191 = arith.mulf %179, %190 : vector<8x128xf32>
    %192 = arith.addf %188, %191 : vector<8x128xf32>
    %193 = math.tanh %192 : vector<8x128xf32>
    %194 = arith.subf %165, %193 : vector<8x128xf32>
    %195 = arith.mulf %187, %194 : vector<8x128xf32>
    %196 = arith.addf %193, %195 : vector<8x128xf32>
    %c5_61 = arith.constant 5 : index
    %c0_62 = arith.constant 0 : index
    %c0_63 = arith.constant 0 : index
    %197 = vector.load %arg15[%c5_61, %c0_62, %c0_63] : memref<8x8x128xf32, #tpu.memory_space<vmem>>, vector<1x8x128xf32>
    %198 = vector.shape_cast %197 : vector<1x8x128xf32> to vector<8x128xf32>
    %199 = vector.shape_cast %196 : vector<8x128xf32> to vector<1x8x128xf32>
    tpu.vector_store %arg15[%c5_61, %c0_62, %c0_63], %199 {strides = array<i32>} : memref<8x8x128xf32, #tpu.memory_space<vmem>>, vector<1x8x128xf32>,
    %c6 = arith.constant 6 : index
    %c0_64 = arith.constant 0 : index
    %c0_65 = arith.constant 0 : index
    %200 = vector.load %arg14[%c6, %c0_64, %c0_65] : memref<8x8x384xf32, #tpu.memory_space<vmem>>, vector<1x8x384xf32>
    %201 = vector.shape_cast %200 : vector<1x8x384xf32> to vector<8x384xf32>
    %cst_66 = arith.constant dense<0.000000e+00> : vector<8x384xf32>
    %202 = tpu.matmul %196, %1, %cst_66 {dimension_numbers = #tpu.dot_dimension_numbers<[1], [0], [0], [1], [0, 0, 1, 1], [], []>} : vector<8x128xf32>, vector<128x384xf32>, vector<8x384xf32> -> vector<8x384xf32>
    %203 = vector.extract_strided_slice %201 {offsets = [0, 0], sizes = [8, 128], strides = [1, 1]} : vector<8x384xf32> to vector<8x128xf32>
    %204 = vector.extract_strided_slice %202 {offsets = [0, 0], sizes = [8, 128], strides = [1, 1]} : vector<8x384xf32> to vector<8x128xf32>
    %205 = arith.addf %203, %204 : vector<8x128xf32>
    %206 = arith.negf %205 : vector<8x128xf32>
    %207 = math.exp %206 : vector<8x128xf32>
    %cst_67 = arith.constant 1.000000e+00 : f32
    %208 = vector.broadcast %cst_67 : f32 to vector<8x128xf32>
    %209 = arith.addf %208, %207 : vector<8x128xf32>
    %210 = arith.divf %208, %209 : vector<8x128xf32>
    %211 = vector.extract_strided_slice %201 {offsets = [0, 128], sizes = [8, 128], strides = [1, 1]} : vector<8x384xf32> to vector<8x128xf32>
    %212 = vector.extract_strided_slice %202 {offsets = [0, 128], sizes = [8, 128], strides = [1, 1]} : vector<8x384xf32> to vector<8x128xf32>
    %213 = arith.addf %211, %212 : vector<8x128xf32>
    %214 = arith.negf %213 : vector<8x128xf32>
    %215 = math.exp %214 : vector<8x128xf32>
    %cst_68 = arith.constant 1.000000e+00 : f32
    %216 = vector.broadcast %cst_68 : f32 to vector<8x128xf32>
    %217 = arith.addf %216, %215 : vector<8x128xf32>
    %218 = arith.divf %216, %217 : vector<8x128xf32>
    %219 = vector.extract_strided_slice %201 {offsets = [0, 256], sizes = [8, 128], strides = [1, 1]} : vector<8x384xf32> to vector<8x128xf32>
    %220 = vector.extract_strided_slice %202 {offsets = [0, 256], sizes = [8, 128], strides = [1, 1]} : vector<8x384xf32> to vector<8x128xf32>
    %221 = arith.addf %220, %11 : vector<8x128xf32>
    %222 = arith.mulf %210, %221 : vector<8x128xf32>
    %223 = arith.addf %219, %222 : vector<8x128xf32>
    %224 = math.tanh %223 : vector<8x128xf32>
    %225 = arith.subf %196, %224 : vector<8x128xf32>
    %226 = arith.mulf %218, %225 : vector<8x128xf32>
    %227 = arith.addf %224, %226 : vector<8x128xf32>
    %c6_69 = arith.constant 6 : index
    %c0_70 = arith.constant 0 : index
    %c0_71 = arith.constant 0 : index
    %228 = vector.load %arg15[%c6_69, %c0_70, %c0_71] : memref<8x8x128xf32, #tpu.memory_space<vmem>>, vector<1x8x128xf32>
    %229 = vector.shape_cast %228 : vector<1x8x128xf32> to vector<8x128xf32>
    %230 = vector.shape_cast %227 : vector<8x128xf32> to vector<1x8x128xf32>
    tpu.vector_store %arg15[%c6_69, %c0_70, %c0_71], %230 {strides = array<i32>} : memref<8x8x128xf32, #tpu.memory_space<vmem>>, vector<1x8x128xf32>,
    %c7 = arith.constant 7 : index
    %c0_72 = arith.constant 0 : index
    %c0_73 = arith.constant 0 : index
    %231 = vector.load %arg14[%c7, %c0_72, %c0_73] : memref<8x8x384xf32, #tpu.memory_space<vmem>>, vector<1x8x384xf32>
    %232 = vector.shape_cast %231 : vector<1x8x384xf32> to vector<8x384xf32>
    %cst_74 = arith.constant dense<0.000000e+00> : vector<8x384xf32>
    %233 = tpu.matmul %227, %1, %cst_74 {dimension_numbers = #tpu.dot_dimension_numbers<[1], [0], [0], [1], [0, 0, 1, 1], [], []>} : vector<8x128xf32>, vector<128x384xf32>, vector<8x384xf32> -> vector<8x384xf32>
    %234 = vector.extract_strided_slice %232 {offsets = [0, 0], sizes = [8, 128], strides = [1, 1]} : vector<8x384xf32> to vector<8x128xf32>
    %235 = vector.extract_strided_slice %233 {offsets = [0, 0], sizes = [8, 128], strides = [1, 1]} : vector<8x384xf32> to vector<8x128xf32>
    %236 = arith.addf %234, %235 : vector<8x128xf32>
    %237 = arith.negf %236 : vector<8x128xf32>
    %238 = math.exp %237 : vector<8x128xf32>
    %cst_75 = arith.constant 1.000000e+00 : f32
    %239 = vector.broadcast %cst_75 : f32 to vector<8x128xf32>
    %240 = arith.addf %239, %238 : vector<8x128xf32>
    %241 = arith.divf %239, %240 : vector<8x128xf32>
    %242 = vector.extract_strided_slice %232 {offsets = [0, 128], sizes = [8, 128], strides = [1, 1]} : vector<8x384xf32> to vector<8x128xf32>
    %243 = vector.extract_strided_slice %233 {offsets = [0, 128], sizes = [8, 128], strides = [1, 1]} : vector<8x384xf32> to vector<8x128xf32>
    %244 = arith.addf %242, %243 : vector<8x128xf32>
    %245 = arith.negf %244 : vector<8x128xf32>
    %246 = math.exp %245 : vector<8x128xf32>
    %cst_76 = arith.constant 1.000000e+00 : f32
    %247 = vector.broadcast %cst_76 : f32 to vector<8x128xf32>
    %248 = arith.addf %247, %246 : vector<8x128xf32>
    %249 = arith.divf %247, %248 : vector<8x128xf32>
    %250 = vector.extract_strided_slice %232 {offsets = [0, 256], sizes = [8, 128], strides = [1, 1]} : vector<8x384xf32> to vector<8x128xf32>
    %251 = vector.extract_strided_slice %233 {offsets = [0, 256], sizes = [8, 128], strides = [1, 1]} : vector<8x384xf32> to vector<8x128xf32>
    %252 = arith.addf %251, %11 : vector<8x128xf32>
    %253 = arith.mulf %241, %252 : vector<8x128xf32>
    %254 = arith.addf %250, %253 : vector<8x128xf32>
    %255 = math.tanh %254 : vector<8x128xf32>
    %256 = arith.subf %227, %255 : vector<8x128xf32>
    %257 = arith.mulf %249, %256 : vector<8x128xf32>
    %258 = arith.addf %255, %257 : vector<8x128xf32>
    %c7_77 = arith.constant 7 : index
    %c0_78 = arith.constant 0 : index
    %c0_79 = arith.constant 0 : index
    %259 = vector.load %arg15[%c7_77, %c0_78, %c0_79] : memref<8x8x128xf32, #tpu.memory_space<vmem>>, vector<1x8x128xf32>
    %260 = vector.shape_cast %259 : vector<1x8x128xf32> to vector<8x128xf32>
    %261 = vector.shape_cast %258 : vector<8x128xf32> to vector<1x8x128xf32>
    tpu.vector_store %arg15[%c7_77, %c0_78, %c0_79], %261 {strides = array<i32>} : memref<8x8x128xf32, #tpu.memory_space<vmem>>, vector<1x8x128xf32>,
    %c0_80 = arith.constant 0 : index
    %c0_81 = arith.constant 0 : index
    %c0_82 = arith.constant 0 : index
    %262 = vector.load %arg13[%c0_80, %c0_81, %c0_82] : memref<2x8x128xf32, #tpu.memory_space<vmem>>, vector<1x8x128xf32>
    %263 = vector.shape_cast %262 : vector<1x8x128xf32> to vector<8x128xf32>
    %264 = vector.shape_cast %258 : vector<8x128xf32> to vector<1x8x128xf32>
    tpu.vector_store %arg13[%c0_80, %c0_81, %c0_82], %264 {strides = array<i32>} : memref<2x8x128xf32, #tpu.memory_space<vmem>>, vector<1x8x128xf32>,
    %c0_83 = arith.constant 0 : index
    %c0_84 = arith.constant 0 : index
    %265 = vector.load %arg6[%c0_83, %c0_84] : memref<128x384xf32, #tpu.memory_space<vmem>>, vector<128x384xf32>
    %c0_85 = arith.constant 0 : index
    %c0_86 = arith.constant 0 : index
    %266 = vector.load %arg7[%c0_85, %c0_86] : memref<128x384xf32, #tpu.memory_space<vmem>>, vector<128x384xf32>
    %c0_87 = arith.constant 0 : index
    %c0_88 = arith.constant 0 : index
    %267 = vector.load %arg8[%c0_87, %c0_88] : memref<1x384xf32, #tpu.memory_space<vmem>>, vector<1x384xf32>
    %c0_89 = arith.constant 0 : index
    %c0_90 = arith.constant 0 : index
    %268 = vector.load %arg9[%c0_89, %c0_90] : memref<1x128xf32, #tpu.memory_space<vmem>>, vector<1x128xf32>
    %c0_91 = arith.constant 0 : index
    %c0_92 = arith.constant 0 : index
    %c0_93 = arith.constant 0 : index
    %269 = vector.load %arg15[%c0_91, %c0_92, %c0_93] : memref<8x8x128xf32, #tpu.memory_space<vmem>>, vector<8x8x128xf32>
    %270 = vector.shape_cast %269 : vector<8x8x128xf32> to vector<64x128xf32>
    %cst_94 = arith.constant dense<0.000000e+00> : vector<64x384xf32>
    %271 = tpu.matmul %270, %265, %cst_94 {dimension_numbers = #tpu.dot_dimension_numbers<[1], [0], [0], [1], [0, 0, 1, 1], [], []>} : vector<64x128xf32>, vector<128x384xf32>, vector<64x384xf32> -> vector<64x384xf32>
    %272 = vector.broadcast %267 : vector<1x384xf32> to vector<64x384xf32>
    %273 = arith.addf %271, %272 : vector<64x384xf32>
    %274 = vector.shape_cast %273 : vector<64x384xf32> to vector<8x8x384xf32>
    %c0_95 = arith.constant 0 : index
    %c0_96 = arith.constant 0 : index
    %c0_97 = arith.constant 0 : index
    %275 = vector.load %arg14[%c0_95, %c0_96, %c0_97] : memref<8x8x384xf32, #tpu.memory_space<vmem>>, vector<8x8x384xf32>
    tpu.vector_store %arg14[%c0_95, %c0_96, %c0_97], %274 {strides = array<i32>} : memref<8x8x384xf32, #tpu.memory_space<vmem>>, vector<8x8x384xf32>,
    %276 = vector.shape_cast %268 : vector<1x128xf32> to vector<1x128xf32>
    %277 = vector.broadcast %276 : vector<1x128xf32> to vector<8x128xf32>
    %c1_98 = arith.constant 1 : index
    %c0_99 = arith.constant 0 : index
    %c0_100 = arith.constant 0 : index
    %278 = vector.load %arg1[%c1_98, %c0_99, %c0_100] : memref<2x8x128xf32, #tpu.memory_space<vmem>>, vector<1x8x128xf32>
    %279 = vector.shape_cast %278 : vector<1x8x128xf32> to vector<8x128xf32>
    %c0_101 = arith.constant 0 : index
    %c0_102 = arith.constant 0 : index
    %c0_103 = arith.constant 0 : index
    %280 = vector.load %arg14[%c0_101, %c0_102, %c0_103] : memref<8x8x384xf32, #tpu.memory_space<vmem>>, vector<1x8x384xf32>
    %281 = vector.shape_cast %280 : vector<1x8x384xf32> to vector<8x384xf32>
    %cst_104 = arith.constant dense<0.000000e+00> : vector<8x384xf32>
    %282 = tpu.matmul %279, %266, %cst_104 {dimension_numbers = #tpu.dot_dimension_numbers<[1], [0], [0], [1], [0, 0, 1, 1], [], []>} : vector<8x128xf32>, vector<128x384xf32>, vector<8x384xf32> -> vector<8x384xf32>
    %283 = vector.extract_strided_slice %281 {offsets = [0, 0], sizes = [8, 128], strides = [1, 1]} : vector<8x384xf32> to vector<8x128xf32>
    %284 = vector.extract_strided_slice %282 {offsets = [0, 0], sizes = [8, 128], strides = [1, 1]} : vector<8x384xf32> to vector<8x128xf32>
    %285 = arith.addf %283, %284 : vector<8x128xf32>
    %286 = arith.negf %285 : vector<8x128xf32>
    %287 = math.exp %286 : vector<8x128xf32>
    %cst_105 = arith.constant 1.000000e+00 : f32
    %288 = vector.broadcast %cst_105 : f32 to vector<8x128xf32>
    %289 = arith.addf %288, %287 : vector<8x128xf32>
    %290 = arith.divf %288, %289 : vector<8x128xf32>
    %291 = vector.extract_strided_slice %281 {offsets = [0, 128], sizes = [8, 128], strides = [1, 1]} : vector<8x384xf32> to vector<8x128xf32>
    %292 = vector.extract_strided_slice %282 {offsets = [0, 128], sizes = [8, 128], strides = [1, 1]} : vector<8x384xf32> to vector<8x128xf32>
    %293 = arith.addf %291, %292 : vector<8x128xf32>
    %294 = arith.negf %293 : vector<8x128xf32>
    %295 = math.exp %294 : vector<8x128xf32>
    %cst_106 = arith.constant 1.000000e+00 : f32
    %296 = vector.broadcast %cst_106 : f32 to vector<8x128xf32>
    %297 = arith.addf %296, %295 : vector<8x128xf32>
    %298 = arith.divf %296, %297 : vector<8x128xf32>
    %299 = vector.extract_strided_slice %281 {offsets = [0, 256], sizes = [8, 128], strides = [1, 1]} : vector<8x384xf32> to vector<8x128xf32>
    %300 = vector.extract_strided_slice %282 {offsets = [0, 256], sizes = [8, 128], strides = [1, 1]} : vector<8x384xf32> to vector<8x128xf32>
    %301 = arith.addf %300, %277 : vector<8x128xf32>
    %302 = arith.mulf %290, %301 : vector<8x128xf32>
    %303 = arith.addf %299, %302 : vector<8x128xf32>
    %304 = math.tanh %303 : vector<8x128xf32>
    %305 = arith.subf %279, %304 : vector<8x128xf32>
    %306 = arith.mulf %298, %305 : vector<8x128xf32>
    %307 = arith.addf %304, %306 : vector<8x128xf32>
    %c0_107 = arith.constant 0 : index
    %c0_108 = arith.constant 0 : index
    %c0_109 = arith.constant 0 : index
    %308 = vector.load %arg15[%c0_107, %c0_108, %c0_109] : memref<8x8x128xf32, #tpu.memory_space<vmem>>, vector<1x8x128xf32>
    %309 = vector.shape_cast %308 : vector<1x8x128xf32> to vector<8x128xf32>
    %310 = vector.shape_cast %307 : vector<8x128xf32> to vector<1x8x128xf32>
    tpu.vector_store %arg15[%c0_107, %c0_108, %c0_109], %310 {strides = array<i32>} : memref<8x8x128xf32, #tpu.memory_space<vmem>>, vector<1x8x128xf32>,
    %c1_110 = arith.constant 1 : index
    %c0_111 = arith.constant 0 : index
    %c0_112 = arith.constant 0 : index
    %311 = vector.load %arg14[%c1_110, %c0_111, %c0_112] : memref<8x8x384xf32, #tpu.memory_space<vmem>>, vector<1x8x384xf32>
    %312 = vector.shape_cast %311 : vector<1x8x384xf32> to vector<8x384xf32>
    %cst_113 = arith.constant dense<0.000000e+00> : vector<8x384xf32>
    %313 = tpu.matmul %307, %266, %cst_113 {dimension_numbers = #tpu.dot_dimension_numbers<[1], [0], [0], [1], [0, 0, 1, 1], [], []>} : vector<8x128xf32>, vector<128x384xf32>, vector<8x384xf32> -> vector<8x384xf32>
    %314 = vector.extract_strided_slice %312 {offsets = [0, 0], sizes = [8, 128], strides = [1, 1]} : vector<8x384xf32> to vector<8x128xf32>
    %315 = vector.extract_strided_slice %313 {offsets = [0, 0], sizes = [8, 128], strides = [1, 1]} : vector<8x384xf32> to vector<8x128xf32>
    %316 = arith.addf %314, %315 : vector<8x128xf32>
    %317 = arith.negf %316 : vector<8x128xf32>
    %318 = math.exp %317 : vector<8x128xf32>
    %cst_114 = arith.constant 1.000000e+00 : f32
    %319 = vector.broadcast %cst_114 : f32 to vector<8x128xf32>
    %320 = arith.addf %319, %318 : vector<8x128xf32>
    %321 = arith.divf %319, %320 : vector<8x128xf32>
    %322 = vector.extract_strided_slice %312 {offsets = [0, 128], sizes = [8, 128], strides = [1, 1]} : vector<8x384xf32> to vector<8x128xf32>
    %323 = vector.extract_strided_slice %313 {offsets = [0, 128], sizes = [8, 128], strides = [1, 1]} : vector<8x384xf32> to vector<8x128xf32>
    %324 = arith.addf %322, %323 : vector<8x128xf32>
    %325 = arith.negf %324 : vector<8x128xf32>
    %326 = math.exp %325 : vector<8x128xf32>
    %cst_115 = arith.constant 1.000000e+00 : f32
    %327 = vector.broadcast %cst_115 : f32 to vector<8x128xf32>
    %328 = arith.addf %327, %326 : vector<8x128xf32>
    %329 = arith.divf %327, %328 : vector<8x128xf32>
    %330 = vector.extract_strided_slice %312 {offsets = [0, 256], sizes = [8, 128], strides = [1, 1]} : vector<8x384xf32> to vector<8x128xf32>
    %331 = vector.extract_strided_slice %313 {offsets = [0, 256], sizes = [8, 128], strides = [1, 1]} : vector<8x384xf32> to vector<8x128xf32>
    %332 = arith.addf %331, %277 : vector<8x128xf32>
    %333 = arith.mulf %321, %332 : vector<8x128xf32>
    %334 = arith.addf %330, %333 : vector<8x128xf32>
    %335 = math.tanh %334 : vector<8x128xf32>
    %336 = arith.subf %307, %335 : vector<8x128xf32>
    %337 = arith.mulf %329, %336 : vector<8x128xf32>
    %338 = arith.addf %335, %337 : vector<8x128xf32>
    %c1_116 = arith.constant 1 : index
    %c0_117 = arith.constant 0 : index
    %c0_118 = arith.constant 0 : index
    %339 = vector.load %arg15[%c1_116, %c0_117, %c0_118] : memref<8x8x128xf32, #tpu.memory_space<vmem>>, vector<1x8x128xf32>
    %340 = vector.shape_cast %339 : vector<1x8x128xf32> to vector<8x128xf32>
    %341 = vector.shape_cast %338 : vector<8x128xf32> to vector<1x8x128xf32>
    tpu.vector_store %arg15[%c1_116, %c0_117, %c0_118], %341 {strides = array<i32>} : memref<8x8x128xf32, #tpu.memory_space<vmem>>, vector<1x8x128xf32>,
    %c2_119 = arith.constant 2 : index
    %c0_120 = arith.constant 0 : index
    %c0_121 = arith.constant 0 : index
    %342 = vector.load %arg14[%c2_119, %c0_120, %c0_121] : memref<8x8x384xf32, #tpu.memory_space<vmem>>, vector<1x8x384xf32>
    %343 = vector.shape_cast %342 : vector<1x8x384xf32> to vector<8x384xf32>
    %cst_122 = arith.constant dense<0.000000e+00> : vector<8x384xf32>
    %344 = tpu.matmul %338, %266, %cst_122 {dimension_numbers = #tpu.dot_dimension_numbers<[1], [0], [0], [1], [0, 0, 1, 1], [], []>} : vector<8x128xf32>, vector<128x384xf32>, vector<8x384xf32> -> vector<8x384xf32>
    %345 = vector.extract_strided_slice %343 {offsets = [0, 0], sizes = [8, 128], strides = [1, 1]} : vector<8x384xf32> to vector<8x128xf32>
    %346 = vector.extract_strided_slice %344 {offsets = [0, 0], sizes = [8, 128], strides = [1, 1]} : vector<8x384xf32> to vector<8x128xf32>
    %347 = arith.addf %345, %346 : vector<8x128xf32>
    %348 = arith.negf %347 : vector<8x128xf32>
    %349 = math.exp %348 : vector<8x128xf32>
    %cst_123 = arith.constant 1.000000e+00 : f32
    %350 = vector.broadcast %cst_123 : f32 to vector<8x128xf32>
    %351 = arith.addf %350, %349 : vector<8x128xf32>
    %352 = arith.divf %350, %351 : vector<8x128xf32>
    %353 = vector.extract_strided_slice %343 {offsets = [0, 128], sizes = [8, 128], strides = [1, 1]} : vector<8x384xf32> to vector<8x128xf32>
    %354 = vector.extract_strided_slice %344 {offsets = [0, 128], sizes = [8, 128], strides = [1, 1]} : vector<8x384xf32> to vector<8x128xf32>
    %355 = arith.addf %353, %354 : vector<8x128xf32>
    %356 = arith.negf %355 : vector<8x128xf32>
    %357 = math.exp %356 : vector<8x128xf32>
    %cst_124 = arith.constant 1.000000e+00 : f32
    %358 = vector.broadcast %cst_124 : f32 to vector<8x128xf32>
    %359 = arith.addf %358, %357 : vector<8x128xf32>
    %360 = arith.divf %358, %359 : vector<8x128xf32>
    %361 = vector.extract_strided_slice %343 {offsets = [0, 256], sizes = [8, 128], strides = [1, 1]} : vector<8x384xf32> to vector<8x128xf32>
    %362 = vector.extract_strided_slice %344 {offsets = [0, 256], sizes = [8, 128], strides = [1, 1]} : vector<8x384xf32> to vector<8x128xf32>
    %363 = arith.addf %362, %277 : vector<8x128xf32>
    %364 = arith.mulf %352, %363 : vector<8x128xf32>
    %365 = arith.addf %361, %364 : vector<8x128xf32>
    %366 = math.tanh %365 : vector<8x128xf32>
    %367 = arith.subf %338, %366 : vector<8x128xf32>
    %368 = arith.mulf %360, %367 : vector<8x128xf32>
    %369 = arith.addf %366, %368 : vector<8x128xf32>
    %c2_125 = arith.constant 2 : index
    %c0_126 = arith.constant 0 : index
    %c0_127 = arith.constant 0 : index
    %370 = vector.load %arg15[%c2_125, %c0_126, %c0_127] : memref<8x8x128xf32, #tpu.memory_space<vmem>>, vector<1x8x128xf32>
    %371 = vector.shape_cast %370 : vector<1x8x128xf32> to vector<8x128xf32>
    %372 = vector.shape_cast %369 : vector<8x128xf32> to vector<1x8x128xf32>
    tpu.vector_store %arg15[%c2_125, %c0_126, %c0_127], %372 {strides = array<i32>} : memref<8x8x128xf32, #tpu.memory_space<vmem>>, vector<1x8x128xf32>,
    %c3_128 = arith.constant 3 : index
    %c0_129 = arith.constant 0 : index
    %c0_130 = arith.constant 0 : index
    %373 = vector.load %arg14[%c3_128, %c0_129, %c0_130] : memref<8x8x384xf32, #tpu.memory_space<vmem>>, vector<1x8x384xf32>
    %374 = vector.shape_cast %373 : vector<1x8x384xf32> to vector<8x384xf32>
    %cst_131 = arith.constant dense<0.000000e+00> : vector<8x384xf32>
    %375 = tpu.matmul %369, %266, %cst_131 {dimension_numbers = #tpu.dot_dimension_numbers<[1], [0], [0], [1], [0, 0, 1, 1], [], []>} : vector<8x128xf32>, vector<128x384xf32>, vector<8x384xf32> -> vector<8x384xf32>
    %376 = vector.extract_strided_slice %374 {offsets = [0, 0], sizes = [8, 128], strides = [1, 1]} : vector<8x384xf32> to vector<8x128xf32>
    %377 = vector.extract_strided_slice %375 {offsets = [0, 0], sizes = [8, 128], strides = [1, 1]} : vector<8x384xf32> to vector<8x128xf32>
    %378 = arith.addf %376, %377 : vector<8x128xf32>
    %379 = arith.negf %378 : vector<8x128xf32>
    %380 = math.exp %379 : vector<8x128xf32>
    %cst_132 = arith.constant 1.000000e+00 : f32
    %381 = vector.broadcast %cst_132 : f32 to vector<8x128xf32>
    %382 = arith.addf %381, %380 : vector<8x128xf32>
    %383 = arith.divf %381, %382 : vector<8x128xf32>
    %384 = vector.extract_strided_slice %374 {offsets = [0, 128], sizes = [8, 128], strides = [1, 1]} : vector<8x384xf32> to vector<8x128xf32>
    %385 = vector.extract_strided_slice %375 {offsets = [0, 128], sizes = [8, 128], strides = [1, 1]} : vector<8x384xf32> to vector<8x128xf32>
    %386 = arith.addf %384, %385 : vector<8x128xf32>
    %387 = arith.negf %386 : vector<8x128xf32>
    %388 = math.exp %387 : vector<8x128xf32>
    %cst_133 = arith.constant 1.000000e+00 : f32
    %389 = vector.broadcast %cst_133 : f32 to vector<8x128xf32>
    %390 = arith.addf %389, %388 : vector<8x128xf32>
    %391 = arith.divf %389, %390 : vector<8x128xf32>
    %392 = vector.extract_strided_slice %374 {offsets = [0, 256], sizes = [8, 128], strides = [1, 1]} : vector<8x384xf32> to vector<8x128xf32>
    %393 = vector.extract_strided_slice %375 {offsets = [0, 256], sizes = [8, 128], strides = [1, 1]} : vector<8x384xf32> to vector<8x128xf32>
    %394 = arith.addf %393, %277 : vector<8x128xf32>
    %395 = arith.mulf %383, %394 : vector<8x128xf32>
    %396 = arith.addf %392, %395 : vector<8x128xf32>
    %397 = math.tanh %396 : vector<8x128xf32>
    %398 = arith.subf %369, %397 : vector<8x128xf32>
    %399 = arith.mulf %391, %398 : vector<8x128xf32>
    %400 = arith.addf %397, %399 : vector<8x128xf32>
    %c3_134 = arith.constant 3 : index
    %c0_135 = arith.constant 0 : index
    %c0_136 = arith.constant 0 : index
    %401 = vector.load %arg15[%c3_134, %c0_135, %c0_136] : memref<8x8x128xf32, #tpu.memory_space<vmem>>, vector<1x8x128xf32>
    %402 = vector.shape_cast %401 : vector<1x8x128xf32> to vector<8x128xf32>
    %403 = vector.shape_cast %400 : vector<8x128xf32> to vector<1x8x128xf32>
    tpu.vector_store %arg15[%c3_134, %c0_135, %c0_136], %403 {strides = array<i32>} : memref<8x8x128xf32, #tpu.memory_space<vmem>>, vector<1x8x128xf32>,
    %c4_137 = arith.constant 4 : index
    %c0_138 = arith.constant 0 : index
    %c0_139 = arith.constant 0 : index
    %404 = vector.load %arg14[%c4_137, %c0_138, %c0_139] : memref<8x8x384xf32, #tpu.memory_space<vmem>>, vector<1x8x384xf32>
    %405 = vector.shape_cast %404 : vector<1x8x384xf32> to vector<8x384xf32>
    %cst_140 = arith.constant dense<0.000000e+00> : vector<8x384xf32>
    %406 = tpu.matmul %400, %266, %cst_140 {dimension_numbers = #tpu.dot_dimension_numbers<[1], [0], [0], [1], [0, 0, 1, 1], [], []>} : vector<8x128xf32>, vector<128x384xf32>, vector<8x384xf32> -> vector<8x384xf32>
    %407 = vector.extract_strided_slice %405 {offsets = [0, 0], sizes = [8, 128], strides = [1, 1]} : vector<8x384xf32> to vector<8x128xf32>
    %408 = vector.extract_strided_slice %406 {offsets = [0, 0], sizes = [8, 128], strides = [1, 1]} : vector<8x384xf32> to vector<8x128xf32>
    %409 = arith.addf %407, %408 : vector<8x128xf32>
    %410 = arith.negf %409 : vector<8x128xf32>
    %411 = math.exp %410 : vector<8x128xf32>
    %cst_141 = arith.constant 1.000000e+00 : f32
    %412 = vector.broadcast %cst_141 : f32 to vector<8x128xf32>
    %413 = arith.addf %412, %411 : vector<8x128xf32>
    %414 = arith.divf %412, %413 : vector<8x128xf32>
    %415 = vector.extract_strided_slice %405 {offsets = [0, 128], sizes = [8, 128], strides = [1, 1]} : vector<8x384xf32> to vector<8x128xf32>
    %416 = vector.extract_strided_slice %406 {offsets = [0, 128], sizes = [8, 128], strides = [1, 1]} : vector<8x384xf32> to vector<8x128xf32>
    %417 = arith.addf %415, %416 : vector<8x128xf32>
    %418 = arith.negf %417 : vector<8x128xf32>
    %419 = math.exp %418 : vector<8x128xf32>
    %cst_142 = arith.constant 1.000000e+00 : f32
    %420 = vector.broadcast %cst_142 : f32 to vector<8x128xf32>
    %421 = arith.addf %420, %419 : vector<8x128xf32>
    %422 = arith.divf %420, %421 : vector<8x128xf32>
    %423 = vector.extract_strided_slice %405 {offsets = [0, 256], sizes = [8, 128], strides = [1, 1]} : vector<8x384xf32> to vector<8x128xf32>
    %424 = vector.extract_strided_slice %406 {offsets = [0, 256], sizes = [8, 128], strides = [1, 1]} : vector<8x384xf32> to vector<8x128xf32>
    %425 = arith.addf %424, %277 : vector<8x128xf32>
    %426 = arith.mulf %414, %425 : vector<8x128xf32>
    %427 = arith.addf %423, %426 : vector<8x128xf32>
    %428 = math.tanh %427 : vector<8x128xf32>
    %429 = arith.subf %400, %428 : vector<8x128xf32>
    %430 = arith.mulf %422, %429 : vector<8x128xf32>
    %431 = arith.addf %428, %430 : vector<8x128xf32>
    %c4_143 = arith.constant 4 : index
    %c0_144 = arith.constant 0 : index
    %c0_145 = arith.constant 0 : index
    %432 = vector.load %arg15[%c4_143, %c0_144, %c0_145] : memref<8x8x128xf32, #tpu.memory_space<vmem>>, vector<1x8x128xf32>
    %433 = vector.shape_cast %432 : vector<1x8x128xf32> to vector<8x128xf32>
    %434 = vector.shape_cast %431 : vector<8x128xf32> to vector<1x8x128xf32>
    tpu.vector_store %arg15[%c4_143, %c0_144, %c0_145], %434 {strides = array<i32>} : memref<8x8x128xf32, #tpu.memory_space<vmem>>, vector<1x8x128xf32>,
    %c5_146 = arith.constant 5 : index
    %c0_147 = arith.constant 0 : index
    %c0_148 = arith.constant 0 : index
    %435 = vector.load %arg14[%c5_146, %c0_147, %c0_148] : memref<8x8x384xf32, #tpu.memory_space<vmem>>, vector<1x8x384xf32>
    %436 = vector.shape_cast %435 : vector<1x8x384xf32> to vector<8x384xf32>
    %cst_149 = arith.constant dense<0.000000e+00> : vector<8x384xf32>
    %437 = tpu.matmul %431, %266, %cst_149 {dimension_numbers = #tpu.dot_dimension_numbers<[1], [0], [0], [1], [0, 0, 1, 1], [], []>} : vector<8x128xf32>, vector<128x384xf32>, vector<8x384xf32> -> vector<8x384xf32>
    %438 = vector.extract_strided_slice %436 {offsets = [0, 0], sizes = [8, 128], strides = [1, 1]} : vector<8x384xf32> to vector<8x128xf32>
    %439 = vector.extract_strided_slice %437 {offsets = [0, 0], sizes = [8, 128], strides = [1, 1]} : vector<8x384xf32> to vector<8x128xf32>
    %440 = arith.addf %438, %439 : vector<8x128xf32>
    %441 = arith.negf %440 : vector<8x128xf32>
    %442 = math.exp %441 : vector<8x128xf32>
    %cst_150 = arith.constant 1.000000e+00 : f32
    %443 = vector.broadcast %cst_150 : f32 to vector<8x128xf32>
    %444 = arith.addf %443, %442 : vector<8x128xf32>
    %445 = arith.divf %443, %444 : vector<8x128xf32>
    %446 = vector.extract_strided_slice %436 {offsets = [0, 128], sizes = [8, 128], strides = [1, 1]} : vector<8x384xf32> to vector<8x128xf32>
    %447 = vector.extract_strided_slice %437 {offsets = [0, 128], sizes = [8, 128], strides = [1, 1]} : vector<8x384xf32> to vector<8x128xf32>
    %448 = arith.addf %446, %447 : vector<8x128xf32>
    %449 = arith.negf %448 : vector<8x128xf32>
    %450 = math.exp %449 : vector<8x128xf32>
    %cst_151 = arith.constant 1.000000e+00 : f32
    %451 = vector.broadcast %cst_151 : f32 to vector<8x128xf32>
    %452 = arith.addf %451, %450 : vector<8x128xf32>
    %453 = arith.divf %451, %452 : vector<8x128xf32>
    %454 = vector.extract_strided_slice %436 {offsets = [0, 256], sizes = [8, 128], strides = [1, 1]} : vector<8x384xf32> to vector<8x128xf32>
    %455 = vector.extract_strided_slice %437 {offsets = [0, 256], sizes = [8, 128], strides = [1, 1]} : vector<8x384xf32> to vector<8x128xf32>
    %456 = arith.addf %455, %277 : vector<8x128xf32>
    %457 = arith.mulf %445, %456 : vector<8x128xf32>
    %458 = arith.addf %454, %457 : vector<8x128xf32>
    %459 = math.tanh %458 : vector<8x128xf32>
    %460 = arith.subf %431, %459 : vector<8x128xf32>
    %461 = arith.mulf %453, %460 : vector<8x128xf32>
    %462 = arith.addf %459, %461 : vector<8x128xf32>
    %c5_152 = arith.constant 5 : index
    %c0_153 = arith.constant 0 : index
    %c0_154 = arith.constant 0 : index
    %463 = vector.load %arg15[%c5_152, %c0_153, %c0_154] : memref<8x8x128xf32, #tpu.memory_space<vmem>>, vector<1x8x128xf32>
    %464 = vector.shape_cast %463 : vector<1x8x128xf32> to vector<8x128xf32>
    %465 = vector.shape_cast %462 : vector<8x128xf32> to vector<1x8x128xf32>
    tpu.vector_store %arg15[%c5_152, %c0_153, %c0_154], %465 {strides = array<i32>} : memref<8x8x128xf32, #tpu.memory_space<vmem>>, vector<1x8x128xf32>,
    %c6_155 = arith.constant 6 : index
    %c0_156 = arith.constant 0 : index
    %c0_157 = arith.constant 0 : index
    %466 = vector.load %arg14[%c6_155, %c0_156, %c0_157] : memref<8x8x384xf32, #tpu.memory_space<vmem>>, vector<1x8x384xf32>
    %467 = vector.shape_cast %466 : vector<1x8x384xf32> to vector<8x384xf32>
    %cst_158 = arith.constant dense<0.000000e+00> : vector<8x384xf32>
    %468 = tpu.matmul %462, %266, %cst_158 {dimension_numbers = #tpu.dot_dimension_numbers<[1], [0], [0], [1], [0, 0, 1, 1], [], []>} : vector<8x128xf32>, vector<128x384xf32>, vector<8x384xf32> -> vector<8x384xf32>
    %469 = vector.extract_strided_slice %467 {offsets = [0, 0], sizes = [8, 128], strides = [1, 1]} : vector<8x384xf32> to vector<8x128xf32>
    %470 = vector.extract_strided_slice %468 {offsets = [0, 0], sizes = [8, 128], strides = [1, 1]} : vector<8x384xf32> to vector<8x128xf32>
    %471 = arith.addf %469, %470 : vector<8x128xf32>
    %472 = arith.negf %471 : vector<8x128xf32>
    %473 = math.exp %472 : vector<8x128xf32>
    %cst_159 = arith.constant 1.000000e+00 : f32
    %474 = vector.broadcast %cst_159 : f32 to vector<8x128xf32>
    %475 = arith.addf %474, %473 : vector<8x128xf32>
    %476 = arith.divf %474, %475 : vector<8x128xf32>
    %477 = vector.extract_strided_slice %467 {offsets = [0, 128], sizes = [8, 128], strides = [1, 1]} : vector<8x384xf32> to vector<8x128xf32>
    %478 = vector.extract_strided_slice %468 {offsets = [0, 128], sizes = [8, 128], strides = [1, 1]} : vector<8x384xf32> to vector<8x128xf32>
    %479 = arith.addf %477, %478 : vector<8x128xf32>
    %480 = arith.negf %479 : vector<8x128xf32>
    %481 = math.exp %480 : vector<8x128xf32>
    %cst_160 = arith.constant 1.000000e+00 : f32
    %482 = vector.broadcast %cst_160 : f32 to vector<8x128xf32>
    %483 = arith.addf %482, %481 : vector<8x128xf32>
    %484 = arith.divf %482, %483 : vector<8x128xf32>
    %485 = vector.extract_strided_slice %467 {offsets = [0, 256], sizes = [8, 128], strides = [1, 1]} : vector<8x384xf32> to vector<8x128xf32>
    %486 = vector.extract_strided_slice %468 {offsets = [0, 256], sizes = [8, 128], strides = [1, 1]} : vector<8x384xf32> to vector<8x128xf32>
    %487 = arith.addf %486, %277 : vector<8x128xf32>
    %488 = arith.mulf %476, %487 : vector<8x128xf32>
    %489 = arith.addf %485, %488 : vector<8x128xf32>
    %490 = math.tanh %489 : vector<8x128xf32>
    %491 = arith.subf %462, %490 : vector<8x128xf32>
    %492 = arith.mulf %484, %491 : vector<8x128xf32>
    %493 = arith.addf %490, %492 : vector<8x128xf32>
    %c6_161 = arith.constant 6 : index
    %c0_162 = arith.constant 0 : index
    %c0_163 = arith.constant 0 : index
    %494 = vector.load %arg15[%c6_161, %c0_162, %c0_163] : memref<8x8x128xf32, #tpu.memory_space<vmem>>, vector<1x8x128xf32>
    %495 = vector.shape_cast %494 : vector<1x8x128xf32> to vector<8x128xf32>
    %496 = vector.shape_cast %493 : vector<8x128xf32> to vector<1x8x128xf32>
    tpu.vector_store %arg15[%c6_161, %c0_162, %c0_163], %496 {strides = array<i32>} : memref<8x8x128xf32, #tpu.memory_space<vmem>>, vector<1x8x128xf32>,
    %c7_164 = arith.constant 7 : index
    %c0_165 = arith.constant 0 : index
    %c0_166 = arith.constant 0 : index
    %497 = vector.load %arg14[%c7_164, %c0_165, %c0_166] : memref<8x8x384xf32, #tpu.memory_space<vmem>>, vector<1x8x384xf32>
    %498 = vector.shape_cast %497 : vector<1x8x384xf32> to vector<8x384xf32>
    %cst_167 = arith.constant dense<0.000000e+00> : vector<8x384xf32>
    %499 = tpu.matmul %493, %266, %cst_167 {dimension_numbers = #tpu.dot_dimension_numbers<[1], [0], [0], [1], [0, 0, 1, 1], [], []>} : vector<8x128xf32>, vector<128x384xf32>, vector<8x384xf32> -> vector<8x384xf32>
    %500 = vector.extract_strided_slice %498 {offsets = [0, 0], sizes = [8, 128], strides = [1, 1]} : vector<8x384xf32> to vector<8x128xf32>
    %501 = vector.extract_strided_slice %499 {offsets = [0, 0], sizes = [8, 128], strides = [1, 1]} : vector<8x384xf32> to vector<8x128xf32>
    %502 = arith.addf %500, %501 : vector<8x128xf32>
    %503 = arith.negf %502 : vector<8x128xf32>
    %504 = math.exp %503 : vector<8x128xf32>
    %cst_168 = arith.constant 1.000000e+00 : f32
    %505 = vector.broadcast %cst_168 : f32 to vector<8x128xf32>
    %506 = arith.addf %505, %504 : vector<8x128xf32>
    %507 = arith.divf %505, %506 : vector<8x128xf32>
    %508 = vector.extract_strided_slice %498 {offsets = [0, 128], sizes = [8, 128], strides = [1, 1]} : vector<8x384xf32> to vector<8x128xf32>
    %509 = vector.extract_strided_slice %499 {offsets = [0, 128], sizes = [8, 128], strides = [1, 1]} : vector<8x384xf32> to vector<8x128xf32>
    %510 = arith.addf %508, %509 : vector<8x128xf32>
    %511 = arith.negf %510 : vector<8x128xf32>
    %512 = math.exp %511 : vector<8x128xf32>
    %cst_169 = arith.constant 1.000000e+00 : f32
    %513 = vector.broadcast %cst_169 : f32 to vector<8x128xf32>
    %514 = arith.addf %513, %512 : vector<8x128xf32>
    %515 = arith.divf %513, %514 : vector<8x128xf32>
    %516 = vector.extract_strided_slice %498 {offsets = [0, 256], sizes = [8, 128], strides = [1, 1]} : vector<8x384xf32> to vector<8x128xf32>
    %517 = vector.extract_strided_slice %499 {offsets = [0, 256], sizes = [8, 128], strides = [1, 1]} : vector<8x384xf32> to vector<8x128xf32>
    %518 = arith.addf %517, %277 : vector<8x128xf32>
    %519 = arith.mulf %507, %518 : vector<8x128xf32>
    %520 = arith.addf %516, %519 : vector<8x128xf32>
    %521 = math.tanh %520 : vector<8x128xf32>
    %522 = arith.subf %493, %521 : vector<8x128xf32>
    %523 = arith.mulf %515, %522 : vector<8x128xf32>
    %524 = arith.addf %521, %523 : vector<8x128xf32>
    %c7_170 = arith.constant 7 : index
    %c0_171 = arith.constant 0 : index
    %c0_172 = arith.constant 0 : index
    %525 = vector.load %arg15[%c7_170, %c0_171, %c0_172] : memref<8x8x128xf32, #tpu.memory_space<vmem>>, vector<1x8x128xf32>
    %526 = vector.shape_cast %525 : vector<1x8x128xf32> to vector<8x128xf32>
    %527 = vector.shape_cast %524 : vector<8x128xf32> to vector<1x8x128xf32>
    tpu.vector_store %arg15[%c7_170, %c0_171, %c0_172], %527 {strides = array<i32>} : memref<8x8x128xf32, #tpu.memory_space<vmem>>, vector<1x8x128xf32>,
    %c1_173 = arith.constant 1 : index
    %c0_174 = arith.constant 0 : index
    %c0_175 = arith.constant 0 : index
    %528 = vector.load %arg13[%c1_173, %c0_174, %c0_175] : memref<2x8x128xf32, #tpu.memory_space<vmem>>, vector<1x8x128xf32>
    %529 = vector.shape_cast %528 : vector<1x8x128xf32> to vector<8x128xf32>
    %530 = vector.shape_cast %524 : vector<8x128xf32> to vector<1x8x128xf32>
    tpu.vector_store %arg13[%c1_173, %c0_174, %c0_175], %530 {strides = array<i32>} : memref<2x8x128xf32, #tpu.memory_space<vmem>>, vector<1x8x128xf32>,
    %c0_176 = arith.constant 0 : index
    %c0_177 = arith.constant 0 : index
    %c0_178 = arith.constant 0 : index
    %531 = vector.load %arg15[%c0_176, %c0_177, %c0_178] : memref<8x8x128xf32, #tpu.memory_space<vmem>>, vector<8x8x128xf32>
    %532 = vector.shape_cast %531 : vector<8x8x128xf32> to vector<64x128xf32>
    %c0_179 = arith.constant 0 : index
    %c0_180 = arith.constant 0 : index
    %533 = vector.load %arg10[%c0_179, %c0_180] : memref<128x128xf32, #tpu.memory_space<vmem>>, vector<128x128xf32>
    %cst_181 = arith.constant dense<0.000000e+00> : vector<64x128xf32>
    %534 = tpu.matmul %532, %533, %cst_181 {dimension_numbers = #tpu.dot_dimension_numbers<[1], [0], [0], [1], [0, 0, 1, 1], [], []>} : vector<64x128xf32>, vector<128x128xf32>, vector<64x128xf32> -> vector<64x128xf32>
    %c0_182 = arith.constant 0 : index
    %c0_183 = arith.constant 0 : index
    %535 = vector.load %arg11[%c0_182, %c0_183] : memref<1x128xf32, #tpu.memory_space<vmem>>, vector<1x128xf32>
    %536 = vector.broadcast %535 : vector<1x128xf32> to vector<64x128xf32>
    %537 = arith.addf %534, %536 : vector<64x128xf32>
    %c0_184 = arith.constant 0 : index
    %c0_185 = arith.constant 0 : index
    %538 = vector.load %arg12[%c0_184, %c0_185] : memref<64x128xf32, #tpu.memory_space<vmem>>, vector<64x128xf32>
    tpu.vector_store %arg12[%c0_184, %c0_185], %537 {strides = array<i32>} : memref<64x128xf32, #tpu.memory_space<vmem>>, vector<64x128xf32>,
    return
  }
}

</mosaic_0001>

<llo_original>
// kernel: char_rnn_forward.1
$region0: #{char_rnn_forward.1}
  #allocation0 [shape = 'u32[]', space=smem, size = 0x4, offset = 0x4, fixed_abs, tag = 'smem constant byte address 0x4 - core index']
  #allocation1 [shape = 'u32[144,128]{1,0:T(1,128)}', space=vmem, size = 0x12000, scoped, tag = 'internal scratch']
  #allocation2 [shape = 'f32[8,8,384]{2,1,0:T(8,128)}', space=vmem, size = 0x18000, scoped, tag = 'scratch operand']
  #allocation3 [shape = 'f32[8,8,128]{2,1,0:T(8,128)}', space=vmem, size = 0x8000, scoped, tag = 'scratch operand']
  %s0 = inlined_call_operand.vmem [shape: f32[64,128], index: 0, kind: input, shape index: {}]
  %s1 = inlined_call_operand.vmem [shape: f32[2,8,128], index: 1, kind: input, shape index: {}]
  %s2 = inlined_call_operand.hbm [shape: f32[128,384], index: 2, kind: input, shape index: {}]
  %s3 = inlined_call_operand.hbm [shape: f32[128,384], index: 3, kind: input, shape index: {}]
  %s4 = inlined_call_operand.vmem [shape: f32[1,384], index: 4, kind: input, shape index: {}]
  %s5 = inlined_call_operand.vmem [shape: f32[1,128], index: 5, kind: input, shape index: {}]
  %s6 = inlined_call_operand.hbm [shape: f32[128,384], index: 6, kind: input, shape index: {}]
  %s7 = inlined_call_operand.hbm [shape: f32[128,384], index: 7, kind: input, shape index: {}]
  %s8 = inlined_call_operand.vmem [shape: f32[1,384], index: 8, kind: input, shape index: {}]
  %s9 = inlined_call_operand.vmem [shape: f32[1,128], index: 9, kind: input, shape index: {}]
  %s10 = inlined_call_operand.vmem [shape: f32[128,128], index: 10, kind: input, shape index: {}]
  %s11 = inlined_call_operand.vmem [shape: f32[1,128], index: 11, kind: input, shape index: {}]
  %s12 = inlined_call_operand.vmem [shape: f32[64,128], index: 12, kind: output, shape index: {0}]
  %s13 = inlined_call_operand.vmem [shape: f32[2,8,128], index: 13, kind: output, shape index: {1}]
  %14 = xla_tuple %s12, %s13
  %s15 = sld [smem:[#allocation0]]
  $region82: #{char_rnn_forward.1} parent=0
    _
  %s17 = ssub.s32 1, %s15
  %s18 = scalar_select 0, %s17, %s15
  $region1: #{char_rnn_forward.1} parent=0
    #allocation4 [shape = 'u8[196608]{0}', space=vmem, size = 0x30000, scoped, tag = 'input window, operand 2, single buffered']
    #allocation5 [shape = 's32[1]{0}', space=sflag, size = 0x4, scoped, tag = 'scoped memory for char_rnn_forward.1']
    #allocation6 [shape = 'u8[196608]{0}', space=vmem, size = 0x30000, scoped, tag = 'input window, operand 3, single buffered']
    #allocation7 [shape = 's32[1]{0}', space=sflag, size = 0x4, scoped, tag = 'scoped memory for char_rnn_forward.1']
    #allocation8 [shape = 'u8[196608]{0}', space=vmem, size = 0x30000, scoped, tag = 'input window, operand 6, single buffered']
    #allocation9 [shape = 'u8[196608]{0}', space=vmem, size = 0x30000, scoped, tag = 'input window, operand 7, single buffered']
    #allocation10 [shape = 's32[1]{0}', space=sflag, size = 0x4, scoped, tag = 'scoped memory for char_rnn_forward.1']
    %19 = vsyncpa [#allocation5], 0
    %20 = vsyncpa [#allocation7], 0
    %21 = vsyncpa [#allocation10], 0
    // Predicated region
    $region2: #{char_rnn_forward.1} parent=1 // pred_check
      _
    $region3: #{char_rnn_forward.1} parent=1 // pred_check_branch
      %23 = sbr.rel (0) target = $region5
    $region4: #{char_rnn_forward.1} parent=1 // pred_region
      _
    $region5: #{char_rnn_forward.1} parent=1 // pred_fallthru
      _
    // Predicated region
    $region6: #{char_rnn_forward.1} parent=1 // pred_check
      _
    $region7: #{char_rnn_forward.1} parent=1 // pred_check_branch
      %25 = sbr.rel (0) target = $region9
    $region8: #{char_rnn_forward.1} parent=1 // pred_region
      _
    $region9: #{char_rnn_forward.1} parent=1 // pred_fallthru
      _
    // Predicated region
    $region10: #{char_rnn_forward.1} parent=1 // pred_check
      _
    $region11: #{char_rnn_forward.1} parent=1 // pred_check_branch
      %27 = sbr.rel (0) target = $region13
    $region12: #{char_rnn_forward.1} parent=1 // pred_region
      %s29 = ssub.s32 6144, 6144
      %30 = vsyncadd [#allocation5], %s29
      %s31 = sshll.u32 [#allocation4], 4
      %s32 = int_to_ptr.vmem [resolvable:$true] %s31
      %37 = dma.hbm_to_vmem [thread:$0]  %s2, 6144, %s32, [#allocation5], 384, 384, 24
    $region13: #{char_rnn_forward.1} parent=1 // pred_fallthru
      _
    // Predicated region
    $region14: #{char_rnn_forward.1} parent=1 // pred_check
      _
    $region15: #{char_rnn_forward.1} parent=1 // pred_check_branch
      %39 = sbr.rel (0) target = $region17
    $region16: #{char_rnn_forward.1} parent=1 // pred_region
      %s41 = ssub.s32 6144, 6144
      %42 = vsyncadd [#allocation7], %s41
      %s43 = sshll.u32 [#allocation6], 4
      %s44 = int_to_ptr.vmem [resolvable:$true] %s43
      %49 = dma.hbm_to_vmem [thread:$0]  %s3, 6144, %s44, [#allocation7], 384, 384, 24
    $region17: #{char_rnn_forward.1} parent=1 // pred_fallthru
      _
    // Predicated region
    $region18: #{char_rnn_forward.1} parent=1 // pred_check
      _
    $region19: #{char_rnn_forward.1} parent=1 // pred_check_branch
      %51 = sbr.rel (0) target = $region21
    $region20: #{char_rnn_forward.1} parent=1 // pred_region
      _
    $region21: #{char_rnn_forward.1} parent=1 // pred_fallthru
      _
    // Predicated region
    $region22: #{char_rnn_forward.1} parent=1 // pred_check
      _
    $region23: #{char_rnn_forward.1} parent=1 // pred_check_branch
      %53 = sbr.rel (0) target = $region25
    $region24: #{char_rnn_forward.1} parent=1 // pred_region
      _
    $region25: #{char_rnn_forward.1} parent=1 // pred_fallthru
      _
    // Predicated region
    $region26: #{char_rnn_forward.1} parent=1 // pred_check
      _
    $region27: #{char_rnn_forward.1} parent=1 // pred_check_branch
      %55 = sbr.rel (0) target = $region29
    $region28: #{char_rnn_forward.1} parent=1 // pred_region
      %s57 = ssub.s32 6144, 6144
      %58 = vsyncadd [#allocation7], %s57
      %s59 = sshll.u32 [#allocation8], 4
      %s60 = int_to_ptr.vmem [resolvable:$true] %s59
      %65 = dma.hbm_to_vmem [thread:$0]  %s6, 6144, %s60, [#allocation7], 384, 384, 24
    $region29: #{char_rnn_forward.1} parent=1 // pred_fallthru
      _
    // Predicated region
    $region30: #{char_rnn_forward.1} parent=1 // pred_check
      _
    $region31: #{char_rnn_forward.1} parent=1 // pred_check_branch
      %67 = sbr.rel (0) target = $region33
    $region32: #{char_rnn_forward.1} parent=1 // pred_region
      %s69 = ssub.s32 6144, 6144
      %70 = vsyncadd [#allocation10], %s69
      %s71 = sshll.u32 [#allocation9], 4
      %s72 = int_to_ptr.vmem [resolvable:$true] %s71
      %77 = dma.hbm_to_vmem [thread:$0]  %s7, 6144, %s72, [#allocation10], 384, 384, 24
    $region33: #{char_rnn_forward.1} parent=1 // pred_fallthru
      _
    // Predicated region
    $region34: #{char_rnn_forward.1} parent=1 // pred_check
      _
    $region35: #{char_rnn_forward.1} parent=1 // pred_check_branch
      %79 = sbr.rel (0) target = $region37
    $region36: #{char_rnn_forward.1} parent=1 // pred_region
      _
    $region37: #{char_rnn_forward.1} parent=1 // pred_fallthru
      _
    // Predicated region
    $region38: #{char_rnn_forward.1} parent=1 // pred_check
      _
    $region39: #{char_rnn_forward.1} parent=1 // pred_check_branch
      %81 = sbr.rel (0) target = $region41
    $region40: #{char_rnn_forward.1} parent=1 // pred_region
      _
    $region41: #{char_rnn_forward.1} parent=1 // pred_fallthru
      _
    // Predicated region
    $region42: #{char_rnn_forward.1} parent=1 // pred_check
      _
    $region43: #{char_rnn_forward.1} parent=1 // pred_check_branch
      %83 = sbr.rel (0) target = $region45
    $region44: #{char_rnn_forward.1} parent=1 // pred_region
      _
    $region45: #{char_rnn_forward.1} parent=1 // pred_fallthru
      _
    // Predicated region
    $region46: #{char_rnn_forward.1} parent=1 // pred_check
      _
    $region47: #{char_rnn_forward.1} parent=1 // pred_check_branch
      %85 = sbr.rel (0) target = $region49
    $region48: #{char_rnn_forward.1} parent=1 // pred_region
      _
    $region49: #{char_rnn_forward.1} parent=1 // pred_fallthru
      _
    // Predicated region
    $region50: #{char_rnn_forward.1} parent=1 // pred_check
      _
    $region51: #{char_rnn_forward.1} parent=1 // pred_check_branch
      %87 = sbr.rel (0) target = $region53
    $region52: #{char_rnn_forward.1} parent=1 // pred_region
      %88 = dma.done [#allocation5], 6144
    $region53: #{char_rnn_forward.1} parent=1 // pred_fallthru
      _
    // Predicated region
    $region54: #{char_rnn_forward.1} parent=1 // pred_check
      _
    $region55: #{char_rnn_forward.1} parent=1 // pred_check_branch
      %90 = sbr.rel (0) target = $region57
    $region56: #{char_rnn_forward.1} parent=1 // pred_region
      %91 = dma.done [#allocation7], 6144
    $region57: #{char_rnn_forward.1} parent=1 // pred_fallthru
      _
    // Predicated region
    $region58: #{char_rnn_forward.1} parent=1 // pred_check
      _
    $region59: #{char_rnn_forward.1} parent=1 // pred_check_branch
      %93 = sbr.rel (0) target = $region61
    $region60: #{char_rnn_forward.1} parent=1 // pred_region
      %94 = dma.done [#allocation7], 6144
    $region61: #{char_rnn_forward.1} parent=1 // pred_fallthru
      _
    // Predicated region
    $region62: #{char_rnn_forward.1} parent=1 // pred_check
      _
    $region63: #{char_rnn_forward.1} parent=1 // pred_check_branch
      %96 = sbr.rel (0) target = $region65
    $region64: #{char_rnn_forward.1} parent=1 // pred_region
      %97 = dma.done [#allocation10], 6144
    $region65: #{char_rnn_forward.1} parent=1 // pred_fallthru
      _
    %v98 = vld [vmem:[#allocation4] sm:$0xff]
    %v99 = vld [vmem:[#allocation4 + $0x8] sm:$0xff]
    %v100 = vld [vmem:[#allocation4 + $0x10] sm:$0xff]
    %v101 = vld [vmem:[#allocation4 + $0x18] sm:$0xff]
    %v102 = vld [vmem:[#allocation4 + $0x20] sm:$0xff]
    %v103 = vld [vmem:[#allocation4 + $0x28] sm:$0xff]
    %v104 = vld [vmem:[#allocation4 + $0x30] sm:$0xff]
    %v105 = vld [vmem:[#allocation4 + $0x38] sm:$0xff]
    %v106 = vld [vmem:[#allocation4 + $0x40] sm:$0xff]
    %v107 = vld [vmem:[#allocation4 + $0x48] sm:$0xff]
    %v108 = vld [vmem:[#allocation4 + $0x50] sm:$0xff]
    %v109 = vld [vmem:[#allocation4 + $0x58] sm:$0xff]
    %v110 = vld [vmem:[#allocation4 + $0x60] sm:$0xff]
    %v111 = vld [vmem:[#allocation4 + $0x68] sm:$0xff]
    %v112 = vld [vmem:[#allocation4 + $0x70] sm:$0xff]
    %v113 = vld [vmem:[#allocation4 + $0x78] sm:$0xff]
    %v114 = vld [vmem:[#allocation4 + $0x80] sm:$0xff]
    %v115 = vld [vmem:[#allocation4 + $0x88] sm:$0xff]
    %v116 = vld [vmem:[#allocation4 + $0x90] sm:$0xff]
    %v117 = vld [vmem:[#allocation4 + $0x98] sm:$0xff]
    %v118 = vld [vmem:[#allocation4 + $0xa0] sm:$0xff]
    %v119 = vld [vmem:[#allocation4 + $0xa8] sm:$0xff]
    %v120 = vld [vmem:[#allocation4 + $0xb0] sm:$0xff]
    %v121 = vld [vmem:[#allocation4 + $0xb8] sm:$0xff]
    %v122 = vld [vmem:[#allocation4 + $0xc0] sm:$0xff]
    %v123 = vld [vmem:[#allocation4 + $0xc8] sm:$0xff]
    %v124 = vld [vmem:[#allocation4 + $0xd0] sm:$0xff]
    %v125 = vld [vmem:[#allocation4 + $0xd8] sm:$0xff]
    %v126 = vld [vmem:[#allocation4 + $0xe0] sm:$0xff]
    %v127 = vld [vmem:[#allocation4 + $0xe8] sm:$0xff]
    %v128 = vld [vmem:[#allocation4 + $0xf0] sm:$0xff]
    %v129 = vld [vmem:[#allocation4 + $0xf8] sm:$0xff]
    %v130 = vld [vmem:[#allocation4 + $0x100] sm:$0xff]
    %v131 = vld [vmem:[#allocation4 + $0x108] sm:$0xff]
    %v132 = vld [vmem:[#allocation4 + $0x110] sm:$0xff]
    %v133 = vld [vmem:[#allocation4 + $0x118] sm:$0xff]
    %v134 = vld [vmem:[#allocation4 + $0x120] sm:$0xff]
    %v135 = vld [vmem:[#allocation4 + $0x128] sm:$0xff]
    %v136 = vld [vmem:[#allocation4 + $0x130] sm:$0xff]
    %v137 = vld [vmem:[#allocation4 + $0x138] sm:$0xff]
    %v138 = vld [vmem:[#allocation4 + $0x140] sm:$0xff]
    %v139 = vld [vmem:[#allocation4 + $0x148] sm:$0xff]
    %v140 = vld [vmem:[#allocation4 + $0x150] sm:$0xff]
    %v141 = vld [vmem:[#allocation4 + $0x158] sm:$0xff]
    %v142 = vld [vmem:[#allocation4 + $0x160] sm:$0xff]
    %v143 = vld [vmem:[#allocation4 + $0x168] sm:$0xff]
    %v144 = vld [vmem:[#allocation4 + $0x170] sm:$0xff]
    %v145 = vld [vmem:[#allocation4 + $0x178] sm:$0xff]
    %v146 = vld [vmem:[#allocation6] sm:$0xff]
    %v147 = vld [vmem:[#allocation6 + $0x8] sm:$0xff]
    %v148 = vld [vmem:[#allocation6 + $0x10] sm:$0xff]
    %v149 = vld [vmem:[#allocation6 + $0x18] sm:$0xff]
    %v150 = vld [vmem:[#allocation6 + $0x20] sm:$0xff]
    %v151 = vld [vmem:[#allocation6 + $0x28] sm:$0xff]
    %v152 = vld [vmem:[#allocation6 + $0x30] sm:$0xff]
    %v153 = vld [vmem:[#allocation6 + $0x38] sm:$0xff]
    %v154 = vld [vmem:[#allocation6 + $0x40] sm:$0xff]
    %v155 = vld [vmem:[#allocation6 + $0x48] sm:$0xff]
    %v156 = vld [vmem:[#allocation6 + $0x50] sm:$0xff]
    %v157 = vld [vmem:[#allocation6 + $0x58] sm:$0xff]
    %v158 = vld [vmem:[#allocation6 + $0x60] sm:$0xff]
    %v159 = vld [vmem:[#allocation6 + $0x68] sm:$0xff]
    %v160 = vld [vmem:[#allocation6 + $0x70] sm:$0xff]
    %v161 = vld [vmem:[#allocation6 + $0x78] sm:$0xff]
    %v162 = vld [vmem:[#allocation6 + $0x80] sm:$0xff]
    %v163 = vld [vmem:[#allocation6 + $0x88] sm:$0xff]
    %v164 = vld [vmem:[#allocation6 + $0x90] sm:$0xff]
    %v165 = vld [vmem:[#allocation6 + $0x98] sm:$0xff]
    %v166 = vld [vmem:[#allocation6 + $0xa0] sm:$0xff]
    %v167 = vld [vmem:[#allocation6 + $0xa8] sm:$0xff]
    %v168 = vld [vmem:[#allocation6 + $0xb0] sm:$0xff]
    %v169 = vld [vmem:[#allocation6 + $0xb8] sm:$0xff]
    %v170 = vld [vmem:[#allocation6 + $0xc0] sm:$0xff]
    %v171 = vld [vmem:[#allocation6 + $0xc8] sm:$0xff]
    %v172 = vld [vmem:[#allocation6 + $0xd0] sm:$0xff]
    %v173 = vld [vmem:[#allocation6 + $0xd8] sm:$0xff]
    %v174 = vld [vmem:[#allocation6 + $0xe0] sm:$0xff]
    %v175 = vld [vmem:[#allocation6 + $0xe8] sm:$0xff]
    %v176 = vld [vmem:[#allocation6 + $0xf0] sm:$0xff]
    %v177 = vld [vmem:[#allocation6 + $0xf8] sm:$0xff]
    %v178 = vld [vmem:[#allocation6 + $0x100] sm:$0xff]
    %v179 = vld [vmem:[#allocation6 + $0x108] sm:$0xff]
    %v180 = vld [vmem:[#allocation6 + $0x110] sm:$0xff]
    %v181 = vld [vmem:[#allocation6 + $0x118] sm:$0xff]
    %v182 = vld [vmem:[#allocation6 + $0x120] sm:$0xff]
    %v183 = vld [vmem:[#allocation6 + $0x128] sm:$0xff]
    %v184 = vld [vmem:[#allocation6 + $0x130] sm:$0xff]
    %v185 = vld [vmem:[#allocation6 + $0x138] sm:$0xff]
    %v186 = vld [vmem:[#allocation6 + $0x140] sm:$0xff]
    %v187 = vld [vmem:[#allocation6 + $0x148] sm:$0xff]
    %v188 = vld [vmem:[#allocation6 + $0x150] sm:$0xff]
    %v189 = vld [vmem:[#allocation6 + $0x158] sm:$0xff]
    %v190 = vld [vmem:[#allocation6 + $0x160] sm:$0xff]
    %v191 = vld [vmem:[#allocation6 + $0x168] sm:$0xff]
    %v192 = vld [vmem:[#allocation6 + $0x170] sm:$0xff]
    %v193 = vld [vmem:[#allocation6 + $0x178] sm:$0xff]
    %v194 = vld [vmem:[%s4] sm:$0x7]
    %v195 = vld [vmem:[%s5] sm:$0x1]
    %v196 = vld [vmem:[%s0] sm:$0xff]
    %v197 = vld [vmem:[%s0 + $0x8] sm:$0xff]
    %v198 = vld [vmem:[%s0 + $0x10] sm:$0xff]
    %v199 = vld [vmem:[%s0 + $0x18] sm:$0xff]
    %v200 = vld [vmem:[%s0 + $0x20] sm:$0xff]
    %v201 = vld [vmem:[%s0 + $0x28] sm:$0xff]
    %v202 = vld [vmem:[%s0 + $0x30] sm:$0xff]
    %v203 = vld [vmem:[%s0 + $0x38] sm:$0xff]
    %v205 = vlaneseq
    %v206 = vshrl.u32 %v205, 7
    %v207 = vsub.s32 0, %v206
    %v208 = vrot.slane %v194, %v207
    %v209 = vlaneseq
    %v210 = vshrl.u32 %v209, 7
    %v211 = vsub.s32 1, %v210
    %v212 = vrot.slane %v194, %v211
    %v213 = vlaneseq
    %v214 = vshrl.u32 %v213, 7
    %v215 = vsub.s32 2, %v214
    %v216 = vrot.slane %v194, %v215
    %220 = vmatprep.subr.mxu0 %v99
    %221 = vmatpush1.msra.mxu0 %v98
    %222 = vmatprep.subr.mxu0 %v102
    %223 = vmatpush1.msra.mxu0 %v101
    %224 = vmatprep.subr.mxu0 %v105
    %225 = vmatpush1.msra.mxu0 %v104
    %226 = vmatprep.subr.mxu0 %v108
    %227 = vmatpush1.msra.mxu0 %v107
    %228 = vmatprep.subr.mxu0 %v111
    %229 = vmatpush1.msra.mxu0 %v110
    %230 = vmatprep.subr.mxu0 %v114
    %231 = vmatpush1.msra.mxu0 %v113
    %232 = vmatprep.subr.mxu0 %v117
    %233 = vmatpush1.msra.mxu0 %v116
    %234 = vmatprep.subr.mxu0 %v120
    %235 = vmatpush1.msra.mxu0 %v119
    %236 = vmatprep.subr.mxu0 %v123
    %237 = vmatpush1.msra.mxu0 %v122
    %238 = vmatprep.subr.mxu0 %v126
    %239 = vmatpush1.msra.mxu0 %v125
    %240 = vmatprep.subr.mxu0 %v129
    %241 = vmatpush1.msra.mxu0 %v128
    %242 = vmatprep.subr.mxu0 %v132
    %243 = vmatpush1.msra.mxu0 %v131
    %244 = vmatprep.subr.mxu0 %v135
    %245 = vmatpush1.msra.mxu0 %v134
    %246 = vmatprep.subr.mxu0 %v138
    %247 = vmatpush1.msra.mxu0 %v137
    %248 = vmatprep.subr.mxu0 %v141
    %249 = vmatpush1.msra.mxu0 %v140
    %250 = vmatprep.subr.mxu0 %v144
    %251 = vmatpush1.msra.mxu0 %v143
    %252 = vmatprep.subr.mxu0 0.0
    %253 = vmatpush1.msra.mxu0 0.0
    %254 = vmatprep.subr.mxu0 0.0
    %255 = vmatpush1.msra.mxu0 0.0
    %256 = vmatprep.subr.mxu0 0.0
    %257 = vmatpush1.msra.mxu0 0.0
    %258 = vmatprep.subr.mxu0 0.0
    %259 = vmatpush1.msra.mxu0 0.0
    %260 = vmatprep.subr.mxu0 0.0
    %261 = vmatpush1.msra.mxu0 0.0
    %262 = vmatprep.subr.mxu0 0.0
    %263 = vmatpush1.msra.mxu0 0.0
    %264 = vmatprep.subr.mxu0 0.0
    %265 = vmatpush1.msra.mxu0 0.0
    %266 = vmatprep.subr.mxu0 0.0
    %267 = vmatpush1.msra.mxu0 0.0
    %268 = vmatprep.subr.mxu0 0.0
    %269 = vmatpush1.msra.mxu0 0.0
    %270 = vmatprep.subr.mxu0 0.0
    %271 = vmatpush1.msra.mxu0 0.0
    %272 = vmatprep.subr.mxu0 0.0
    %273 = vmatpush1.msra.mxu0 0.0
    %274 = vmatprep.subr.mxu0 0.0
    %275 = vmatpush1.msra.mxu0 0.0
    %276 = vmatprep.subr.mxu0 0.0
    %277 = vmatpush1.msra.mxu0 0.0
    %278 = vmatprep.subr.mxu0 0.0
    %279 = vmatpush1.msra.mxu0 0.0
    %280 = vmatprep.subr.mxu0 0.0
    %281 = vmatpush1.msra.mxu0 0.0
    %282 = vmatprep.subr.mxu0 0.0
    %283 = vmatpush1.msra.mxu0 0.0
    %284 = vmatprep.mubr.f32.mxu0 0.0
    %285 = vmatmul.mubr.f32.gmra.mrb[0].mxu0 %v196
    %v286 = vpop.f32.mrb[0].mxu0
    %v287 = vadd.f32 %v208, %v286
    %v288 = vpop.f32.mrb[0].mxu0
    %v289 = vadd.f32 %v212, %v288
    %290 = vmatprep.mubr.f32.mxu0 0.0
    %291 = vmatmul.mubr.f32.gmra.mrb[0].mxu0 %v197
    %v292 = vpop.f32.mrb[0].mxu0
    %v293 = vadd.f32 %v208, %v292
    %v294 = vpop.f32.mrb[0].mxu0
    %v295 = vadd.f32 %v212, %v294
    %296 = vmatprep.mubr.f32.mxu0 0.0
    %297 = vmatmul.mubr.f32.gmra.mrb[0].mxu0 %v198
    %v298 = vpop.f32.mrb[0].mxu0
    %v299 = vadd.f32 %v208, %v298
    %v300 = vpop.f32.mrb[0].mxu0
    %v301 = vadd.f32 %v212, %v300
    %302 = vmatprep.mubr.f32.mxu0 0.0
    %303 = vmatmul.mubr.f32.gmra.mrb[0].mxu0 %v199
    %v304 = vpop.f32.mrb[0].mxu0
    %v305 = vadd.f32 %v208, %v304
    %v306 = vpop.f32.mrb[0].mxu0
    %v307 = vadd.f32 %v212, %v306
    %308 = vmatprep.mubr.f32.mxu0 0.0
    %309 = vmatmul.mubr.f32.gmra.mrb[0].mxu0 %v200
    %v310 = vpop.f32.mrb[0].mxu0
    %v311 = vadd.f32 %v208, %v310
    %v312 = vpop.f32.mrb[0].mxu0
    %v313 = vadd.f32 %v212, %v312
    %314 = vmatprep.mubr.f32.mxu0 0.0
    %315 = vmatmul.mubr.f32.gmra.mrb[0].mxu0 %v201
    %v316 = vpop.f32.mrb[0].mxu0
    %v317 = vadd.f32 %v208, %v316
    %v318 = vpop.f32.mrb[0].mxu0
    %v319 = vadd.f32 %v212, %v318
    %320 = vmatprep.mubr.f32.mxu0 0.0
    %321 = vmatmul.mubr.f32.gmra.mrb[0].mxu0 %v202
    %v322 = vpop.f32.mrb[0].mxu0
    %v323 = vadd.f32 %v208, %v322
    %v324 = vpop.f32.mrb[0].mxu0
    %v325 = vadd.f32 %v212, %v324
    %326 = vmatprep.mubr.f32.mxu0 0.0
    %327 = vmatmul.mubr.f32.gmra.mrb[0].mxu0 %v203
    %v328 = vpop.f32.mrb[0].mxu0
    %v329 = vadd.f32 %v208, %v328
    %v330 = vpop.f32.mrb[0].mxu0
    %v331 = vadd.f32 %v212, %v330
    %332 = vdwg.mxu0
    %333 = vmatprep.subr.mxu0 0.0
    %334 = vmatpush1.msra.mxu0 %v100
    %335 = vmatprep.subr.mxu0 0.0
    %336 = vmatpush1.msra.mxu0 %v103
    %337 = vmatprep.subr.mxu0 0.0
    %338 = vmatpush1.msra.mxu0 %v106
    %339 = vmatprep.subr.mxu0 0.0
    %340 = vmatpush1.msra.mxu0 %v109
    %341 = vmatprep.subr.mxu0 0.0
    %342 = vmatpush1.msra.mxu0 %v112
    %343 = vmatprep.subr.mxu0 0.0
    %344 = vmatpush1.msra.mxu0 %v115
    %345 = vmatprep.subr.mxu0 0.0
    %346 = vmatpush1.msra.mxu0 %v118
    %347 = vmatprep.subr.mxu0 0.0
    %348 = vmatpush1.msra.mxu0 %v121
    %349 = vmatprep.subr.mxu0 0.0
    %350 = vmatpush1.msra.mxu0 %v124
    %351 = vmatprep.subr.mxu0 0.0
    %352 = vmatpush1.msra.mxu0 %v127
    %353 = vmatprep.subr.mxu0 0.0
    %354 = vmatpush1.msra.mxu0 %v130
    %355 = vmatprep.subr.mxu0 0.0
    %356 = vmatpush1.msra.mxu0 %v133
    %357 = vmatprep.subr.mxu0 0.0
    %358 = vmatpush1.msra.mxu0 %v136
    %359 = vmatprep.subr.mxu0 0.0
    %360 = vmatpush1.msra.mxu0 %v139
    %361 = vmatprep.subr.mxu0 0.0
    %362 = vmatpush1.msra.mxu0 %v142
    %363 = vmatprep.subr.mxu0 0.0
    %364 = vmatpush1.msra.mxu0 %v145
    %365 = vmatprep.subr.mxu0 0.0
    %366 = vmatpush1.msra.mxu0 0.0
    %367 = vmatprep.subr.mxu0 0.0
    %368 = vmatpush1.msra.mxu0 0.0
    %369 = vmatprep.subr.mxu0 0.0
    %370 = vmatpush1.msra.mxu0 0.0
    %371 = vmatprep.subr.mxu0 0.0
    %372 = vmatpush1.msra.mxu0 0.0
    %373 = vmatprep.subr.mxu0 0.0
    %374 = vmatpush1.msra.mxu0 0.0
    %375 = vmatprep.subr.mxu0 0.0
    %376 = vmatpush1.msra.mxu0 0.0
    %377 = vmatprep.subr.mxu0 0.0
    %378 = vmatpush1.msra.mxu0 0.0
    %379 = vmatprep.subr.mxu0 0.0
    %380 = vmatpush1.msra.mxu0 0.0
    %381 = vmatprep.subr.mxu0 0.0
    %382 = vmatpush1.msra.mxu0 0.0
    %383 = vmatprep.subr.mxu0 0.0
    %384 = vmatpush1.msra.mxu0 0.0
    %385 = vmatprep.subr.mxu0 0.0
    %386 = vmatpush1.msra.mxu0 0.0
    %387 = vmatprep.subr.mxu0 0.0
    %388 = vmatpush1.msra.mxu0 0.0
    %389 = vmatprep.subr.mxu0 0.0
    %390 = vmatpush1.msra.mxu0 0.0
    %391 = vmatprep.subr.mxu0 0.0
    %392 = vmatpush1.msra.mxu0 0.0
    %393 = vmatprep.subr.mxu0 0.0
    %394 = vmatpush1.msra.mxu0 0.0
    %395 = vmatprep.subr.mxu0 0.0
    %396 = vmatpush1.msra.mxu0 0.0
    %397 = vmatprep.mubr.f32.mxu0 0.0
    %398 = vmatmul.mubr.f32.gmra.mrb[0].mxu0 %v196
    %v399 = vpop.f32.mrb[0].mxu0
    %v400 = vadd.f32 %v216, %v399
    %v401 = vpop.f32.mrb[0].mxu0
    %402 = vmatprep.mubr.f32.mxu0 0.0
    %403 = vmatmul.mubr.f32.gmra.mrb[0].mxu0 %v197
    %v404 = vpop.f32.mrb[0].mxu0
    %v405 = vadd.f32 %v216, %v404
    %v406 = vpop.f32.mrb[0].mxu0
    %407 = vmatprep.mubr.f32.mxu0 0.0
    %408 = vmatmul.mubr.f32.gmra.mrb[0].mxu0 %v198
    %v409 = vpop.f32.mrb[0].mxu0
    %v410 = vadd.f32 %v216, %v409
    %v411 = vpop.f32.mrb[0].mxu0
    %412 = vmatprep.mubr.f32.mxu0 0.0
    %413 = vmatmul.mubr.f32.gmra.mrb[0].mxu0 %v199
    %v414 = vpop.f32.mrb[0].mxu0
    %v415 = vadd.f32 %v216, %v414
    %v416 = vpop.f32.mrb[0].mxu0
    %417 = vmatprep.mubr.f32.mxu0 0.0
    %418 = vmatmul.mubr.f32.gmra.mrb[0].mxu0 %v200
    %v419 = vpop.f32.mrb[0].mxu0
    %v420 = vadd.f32 %v216, %v419
    %v421 = vpop.f32.mrb[0].mxu0
    %422 = vmatprep.mubr.f32.mxu0 0.0
    %423 = vmatmul.mubr.f32.gmra.mrb[0].mxu0 %v201
    %v424 = vpop.f32.mrb[0].mxu0
    %v425 = vadd.f32 %v216, %v424
    %v426 = vpop.f32.mrb[0].mxu0
    %427 = vmatprep.mubr.f32.mxu0 0.0
    %428 = vmatmul.mubr.f32.gmra.mrb[0].mxu0 %v202
    %v429 = vpop.f32.mrb[0].mxu0
    %v430 = vadd.f32 %v216, %v429
    %v431 = vpop.f32.mrb[0].mxu0
    %432 = vmatprep.mubr.f32.mxu0 0.0
    %433 = vmatmul.mubr.f32.gmra.mrb[0].mxu0 %v203
    %v434 = vpop.f32.mrb[0].mxu0
    %v435 = vadd.f32 %v216, %v434
    %v436 = vpop.f32.mrb[0].mxu0
    %437 = vdwg.mxu0
    %438 = vst [vmem:[#allocation2] sm:$0xff] %v287
    %439 = vst [vmem:[#allocation2 + $0x8] sm:$0xff] %v289
    %440 = vst [vmem:[#allocation2 + $0x10] sm:$0xff] %v400
    %441 = vst [vmem:[#allocation2 + $0x18] sm:$0xff] %v293
    %442 = vst [vmem:[#allocation2 + $0x20] sm:$0xff] %v295
    %443 = vst [vmem:[#allocation2 + $0x28] sm:$0xff] %v405
    %444 = vst [vmem:[#allocation2 + $0x30] sm:$0xff] %v299
    %445 = vst [vmem:[#allocation2 + $0x38] sm:$0xff] %v301
    %446 = vst [vmem:[#allocation2 + $0x40] sm:$0xff] %v410
    %447 = vst [vmem:[#allocation2 + $0x48] sm:$0xff] %v305
    %448 = vst [vmem:[#allocation2 + $0x50] sm:$0xff] %v307
    %449 = vst [vmem:[#allocation2 + $0x58] sm:$0xff] %v415
    %450 = vst [vmem:[#allocation2 + $0x60] sm:$0xff] %v311
    %451 = vst [vmem:[#allocation2 + $0x68] sm:$0xff] %v313
    %452 = vst [vmem:[#allocation2 + $0x70] sm:$0xff] %v420
    %453 = vst [vmem:[#allocation2 + $0x78] sm:$0xff] %v317
    %454 = vst [vmem:[#allocation2 + $0x80] sm:$0xff] %v319
    %455 = vst [vmem:[#allocation2 + $0x88] sm:$0xff] %v425
    %456 = vst [vmem:[#allocation2 + $0x90] sm:$0xff] %v323
    %457 = vst [vmem:[#allocation2 + $0x98] sm:$0xff] %v325
    %458 = vst [vmem:[#allocation2 + $0xa0] sm:$0xff] %v430
    %459 = vst [vmem:[#allocation2 + $0xa8] sm:$0xff] %v329
    %460 = vst [vmem:[#allocation2 + $0xb0] sm:$0xff] %v331
    %461 = vst [vmem:[#allocation2 + $0xb8] sm:$0xff] %v435
    %v463 = vlaneseq
    %v464 = vshrl.u32 %v463, 7
    %v465 = vsub.s32 0, %v464
    %v466 = vrot.slane %v195, %v465
    %v468 = vld [vmem:[%s1] sm:$0xff]
    %v469 = vld [vmem:[#allocation2] sm:$0xff]
    %v470 = vld [vmem:[#allocation2 + $0x8] sm:$0xff]
    %v471 = vld [vmem:[#allocation2 + $0x10] sm:$0xff]
    %472 = vmatprep.subr.mxu0 %v147
    %473 = vmatpush1.msra.mxu0 %v146
    %474 = vmatprep.subr.mxu0 %v150
    %475 = vmatpush1.msra.mxu0 %v149
    %476 = vmatprep.subr.mxu0 %v153
    %477 = vmatpush1.msra.mxu0 %v152
    %478 = vmatprep.subr.mxu0 %v156
    %479 = vmatpush1.msra.mxu0 %v155
    %480 = vmatprep.subr.mxu0 %v159
    %481 = vmatpush1.msra.mxu0 %v158
    %482 = vmatprep.subr.mxu0 %v162
    %483 = vmatpush1.msra.mxu0 %v161
    %484 = vmatprep.subr.mxu0 %v165
    %485 = vmatpush1.msra.mxu0 %v164
    %486 = vmatprep.subr.mxu0 %v168
    %487 = vmatpush1.msra.mxu0 %v167
    %488 = vmatprep.subr.mxu0 %v171
    %489 = vmatpush1.msra.mxu0 %v170
    %490 = vmatprep.subr.mxu0 %v174
    %491 = vmatpush1.msra.mxu0 %v173
    %492 = vmatprep.subr.mxu0 %v177
    %493 = vmatpush1.msra.mxu0 %v176
    %494 = vmatprep.subr.mxu0 %v180
    %495 = vmatpush1.msra.mxu0 %v179
    %496 = vmatprep.subr.mxu0 %v183
    %497 = vmatpush1.msra.mxu0 %v182
    %498 = vmatprep.subr.mxu0 %v186
    %499 = vmatpush1.msra.mxu0 %v185
    %500 = vmatprep.subr.mxu0 %v189
    %501 = vmatpush1.msra.mxu0 %v188
    %502 = vmatprep.subr.mxu0 %v192
    %503 = vmatpush1.msra.mxu0 %v191
    %504 = vmatprep.subr.mxu0 0.0
    %505 = vmatpush1.msra.mxu0 0.0
    %506 = vmatprep.subr.mxu0 0.0
    %507 = vmatpush1.msra.mxu0 0.0
    %508 = vmatprep.subr.mxu0 0.0
    %509 = vmatpush1.msra.mxu0 0.0
    %510 = vmatprep.subr.mxu0 0.0
    %511 = vmatpush1.msra.mxu0 0.0
    %512 = vmatprep.subr.mxu0 0.0
    %513 = vmatpush1.msra.mxu0 0.0
    %514 = vmatprep.subr.mxu0 0.0
    %515 = vmatpush1.msra.mxu0 0.0
    %516 = vmatprep.subr.mxu0 0.0
    %517 = vmatpush1.msra.mxu0 0.0
    %518 = vmatprep.subr.mxu0 0.0
    %519 = vmatpush1.msra.mxu0 0.0
    %520 = vmatprep.subr.mxu0 0.0
    %521 = vmatpush1.msra.mxu0 0.0
    %522 = vmatprep.subr.mxu0 0.0
    %523 = vmatpush1.msra.mxu0 0.0
    %524 = vmatprep.subr.mxu0 0.0
    %525 = vmatpush1.msra.mxu0 0.0
    %526 = vmatprep.subr.mxu0 0.0
    %527 = vmatpush1.msra.mxu0 0.0
    %528 = vmatprep.subr.mxu0 0.0
    %529 = vmatpush1.msra.mxu0 0.0
    %530 = vmatprep.subr.mxu0 0.0
    %531 = vmatpush1.msra.mxu0 0.0
    %532 = vmatprep.subr.mxu0 0.0
    %533 = vmatpush1.msra.mxu0 0.0
    %534 = vmatprep.subr.mxu0 0.0
    %535 = vmatpush1.msra.mxu0 0.0
    %536 = vmatprep.mubr.f32.mxu0 0.0
    %537 = vmatmul.mubr.f32.gmra.mrb[0].mxu0 %v468
    %v538 = vpop.f32.mrb[0].mxu0
    %v539 = vadd.f32 0.0, %v538
    %v540 = vpop.f32.mrb[0].mxu0
    %v541 = vadd.f32 0.0, %v540
    %542 = vdwg.mxu0
    %543 = vmatprep.subr.mxu0 0.0
    %544 = vmatpush1.msra.mxu0 %v148
    %545 = vmatprep.subr.mxu0 0.0
    %546 = vmatpush1.msra.mxu0 %v151
    %547 = vmatprep.subr.mxu0 0.0
    %548 = vmatpush1.msra.mxu0 %v154
    %549 = vmatprep.subr.mxu0 0.0
    %550 = vmatpush1.msra.mxu0 %v157
    %551 = vmatprep.subr.mxu0 0.0
    %552 = vmatpush1.msra.mxu0 %v160
    %553 = vmatprep.subr.mxu0 0.0
    %554 = vmatpush1.msra.mxu0 %v163
    %555 = vmatprep.subr.mxu0 0.0
    %556 = vmatpush1.msra.mxu0 %v166
    %557 = vmatprep.subr.mxu0 0.0
    %558 = vmatpush1.msra.mxu0 %v169
    %559 = vmatprep.subr.mxu0 0.0
    %560 = vmatpush1.msra.mxu0 %v172
    %561 = vmatprep.subr.mxu0 0.0
    %562 = vmatpush1.msra.mxu0 %v175
    %563 = vmatprep.subr.mxu0 0.0
    %564 = vmatpush1.msra.mxu0 %v178
    %565 = vmatprep.subr.mxu0 0.0
    %566 = vmatpush1.msra.mxu0 %v181
    %567 = vmatprep.subr.mxu0 0.0
    %568 = vmatpush1.msra.mxu0 %v184
    %569 = vmatprep.subr.mxu0 0.0
    %570 = vmatpush1.msra.mxu0 %v187
    %571 = vmatprep.subr.mxu0 0.0
    %572 = vmatpush1.msra.mxu0 %v190
    %573 = vmatprep.subr.mxu0 0.0
    %574 = vmatpush1.msra.mxu0 %v193
    %575 = vmatprep.subr.mxu0 0.0
    %576 = vmatpush1.msra.mxu0 0.0
    %577 = vmatprep.subr.mxu0 0.0
    %578 = vmatpush1.msra.mxu0 0.0
    %579 = vmatprep.subr.mxu0 0.0
    %580 = vmatpush1.msra.mxu0 0.0
    %581 = vmatprep.subr.mxu0 0.0
    %582 = vmatpush1.msra.mxu0 0.0
    %583 = vmatprep.subr.mxu0 0.0
    %584 = vmatpush1.msra.mxu0 0.0
    %585 = vmatprep.subr.mxu0 0.0
    %586 = vmatpush1.msra.mxu0 0.0
    %587 = vmatprep.subr.mxu0 0.0
    %588 = vmatpush1.msra.mxu0 0.0
    %589 = vmatprep.subr.mxu0 0.0
    %590 = vmatpush1.msra.mxu0 0.0
    %591 = vmatprep.subr.mxu0 0.0
    %592 = vmatpush1.msra.mxu0 0.0
    %593 = vmatprep.subr.mxu0 0.0
    %594 = vmatpush1.msra.mxu0 0.0
    %595 = vmatprep.subr.mxu0 0.0
    %596 = vmatpush1.msra.mxu0 0.0
    %597 = vmatprep.subr.mxu0 0.0
    %598 = vmatpush1.msra.mxu0 0.0
    %599 = vmatprep.subr.mxu0 0.0
    %600 = vmatpush1.msra.mxu0 0.0
    %601 = vmatprep.subr.mxu0 0.0
    %602 = vmatpush1.msra.mxu0 0.0
    %603 = vmatprep.subr.mxu0 0.0
    %604 = vmatpush1.msra.mxu0 0.0
    %605 = vmatprep.subr.mxu0 0.0
    %606 = vmatpush1.msra.mxu0 0.0
    %607 = vmatprep.mubr.f32.mxu0 0.0
    %608 = vmatmul.mubr.f32.gmra.mrb[0].mxu0 %v468
    %v609 = vpop.f32.mrb[0].mxu0
    %v610 = vadd.f32 0.0, %v609
    %v611 = vpop.f32.mrb[0].mxu0
    %612 = vdwg.mxu0
    %v613 = vadd.f32 %v469, %v539
    %v614 = vxor.u32 %v613, 2147483648
    %v615 = vmul.f32 %v614, 1.442695
    %v616 = vpow.pop %v615
    %v617 = vadd.f32 %v616, 1.0
    %v618 = vrcp.pop %v617
    %v619 = vmul.f32 1.0, %v618
    %v620 = vadd.f32 %v470, %v541
    %v621 = vxor.u32 %v620, 2147483648
    %v622 = vmul.f32 %v621, 1.442695
    %v623 = vpow.pop %v622
    %v624 = vadd.f32 %v623, 1.0
    %v625 = vrcp.pop %v624
    %v626 = vmul.f32 1.0, %v625
    %v627 = vadd.f32 %v610, %v466
    %v628 = vmul.f32 %v619, %v627
    %v629 = vadd.f32 %v471, %v628
    %v630 = vtanh.pop %v629
    %v631 = vsub.f32 %v468, %v630
    %v632 = vmul.f32 %v626, %v631
    %v633 = vadd.f32 %v630, %v632
    %634 = vst [vmem:[#allocation3] sm:$0xff] %v633
    %s635 = scalar_lea.vmem [#allocation2], 24
    %v636 = vld [vmem:[%s635] sm:$0xff]
    %v637 = vld [vmem:[%s635 + $0x8] sm:$0xff]
    %v638 = vld [vmem:[%s635 + $0x10] sm:$0xff]
    %639 = vmatprep.subr.mxu0 %v147
    %640 = vmatpush1.msra.mxu0 %v146
    %641 = vmatprep.subr.mxu0 %v150
    %642 = vmatpush1.msra.mxu0 %v149
    %643 = vmatprep.subr.mxu0 %v153
    %644 = vmatpush1.msra.mxu0 %v152
    %645 = vmatprep.subr.mxu0 %v156
    %646 = vmatpush1.msra.mxu0 %v155
    %647 = vmatprep.subr.mxu0 %v159
    %648 = vmatpush1.msra.mxu0 %v158
    %649 = vmatprep.subr.mxu0 %v162
    %650 = vmatpush1.msra.mxu0 %v161
    %651 = vmatprep.subr.mxu0 %v165
    %652 = vmatpush1.msra.mxu0 %v164
    %653 = vmatprep.subr.mxu0 %v168
    %654 = vmatpush1.msra.mxu0 %v167
    %655 = vmatprep.subr.mxu0 %v171
    %656 = vmatpush1.msra.mxu0 %v170
    %657 = vmatprep.subr.mxu0 %v174
    %658 = vmatpush1.msra.mxu0 %v173
    %659 = vmatprep.subr.mxu0 %v177
    %660 = vmatpush1.msra.mxu0 %v176
    %661 = vmatprep.subr.mxu0 %v180
    %662 = vmatpush1.msra.mxu0 %v179
    %663 = vmatprep.subr.mxu0 %v183
    %664 = vmatpush1.msra.mxu0 %v182
    %665 = vmatprep.subr.mxu0 %v186
    %666 = vmatpush1.msra.mxu0 %v185
    %667 = vmatprep.subr.mxu0 %v189
    %668 = vmatpush1.msra.mxu0 %v188
    %669 = vmatprep.subr.mxu0 %v192
    %670 = vmatpush1.msra.mxu0 %v191
    %671 = vmatprep.subr.mxu0 0.0
    %672 = vmatpush1.msra.mxu0 0.0
    %673 = vmatprep.subr.mxu0 0.0
    %674 = vmatpush1.msra.mxu0 0.0
    %675 = vmatprep.subr.mxu0 0.0
    %676 = vmatpush1.msra.mxu0 0.0
    %677 = vmatprep.subr.mxu0 0.0
    %678 = vmatpush1.msra.mxu0 0.0
    %679 = vmatprep.subr.mxu0 0.0
    %680 = vmatpush1.msra.mxu0 0.0
    %681 = vmatprep.subr.mxu0 0.0
    %682 = vmatpush1.msra.mxu0 0.0
    %683 = vmatprep.subr.mxu0 0.0
    %684 = vmatpush1.msra.mxu0 0.0
    %685 = vmatprep.subr.mxu0 0.0
    %686 = vmatpush1.msra.mxu0 0.0
    %687 = vmatprep.subr.mxu0 0.0
    %688 = vmatpush1.msra.mxu0 0.0
    %689 = vmatprep.subr.mxu0 0.0
    %690 = vmatpush1.msra.mxu0 0.0
    %691 = vmatprep.subr.mxu0 0.0
    %692 = vmatpush1.msra.mxu0 0.0
    %693 = vmatprep.subr.mxu0 0.0
    %694 = vmatpush1.msra.mxu0 0.0
    %695 = vmatprep.subr.mxu0 0.0
    %696 = vmatpush1.msra.mxu0 0.0
    %697 = vmatprep.subr.mxu0 0.0
    %698 = vmatpush1.msra.mxu0 0.0
    %699 = vmatprep.subr.mxu0 0.0
    %700 = vmatpush1.msra.mxu0 0.0
    %701 = vmatprep.subr.mxu0 0.0
    %702 = vmatpush1.msra.mxu0 0.0
    %703 = vmatprep.mubr.f32.mxu0 0.0
    %704 = vmatmul.mubr.f32.gmra.mrb[0].mxu0 %v633
    %v705 = vpop.f32.mrb[0].mxu0
    %v706 = vadd.f32 0.0, %v705
    %v707 = vpop.f32.mrb[0].mxu0
    %v708 = vadd.f32 0.0, %v707
    %709 = vdwg.mxu0
    %710 = vmatprep.subr.mxu0 0.0
    %711 = vmatpush1.msra.mxu0 %v148
    %712 = vmatprep.subr.mxu0 0.0
    %713 = vmatpush1.msra.mxu0 %v151
    %714 = vmatprep.subr.mxu0 0.0
    %715 = vmatpush1.msra.mxu0 %v154
    %716 = vmatprep.subr.mxu0 0.0
    %717 = vmatpush1.msra.mxu0 %v157
    %718 = vmatprep.subr.mxu0 0.0
    %719 = vmatpush1.msra.mxu0 %v160
    %720 = vmatprep.subr.mxu0 0.0
    %721 = vmatpush1.msra.mxu0 %v163
    %722 = vmatprep.subr.mxu0 0.0
    %723 = vmatpush1.msra.mxu0 %v166
    %724 = vmatprep.subr.mxu0 0.0
    %725 = vmatpush1.msra.mxu0 %v169
    %726 = vmatprep.subr.mxu0 0.0
    %727 = vmatpush1.msra.mxu0 %v172
    %728 = vmatprep.subr.mxu0 0.0
    %729 = vmatpush1.msra.mxu0 %v175
    %730 = vmatprep.subr.mxu0 0.0
    %731 = vmatpush1.msra.mxu0 %v178
    %732 = vmatprep.subr.mxu0 0.0
    %733 = vmatpush1.msra.mxu0 %v181
    %734 = vmatprep.subr.mxu0 0.0
    %735 = vmatpush1.msra.mxu0 %v184
    %736 = vmatprep.subr.mxu0 0.0
    %737 = vmatpush1.msra.mxu0 %v187
    %738 = vmatprep.subr.mxu0 0.0
    %739 = vmatpush1.msra.mxu0 %v190
    %740 = vmatprep.subr.mxu0 0.0
    %741 = vmatpush1.msra.mxu0 %v193
    %742 = vmatprep.subr.mxu0 0.0
    %743 = vmatpush1.msra.mxu0 0.0
    %744 = vmatprep.subr.mxu0 0.0
    %745 = vmatpush1.msra.mxu0 0.0
    %746 = vmatprep.subr.mxu0 0.0
    %747 = vmatpush1.msra.mxu0 0.0
    %748 = vmatprep.subr.mxu0 0.0
    %749 = vmatpush1.msra.mxu0 0.0
    %750 = vmatprep.subr.mxu0 0.0
    %751 = vmatpush1.msra.mxu0 0.0
    %752 = vmatprep.subr.mxu0 0.0
    %753 = vmatpush1.msra.mxu0 0.0
    %754 = vmatprep.subr.mxu0 0.0
    %755 = vmatpush1.msra.mxu0 0.0
    %756 = vmatprep.subr.mxu0 0.0
    %757 = vmatpush1.msra.mxu0 0.0
    %758 = vmatprep.subr.mxu0 0.0
    %759 = vmatpush1.msra.mxu0 0.0
    %760 = vmatprep.subr.mxu0 0.0
    %761 = vmatpush1.msra.mxu0 0.0
    %762 = vmatprep.subr.mxu0 0.0
    %763 = vmatpush1.msra.mxu0 0.0
    %764 = vmatprep.subr.mxu0 0.0
    %765 = vmatpush1.msra.mxu0 0.0
    %766 = vmatprep.subr.mxu0 0.0
    %767 = vmatpush1.msra.mxu0 0.0
    %768 = vmatprep.subr.mxu0 0.0
    %769 = vmatpush1.msra.mxu0 0.0
    %770 = vmatprep.subr.mxu0 0.0
    %771 = vmatpush1.msra.mxu0 0.0
    %772 = vmatprep.subr.mxu0 0.0
    %773 = vmatpush1.msra.mxu0 0.0
    %774 = vmatprep.mubr.f32.mxu0 0.0
    %775 = vmatmul.mubr.f32.gmra.mrb[0].mxu0 %v633
    %v776 = vpop.f32.mrb[0].mxu0
    %v777 = vadd.f32 0.0, %v776
    %v778 = vpop.f32.mrb[0].mxu0
    %779 = vdwg.mxu0
    %v780 = vadd.f32 %v636, %v706
    %v781 = vxor.u32 %v780, 2147483648
    %v782 = vmul.f32 %v781, 1.442695
    %v783 = vpow.pop %v782
    %v784 = vadd.f32 %v783, 1.0
    %v785 = vrcp.pop %v784
    %v786 = vmul.f32 1.0, %v785
    %v787 = vadd.f32 %v637, %v708
    %v788 = vxor.u32 %v787, 2147483648
    %v789 = vmul.f32 %v788, 1.442695
    %v790 = vpow.pop %v789
    %v791 = vadd.f32 %v790, 1.0
    %v792 = vrcp.pop %v791
    %v793 = vmul.f32 1.0, %v792
    %v794 = vadd.f32 %v777, %v466
    %v795 = vmul.f32 %v786, %v794
    %v796 = vadd.f32 %v638, %v795
    %v797 = vtanh.pop %v796
    %v798 = vsub.f32 %v633, %v797
    %v799 = vmul.f32 %v793, %v798
    %v800 = vadd.f32 %v797, %v799
    %s801 = scalar_lea.vmem [#allocation3], 8
    %802 = vst [vmem:[%s801] sm:$0xff] %v800
    %s803 = scalar_lea.vmem [#allocation2], 48
    %v804 = vld [vmem:[%s803] sm:$0xff]
    %v805 = vld [vmem:[%s803 + $0x8] sm:$0xff]
    %v806 = vld [vmem:[%s803 + $0x10] sm:$0xff]
    %807 = vmatprep.subr.mxu0 %v147
    %808 = vmatpush1.msra.mxu0 %v146
    %809 = vmatprep.subr.mxu0 %v150
    %810 = vmatpush1.msra.mxu0 %v149
    %811 = vmatprep.subr.mxu0 %v153
    %812 = vmatpush1.msra.mxu0 %v152
    %813 = vmatprep.subr.mxu0 %v156
    %814 = vmatpush1.msra.mxu0 %v155
    %815 = vmatprep.subr.mxu0 %v159
    %816 = vmatpush1.msra.mxu0 %v158
    %817 = vmatprep.subr.mxu0 %v162
    %818 = vmatpush1.msra.mxu0 %v161
    %819 = vmatprep.subr.mxu0 %v165
    %820 = vmatpush1.msra.mxu0 %v164
    %821 = vmatprep.subr.mxu0 %v168
    %822 = vmatpush1.msra.mxu0 %v167
    %823 = vmatprep.subr.mxu0 %v171
    %824 = vmatpush1.msra.mxu0 %v170
    %825 = vmatprep.subr.mxu0 %v174
    %826 = vmatpush1.msra.mxu0 %v173
    %827 = vmatprep.subr.mxu0 %v177
    %828 = vmatpush1.msra.mxu0 %v176
    %829 = vmatprep.subr.mxu0 %v180
    %830 = vmatpush1.msra.mxu0 %v179
    %831 = vmatprep.subr.mxu0 %v183
    %832 = vmatpush1.msra.mxu0 %v182
    %833 = vmatprep.subr.mxu0 %v186
    %834 = vmatpush1.msra.mxu0 %v185
    %835 = vmatprep.subr.mxu0 %v189
    %836 = vmatpush1.msra.mxu0 %v188
    %837 = vmatprep.subr.mxu0 %v192
    %838 = vmatpush1.msra.mxu0 %v191
    %839 = vmatprep.subr.mxu0 0.0
    %840 = vmatpush1.msra.mxu0 0.0
    %841 = vmatprep.subr.mxu0 0.0
    %842 = vmatpush1.msra.mxu0 0.0
    %843 = vmatprep.subr.mxu0 0.0
    %844 = vmatpush1.msra.mxu0 0.0
    %845 = vmatprep.subr.mxu0 0.0
    %846 = vmatpush1.msra.mxu0 0.0
    %847 = vmatprep.subr.mxu0 0.0
    %848 = vmatpush1.msra.mxu0 0.0
    %849 = vmatprep.subr.mxu0 0.0
    %850 = vmatpush1.msra.mxu0 0.0
    %851 = vmatprep.subr.mxu0 0.0
    %852 = vmatpush1.msra.mxu0 0.0
    %853 = vmatprep.subr.mxu0 0.0
    %854 = vmatpush1.msra.mxu0 0.0
    %855 = vmatprep.subr.mxu0 0.0
    %856 = vmatpush1.msra.mxu0 0.0
    %857 = vmatprep.subr.mxu0 0.0
    %858 = vmatpush1.msra.mxu0 0.0
    %859 = vmatprep.subr.mxu0 0.0
    %860 = vmatpush1.msra.mxu0 0.0
    %861 = vmatprep.subr.mxu0 0.0
    %862 = vmatpush1.msra.mxu0 0.0
    %863 = vmatprep.subr.mxu0 0.0
    %864 = vmatpush1.msra.mxu0 0.0
    %865 = vmatprep.subr.mxu0 0.0
    %866 = vmatpush1.msra.mxu0 0.0
    %867 = vmatprep.subr.mxu0 0.0
    %868 = vmatpush1.msra.mxu0 0.0
    %869 = vmatprep.subr.mxu0 0.0
    %870 = vmatpush1.msra.mxu0 0.0
    %871 = vmatprep.mubr.f32.mxu0 0.0
    %872 = vmatmul.mubr.f32.gmra.mrb[0].mxu0 %v800
    %v873 = vpop.f32.mrb[0].mxu0
    %v874 = vadd.f32 0.0, %v873
    %v875 = vpop.f32.mrb[0].mxu0
    %v876 = vadd.f32 0.0, %v875
    %877 = vdwg.mxu0
    %878 = vmatprep.subr.mxu0 0.0
    %879 = vmatpush1.msra.mxu0 %v148
    %880 = vmatprep.subr.mxu0 0.0
    %881 = vmatpush1.msra.mxu0 %v151
    %882 = vmatprep.subr.mxu0 0.0
    %883 = vmatpush1.msra.mxu0 %v154
    %884 = vmatprep.subr.mxu0 0.0
    %885 = vmatpush1.msra.mxu0 %v157
    %886 = vmatprep.subr.mxu0 0.0
    %887 = vmatpush1.msra.mxu0 %v160
    %888 = vmatprep.subr.mxu0 0.0
    %889 = vmatpush1.msra.mxu0 %v163
    %890 = vmatprep.subr.mxu0 0.0
    %891 = vmatpush1.msra.mxu0 %v166
    %892 = vmatprep.subr.mxu0 0.0
    %893 = vmatpush1.msra.mxu0 %v169
    %894 = vmatprep.subr.mxu0 0.0
    %895 = vmatpush1.msra.mxu0 %v172
    %896 = vmatprep.subr.mxu0 0.0
    %897 = vmatpush1.msra.mxu0 %v175
    %898 = vmatprep.subr.mxu0 0.0
    %899 = vmatpush1.msra.mxu0 %v178
    %900 = vmatprep.subr.mxu0 0.0
    %901 = vmatpush1.msra.mxu0 %v181
    %902 = vmatprep.subr.mxu0 0.0
    %903 = vmatpush1.msra.mxu0 %v184
    %904 = vmatprep.subr.mxu0 0.0
    %905 = vmatpush1.msra.mxu0 %v187
    %906 = vmatprep.subr.mxu0 0.0
    %907 = vmatpush1.msra.mxu0 %v190
    %908 = vmatprep.subr.mxu0 0.0
    %909 = vmatpush1.msra.mxu0 %v193
    %910 = vmatprep.subr.mxu0 0.0
    %911 = vmatpush1.msra.mxu0 0.0
    %912 = vmatprep.subr.mxu0 0.0
    %913 = vmatpush1.msra.mxu0 0.0
    %914 = vmatprep.subr.mxu0 0.0
    %915 = vmatpush1.msra.mxu0 0.0
    %916 = vmatprep.subr.mxu0 0.0
    %917 = vmatpush1.msra.mxu0 0.0
    %918 = vmatprep.subr.mxu0 0.0
    %919 = vmatpush1.msra.mxu0 0.0
    %920 = vmatprep.subr.mxu0 0.0
    %921 = vmatpush1.msra.mxu0 0.0
    %922 = vmatprep.subr.mxu0 0.0
    %923 = vmatpush1.msra.mxu0 0.0
    %924 = vmatprep.subr.mxu0 0.0
    %925 = vmatpush1.msra.mxu0 0.0
    %926 = vmatprep.subr.mxu0 0.0
    %927 = vmatpush1.msra.mxu0 0.0
    %928 = vmatprep.subr.mxu0 0.0
    %929 = vmatpush1.msra.mxu0 0.0
    %930 = vmatprep.subr.mxu0 0.0
    %931 = vmatpush1.msra.mxu0 0.0
    %932 = vmatprep.subr.mxu0 0.0
    %933 = vmatpush1.msra.mxu0 0.0
    %934 = vmatprep.subr.mxu0 0.0
    %935 = vmatpush1.msra.mxu0 0.0
    %936 = vmatprep.subr.mxu0 0.0
    %937 = vmatpush1.msra.mxu0 0.0
    %938 = vmatprep.subr.mxu0 0.0
    %939 = vmatpush1.msra.mxu0 0.0
    %940 = vmatprep.subr.mxu0 0.0
    %941 = vmatpush1.msra.mxu0 0.0
    %942 = vmatprep.mubr.f32.mxu0 0.0
    %943 = vmatmul.mubr.f32.gmra.mrb[0].mxu0 %v800
    %v944 = vpop.f32.mrb[0].mxu0
    %v945 = vadd.f32 0.0, %v944
    %v946 = vpop.f32.mrb[0].mxu0
    %947 = vdwg.mxu0
    %v948 = vadd.f32 %v804, %v874
    %v949 = vxor.u32 %v948, 2147483648
    %v950 = vmul.f32 %v949, 1.442695
    %v951 = vpow.pop %v950
    %v952 = vadd.f32 %v951, 1.0
    %v953 = vrcp.pop %v952
    %v954 = vmul.f32 1.0, %v953
    %v955 = vadd.f32 %v805, %v876
    %v956 = vxor.u32 %v955, 2147483648
    %v957 = vmul.f32 %v956, 1.442695
    %v958 = vpow.pop %v957
    %v959 = vadd.f32 %v958, 1.0
    %v960 = vrcp.pop %v959
    %v961 = vmul.f32 1.0, %v960
    %v962 = vadd.f32 %v945, %v466
    %v963 = vmul.f32 %v954, %v962
    %v964 = vadd.f32 %v806, %v963
    %v965 = vtanh.pop %v964
    %v966 = vsub.f32 %v800, %v965
    %v967 = vmul.f32 %v961, %v966
    %v968 = vadd.f32 %v965, %v967
    %s969 = scalar_lea.vmem [#allocation3], 16
    %970 = vst [vmem:[%s969] sm:$0xff] %v968
    %s971 = scalar_lea.vmem [#allocation2], 72
    %v972 = vld [vmem:[%s971] sm:$0xff]
    %v973 = vld [vmem:[%s971 + $0x8] sm:$0xff]
    %v974 = vld [vmem:[%s971 + $0x10] sm:$0xff]
    %975 = vmatprep.subr.mxu0 %v147
    %976 = vmatpush1.msra.mxu0 %v146
    %977 = vmatprep.subr.mxu0 %v150
    %978 = vmatpush1.msra.mxu0 %v149
    %979 = vmatprep.subr.mxu0 %v153
    %980 = vmatpush1.msra.mxu0 %v152
    %981 = vmatprep.subr.mxu0 %v156
    %982 = vmatpush1.msra.mxu0 %v155
    %983 = vmatprep.subr.mxu0 %v159
    %984 = vmatpush1.msra.mxu0 %v158
    %985 = vmatprep.subr.mxu0 %v162
    %986 = vmatpush1.msra.mxu0 %v161
    %987 = vmatprep.subr.mxu0 %v165
    %988 = vmatpush1.msra.mxu0 %v164
    %989 = vmatprep.subr.mxu0 %v168
    %990 = vmatpush1.msra.mxu0 %v167
    %991 = vmatprep.subr.mxu0 %v171
    %992 = vmatpush1.msra.mxu0 %v170
    %993 = vmatprep.subr.mxu0 %v174
    %994 = vmatpush1.msra.mxu0 %v173
    %995 = vmatprep.subr.mxu0 %v177
    %996 = vmatpush1.msra.mxu0 %v176
    %997 = vmatprep.subr.mxu0 %v180
    %998 = vmatpush1.msra.mxu0 %v179
    %999 = vmatprep.subr.mxu0 %v183
    %1000 = vmatpush1.msra.mxu0 %v182
    %1001 = vmatprep.subr.mxu0 %v186
    %1002 = vmatpush1.msra.mxu0 %v185
    %1003 = vmatprep.subr.mxu0 %v189
    %1004 = vmatpush1.msra.mxu0 %v188
    %1005 = vmatprep.subr.mxu0 %v192
    %1006 = vmatpush1.msra.mxu0 %v191
    %1007 = vmatprep.subr.mxu0 0.0
    %1008 = vmatpush1.msra.mxu0 0.0
    %1009 = vmatprep.subr.mxu0 0.0
    %1010 = vmatpush1.msra.mxu0 0.0
    %1011 = vmatprep.subr.mxu0 0.0
    %1012 = vmatpush1.msra.mxu0 0.0
    %1013 = vmatprep.subr.mxu0 0.0
    %1014 = vmatpush1.msra.mxu0 0.0
    %1015 = vmatprep.subr.mxu0 0.0
    %1016 = vmatpush1.msra.mxu0 0.0
    %1017 = vmatprep.subr.mxu0 0.0
    %1018 = vmatpush1.msra.mxu0 0.0
    %1019 = vmatprep.subr.mxu0 0.0
    %1020 = vmatpush1.msra.mxu0 0.0
    %1021 = vmatprep.subr.mxu0 0.0
    %1022 = vmatpush1.msra.mxu0 0.0
    %1023 = vmatprep.subr.mxu0 0.0
    %1024 = vmatpush1.msra.mxu0 0.0
    %1025 = vmatprep.subr.mxu0 0.0
    %1026 = vmatpush1.msra.mxu0 0.0
    %1027 = vmatprep.subr.mxu0 0.0
    %1028 = vmatpush1.msra.mxu0 0.0
    %1029 = vmatprep.subr.mxu0 0.0
    %1030 = vmatpush1.msra.mxu0 0.0
    %1031 = vmatprep.subr.mxu0 0.0
    %1032 = vmatpush1.msra.mxu0 0.0
    %1033 = vmatprep.subr.mxu0 0.0
    %1034 = vmatpush1.msra.mxu0 0.0
    %1035 = vmatprep.subr.mxu0 0.0
    %1036 = vmatpush1.msra.mxu0 0.0
    %1037 = vmatprep.subr.mxu0 0.0
    %1038 = vmatpush1.msra.mxu0 0.0
    %1039 = vmatprep.mubr.f32.mxu0 0.0
    %1040 = vmatmul.mubr.f32.gmra.mrb[0].mxu0 %v968
    %v1041 = vpop.f32.mrb[0].mxu0
    %v1042 = vadd.f32 0.0, %v1041
    %v1043 = vpop.f32.mrb[0].mxu0
    %v1044 = vadd.f32 0.0, %v1043
    %1045 = vdwg.mxu0
    %1046 = vmatprep.subr.mxu0 0.0
    %1047 = vmatpush1.msra.mxu0 %v148
    %1048 = vmatprep.subr.mxu0 0.0
    %1049 = vmatpush1.msra.mxu0 %v151
    %1050 = vmatprep.subr.mxu0 0.0
    %1051 = vmatpush1.msra.mxu0 %v154
    %1052 = vmatprep.subr.mxu0 0.0
    %1053 = vmatpush1.msra.mxu0 %v157
    %1054 = vmatprep.subr.mxu0 0.0
    %1055 = vmatpush1.msra.mxu0 %v160
    %1056 = vmatprep.subr.mxu0 0.0
    %1057 = vmatpush1.msra.mxu0 %v163
    %1058 = vmatprep.subr.mxu0 0.0
    %1059 = vmatpush1.msra.mxu0 %v166
    %1060 = vmatprep.subr.mxu0 0.0
    %1061 = vmatpush1.msra.mxu0 %v169
    %1062 = vmatprep.subr.mxu0 0.0
    %1063 = vmatpush1.msra.mxu0 %v172
    %1064 = vmatprep.subr.mxu0 0.0
    %1065 = vmatpush1.msra.mxu0 %v175
    %1066 = vmatprep.subr.mxu0 0.0
    %1067 = vmatpush1.msra.mxu0 %v178
    %1068 = vmatprep.subr.mxu0 0.0
    %1069 = vmatpush1.msra.mxu0 %v181
    %1070 = vmatprep.subr.mxu0 0.0
    %1071 = vmatpush1.msra.mxu0 %v184
    %1072 = vmatprep.subr.mxu0 0.0
    %1073 = vmatpush1.msra.mxu0 %v187
    %1074 = vmatprep.subr.mxu0 0.0
    %1075 = vmatpush1.msra.mxu0 %v190
    %1076 = vmatprep.subr.mxu0 0.0
    %1077 = vmatpush1.msra.mxu0 %v193
    %1078 = vmatprep.subr.mxu0 0.0
    %1079 = vmatpush1.msra.mxu0 0.0
    %1080 = vmatprep.subr.mxu0 0.0
    %1081 = vmatpush1.msra.mxu0 0.0
    %1082 = vmatprep.subr.mxu0 0.0
    %1083 = vmatpush1.msra.mxu0 0.0
    %1084 = vmatprep.subr.mxu0 0.0
    %1085 = vmatpush1.msra.mxu0 0.0
    %1086 = vmatprep.subr.mxu0 0.0
    %1087 = vmatpush1.msra.mxu0 0.0
    %1088 = vmatprep.subr.mxu0 0.0
    %1089 = vmatpush1.msra.mxu0 0.0
    %1090 = vmatprep.subr.mxu0 0.0
    %1091 = vmatpush1.msra.mxu0 0.0
    %1092 = vmatprep.subr.mxu0 0.0
    %1093 = vmatpush1.msra.mxu0 0.0
    %1094 = vmatprep.subr.mxu0 0.0
    %1095 = vmatpush1.msra.mxu0 0.0
    %1096 = vmatprep.subr.mxu0 0.0
    %1097 = vmatpush1.msra.mxu0 0.0
    %1098 = vmatprep.subr.mxu0 0.0
    %1099 = vmatpush1.msra.mxu0 0.0
    %1100 = vmatprep.subr.mxu0 0.0
    %1101 = vmatpush1.msra.mxu0 0.0
    %1102 = vmatprep.subr.mxu0 0.0
    %1103 = vmatpush1.msra.mxu0 0.0
    %1104 = vmatprep.subr.mxu0 0.0
    %1105 = vmatpush1.msra.mxu0 0.0
    %1106 = vmatprep.subr.mxu0 0.0
    %1107 = vmatpush1.msra.mxu0 0.0
    %1108 = vmatprep.subr.mxu0 0.0
    %1109 = vmatpush1.msra.mxu0 0.0
    %1110 = vmatprep.mubr.f32.mxu0 0.0
    %1111 = vmatmul.mubr.f32.gmra.mrb[0].mxu0 %v968
    %v1112 = vpop.f32.mrb[0].mxu0
    %v1113 = vadd.f32 0.0, %v1112
    %v1114 = vpop.f32.mrb[0].mxu0
    %1115 = vdwg.mxu0
    %v1116 = vadd.f32 %v972, %v1042
    %v1117 = vxor.u32 %v1116, 2147483648
    %v1118 = vmul.f32 %v1117, 1.442695
    %v1119 = vpow.pop %v1118
    %v1120 = vadd.f32 %v1119, 1.0
    %v1121 = vrcp.pop %v1120
    %v1122 = vmul.f32 1.0, %v1121
    %v1123 = vadd.f32 %v973, %v1044
    %v1124 = vxor.u32 %v1123, 2147483648
    %v1125 = vmul.f32 %v1124, 1.442695
    %v1126 = vpow.pop %v1125
    %v1127 = vadd.f32 %v1126, 1.0
    %v1128 = vrcp.pop %v1127
    %v1129 = vmul.f32 1.0, %v1128
    %v1130 = vadd.f32 %v1113, %v466
    %v1131 = vmul.f32 %v1122, %v1130
    %v1132 = vadd.f32 %v974, %v1131
    %v1133 = vtanh.pop %v1132
    %v1134 = vsub.f32 %v968, %v1133
    %v1135 = vmul.f32 %v1129, %v1134
    %v1136 = vadd.f32 %v1133, %v1135
    %s1137 = scalar_lea.vmem [#allocation3], 24
    %1138 = vst [vmem:[%s1137] sm:$0xff] %v1136
    %s1139 = scalar_lea.vmem [#allocation2], 96
    %v1140 = vld [vmem:[%s1139] sm:$0xff]
    %v1141 = vld [vmem:[%s1139 + $0x8] sm:$0xff]
    %v1142 = vld [vmem:[%s1139 + $0x10] sm:$0xff]
    %1143 = vmatprep.subr.mxu0 %v147
    %1144 = vmatpush1.msra.mxu0 %v146
    %1145 = vmatprep.subr.mxu0 %v150
    %1146 = vmatpush1.msra.mxu0 %v149
    %1147 = vmatprep.subr.mxu0 %v153
    %1148 = vmatpush1.msra.mxu0 %v152
    %1149 = vmatprep.subr.mxu0 %v156
    %1150 = vmatpush1.msra.mxu0 %v155
    %1151 = vmatprep.subr.mxu0 %v159
    %1152 = vmatpush1.msra.mxu0 %v158
    %1153 = vmatprep.subr.mxu0 %v162
    %1154 = vmatpush1.msra.mxu0 %v161
    %1155 = vmatprep.subr.mxu0 %v165
    %1156 = vmatpush1.msra.mxu0 %v164
    %1157 = vmatprep.subr.mxu0 %v168
    %1158 = vmatpush1.msra.mxu0 %v167
    %1159 = vmatprep.subr.mxu0 %v171
    %1160 = vmatpush1.msra.mxu0 %v170
    %1161 = vmatprep.subr.mxu0 %v174
    %1162 = vmatpush1.msra.mxu0 %v173
    %1163 = vmatprep.subr.mxu0 %v177
    %1164 = vmatpush1.msra.mxu0 %v176
    %1165 = vmatprep.subr.mxu0 %v180
    %1166 = vmatpush1.msra.mxu0 %v179
    %1167 = vmatprep.subr.mxu0 %v183
    %1168 = vmatpush1.msra.mxu0 %v182
    %1169 = vmatprep.subr.mxu0 %v186
    %1170 = vmatpush1.msra.mxu0 %v185
    %1171 = vmatprep.subr.mxu0 %v189
    %1172 = vmatpush1.msra.mxu0 %v188
    %1173 = vmatprep.subr.mxu0 %v192
    %1174 = vmatpush1.msra.mxu0 %v191
    %1175 = vmatprep.subr.mxu0 0.0
    %1176 = vmatpush1.msra.mxu0 0.0
    %1177 = vmatprep.subr.mxu0 0.0
    %1178 = vmatpush1.msra.mxu0 0.0
    %1179 = vmatprep.subr.mxu0 0.0
    %1180 = vmatpush1.msra.mxu0 0.0
    %1181 = vmatprep.subr.mxu0 0.0
    %1182 = vmatpush1.msra.mxu0 0.0
    %1183 = vmatprep.subr.mxu0 0.0
    %1184 = vmatpush1.msra.mxu0 0.0
    %1185 = vmatprep.subr.mxu0 0.0
    %1186 = vmatpush1.msra.mxu0 0.0
    %1187 = vmatprep.subr.mxu0 0.0
    %1188 = vmatpush1.msra.mxu0 0.0
    %1189 = vmatprep.subr.mxu0 0.0
    %1190 = vmatpush1.msra.mxu0 0.0
    %1191 = vmatprep.subr.mxu0 0.0
    %1192 = vmatpush1.msra.mxu0 0.0
    %1193 = vmatprep.subr.mxu0 0.0
    %1194 = vmatpush1.msra.mxu0 0.0
    %1195 = vmatprep.subr.mxu0 0.0
    %1196 = vmatpush1.msra.mxu0 0.0
    %1197 = vmatprep.subr.mxu0 0.0
    %1198 = vmatpush1.msra.mxu0 0.0
    %1199 = vmatprep.subr.mxu0 0.0
    %1200 = vmatpush1.msra.mxu0 0.0
    %1201 = vmatprep.subr.mxu0 0.0
    %1202 = vmatpush1.msra.mxu0 0.0
    %1203 = vmatprep.subr.mxu0 0.0
    %1204 = vmatpush1.msra.mxu0 0.0
    %1205 = vmatprep.subr.mxu0 0.0
    %1206 = vmatpush1.msra.mxu0 0.0
    %1207 = vmatprep.mubr.f32.mxu0 0.0
    %1208 = vmatmul.mubr.f32.gmra.mrb[0].mxu0 %v1136
    %v1209 = vpop.f32.mrb[0].mxu0
    %v1210 = vadd.f32 0.0, %v1209
    %v1211 = vpop.f32.mrb[0].mxu0
    %v1212 = vadd.f32 0.0, %v1211
    %1213 = vdwg.mxu0
    %1214 = vmatprep.subr.mxu0 0.0
    %1215 = vmatpush1.msra.mxu0 %v148
    %1216 = vmatprep.subr.mxu0 0.0
    %1217 = vmatpush1.msra.mxu0 %v151
    %1218 = vmatprep.subr.mxu0 0.0
    %1219 = vmatpush1.msra.mxu0 %v154
    %1220 = vmatprep.subr.mxu0 0.0
    %1221 = vmatpush1.msra.mxu0 %v157
    %1222 = vmatprep.subr.mxu0 0.0
    %1223 = vmatpush1.msra.mxu0 %v160
    %1224 = vmatprep.subr.mxu0 0.0
    %1225 = vmatpush1.msra.mxu0 %v163
    %1226 = vmatprep.subr.mxu0 0.0
    %1227 = vmatpush1.msra.mxu0 %v166
    %1228 = vmatprep.subr.mxu0 0.0
    %1229 = vmatpush1.msra.mxu0 %v169
    %1230 = vmatprep.subr.mxu0 0.0
    %1231 = vmatpush1.msra.mxu0 %v172
    %1232 = vmatprep.subr.mxu0 0.0
    %1233 = vmatpush1.msra.mxu0 %v175
    %1234 = vmatprep.subr.mxu0 0.0
    %1235 = vmatpush1.msra.mxu0 %v178
    %1236 = vmatprep.subr.mxu0 0.0
    %1237 = vmatpush1.msra.mxu0 %v181
    %1238 = vmatprep.subr.mxu0 0.0
    %1239 = vmatpush1.msra.mxu0 %v184
    %1240 = vmatprep.subr.mxu0 0.0
    %1241 = vmatpush1.msra.mxu0 %v187
    %1242 = vmatprep.subr.mxu0 0.0
    %1243 = vmatpush1.msra.mxu0 %v190
    %1244 = vmatprep.subr.mxu0 0.0
    %1245 = vmatpush1.msra.mxu0 %v193
    %1246 = vmatprep.subr.mxu0 0.0
    %1247 = vmatpush1.msra.mxu0 0.0
    %1248 = vmatprep.subr.mxu0 0.0
    %1249 = vmatpush1.msra.mxu0 0.0
    %1250 = vmatprep.subr.mxu0 0.0
    %1251 = vmatpush1.msra.mxu0 0.0
    %1252 = vmatprep.subr.mxu0 0.0
    %1253 = vmatpush1.msra.mxu0 0.0
    %1254 = vmatprep.subr.mxu0 0.0
    %1255 = vmatpush1.msra.mxu0 0.0
    %1256 = vmatprep.subr.mxu0 0.0
    %1257 = vmatpush1.msra.mxu0 0.0
    %1258 = vmatprep.subr.mxu0 0.0
    %1259 = vmatpush1.msra.mxu0 0.0
    %1260 = vmatprep.subr.mxu0 0.0
    %1261 = vmatpush1.msra.mxu0 0.0
    %1262 = vmatprep.subr.mxu0 0.0
    %1263 = vmatpush1.msra.mxu0 0.0
    %1264 = vmatprep.subr.mxu0 0.0
    %1265 = vmatpush1.msra.mxu0 0.0
    %1266 = vmatprep.subr.mxu0 0.0
    %1267 = vmatpush1.msra.mxu0 0.0
    %1268 = vmatprep.subr.mxu0 0.0
    %1269 = vmatpush1.msra.mxu0 0.0
    %1270 = vmatprep.subr.mxu0 0.0
    %1271 = vmatpush1.msra.mxu0 0.0
    %1272 = vmatprep.subr.mxu0 0.0
    %1273 = vmatpush1.msra.mxu0 0.0
    %1274 = vmatprep.subr.mxu0 0.0
    %1275 = vmatpush1.msra.mxu0 0.0
    %1276 = vmatprep.subr.mxu0 0.0
    %1277 = vmatpush1.msra.mxu0 0.0
    %1278 = vmatprep.mubr.f32.mxu0 0.0
    %1279 = vmatmul.mubr.f32.gmra.mrb[0].mxu0 %v1136
    %v1280 = vpop.f32.mrb[0].mxu0
    %v1281 = vadd.f32 0.0, %v1280
    %v1282 = vpop.f32.mrb[0].mxu0
    %1283 = vdwg.mxu0
    %v1284 = vadd.f32 %v1140, %v1210
    %v1285 = vxor.u32 %v1284, 2147483648
    %v1286 = vmul.f32 %v1285, 1.442695
    %v1287 = vpow.pop %v1286
    %v1288 = vadd.f32 %v1287, 1.0
    %v1289 = vrcp.pop %v1288
    %v1290 = vmul.f32 1.0, %v1289
    %v1291 = vadd.f32 %v1141, %v1212
    %v1292 = vxor.u32 %v1291, 2147483648
    %v1293 = vmul.f32 %v1292, 1.442695
    %v1294 = vpow.pop %v1293
    %v1295 = vadd.f32 %v1294, 1.0
    %v1296 = vrcp.pop %v1295
    %v1297 = vmul.f32 1.0, %v1296
    %v1298 = vadd.f32 %v1281, %v466
    %v1299 = vmul.f32 %v1290, %v1298
    %v1300 = vadd.f32 %v1142, %v1299
    %v1301 = vtanh.pop %v1300
    %v1302 = vsub.f32 %v1136, %v1301
    %v1303 = vmul.f32 %v1297, %v1302
    %v1304 = vadd.f32 %v1301, %v1303
    %s1305 = scalar_lea.vmem [#allocation3], 32
    %1306 = vst [vmem:[%s1305] sm:$0xff] %v1304
    %s1307 = scalar_lea.vmem [#allocation2], 120
    %v1308 = vld [vmem:[%s1307] sm:$0xff]
    %v1309 = vld [vmem:[%s1307 + $0x8] sm:$0xff]
    %v1310 = vld [vmem:[%s1307 + $0x10] sm:$0xff]
    %1311 = vmatprep.subr.mxu0 %v147
    %1312 = vmatpush1.msra.mxu0 %v146
    %1313 = vmatprep.subr.mxu0 %v150
    %1314 = vmatpush1.msra.mxu0 %v149
    %1315 = vmatprep.subr.mxu0 %v153
    %1316 = vmatpush1.msra.mxu0 %v152
    %1317 = vmatprep.subr.mxu0 %v156
    %1318 = vmatpush1.msra.mxu0 %v155
    %1319 = vmatprep.subr.mxu0 %v159
    %1320 = vmatpush1.msra.mxu0 %v158
    %1321 = vmatprep.subr.mxu0 %v162
    %1322 = vmatpush1.msra.mxu0 %v161
    %1323 = vmatprep.subr.mxu0 %v165
    %1324 = vmatpush1.msra.mxu0 %v164
    %1325 = vmatprep.subr.mxu0 %v168
    %1326 = vmatpush1.msra.mxu0 %v167
    %1327 = vmatprep.subr.mxu0 %v171
    %1328 = vmatpush1.msra.mxu0 %v170
    %1329 = vmatprep.subr.mxu0 %v174
    %1330 = vmatpush1.msra.mxu0 %v173
    %1331 = vmatprep.subr.mxu0 %v177
    %1332 = vmatpush1.msra.mxu0 %v176
    %1333 = vmatprep.subr.mxu0 %v180
    %1334 = vmatpush1.msra.mxu0 %v179
    %1335 = vmatprep.subr.mxu0 %v183
    %1336 = vmatpush1.msra.mxu0 %v182
    %1337 = vmatprep.subr.mxu0 %v186
    %1338 = vmatpush1.msra.mxu0 %v185
    %1339 = vmatprep.subr.mxu0 %v189
    %1340 = vmatpush1.msra.mxu0 %v188
    %1341 = vmatprep.subr.mxu0 %v192
    %1342 = vmatpush1.msra.mxu0 %v191
    %1343 = vmatprep.subr.mxu0 0.0
    %1344 = vmatpush1.msra.mxu0 0.0
    %1345 = vmatprep.subr.mxu0 0.0
    %1346 = vmatpush1.msra.mxu0 0.0
    %1347 = vmatprep.subr.mxu0 0.0
    %1348 = vmatpush1.msra.mxu0 0.0
    %1349 = vmatprep.subr.mxu0 0.0
    %1350 = vmatpush1.msra.mxu0 0.0
    %1351 = vmatprep.subr.mxu0 0.0
    %1352 = vmatpush1.msra.mxu0 0.0
    %1353 = vmatprep.subr.mxu0 0.0
    %1354 = vmatpush1.msra.mxu0 0.0
    %1355 = vmatprep.subr.mxu0 0.0
    %1356 = vmatpush1.msra.mxu0 0.0
    %1357 = vmatprep.subr.mxu0 0.0
    %1358 = vmatpush1.msra.mxu0 0.0
    %1359 = vmatprep.subr.mxu0 0.0
    %1360 = vmatpush1.msra.mxu0 0.0
    %1361 = vmatprep.subr.mxu0 0.0
    %1362 = vmatpush1.msra.mxu0 0.0
    %1363 = vmatprep.subr.mxu0 0.0
    %1364 = vmatpush1.msra.mxu0 0.0
    %1365 = vmatprep.subr.mxu0 0.0
    %1366 = vmatpush1.msra.mxu0 0.0
    %1367 = vmatprep.subr.mxu0 0.0
    %1368 = vmatpush1.msra.mxu0 0.0
    %1369 = vmatprep.subr.mxu0 0.0
    %1370 = vmatpush1.msra.mxu0 0.0
    %1371 = vmatprep.subr.mxu0 0.0
    %1372 = vmatpush1.msra.mxu0 0.0
    %1373 = vmatprep.subr.mxu0 0.0
    %1374 = vmatpush1.msra.mxu0 0.0
    %1375 = vmatprep.mubr.f32.mxu0 0.0
    %1376 = vmatmul.mubr.f32.gmra.mrb[0].mxu0 %v1304
    %v1377 = vpop.f32.mrb[0].mxu0
    %v1378 = vadd.f32 0.0, %v1377
    %v1379 = vpop.f32.mrb[0].mxu0
    %v1380 = vadd.f32 0.0, %v1379
    %1381 = vdwg.mxu0
    %1382 = vmatprep.subr.mxu0 0.0
    %1383 = vmatpush1.msra.mxu0 %v148
    %1384 = vmatprep.subr.mxu0 0.0
    %1385 = vmatpush1.msra.mxu0 %v151
    %1386 = vmatprep.subr.mxu0 0.0
    %1387 = vmatpush1.msra.mxu0 %v154
    %1388 = vmatprep.subr.mxu0 0.0
    %1389 = vmatpush1.msra.mxu0 %v157
    %1390 = vmatprep.subr.mxu0 0.0
    %1391 = vmatpush1.msra.mxu0 %v160
    %1392 = vmatprep.subr.mxu0 0.0
    %1393 = vmatpush1.msra.mxu0 %v163
    %1394 = vmatprep.subr.mxu0 0.0
    %1395 = vmatpush1.msra.mxu0 %v166
    %1396 = vmatprep.subr.mxu0 0.0
    %1397 = vmatpush1.msra.mxu0 %v169
    %1398 = vmatprep.subr.mxu0 0.0
    %1399 = vmatpush1.msra.mxu0 %v172
    %1400 = vmatprep.subr.mxu0 0.0
    %1401 = vmatpush1.msra.mxu0 %v175
    %1402 = vmatprep.subr.mxu0 0.0
    %1403 = vmatpush1.msra.mxu0 %v178
    %1404 = vmatprep.subr.mxu0 0.0
    %1405 = vmatpush1.msra.mxu0 %v181
    %1406 = vmatprep.subr.mxu0 0.0
    %1407 = vmatpush1.msra.mxu0 %v184
    %1408 = vmatprep.subr.mxu0 0.0
    %1409 = vmatpush1.msra.mxu0 %v187
    %1410 = vmatprep.subr.mxu0 0.0
    %1411 = vmatpush1.msra.mxu0 %v190
    %1412 = vmatprep.subr.mxu0 0.0
    %1413 = vmatpush1.msra.mxu0 %v193
    %1414 = vmatprep.subr.mxu0 0.0
    %1415 = vmatpush1.msra.mxu0 0.0
    %1416 = vmatprep.subr.mxu0 0.0
    %1417 = vmatpush1.msra.mxu0 0.0
    %1418 = vmatprep.subr.mxu0 0.0
    %1419 = vmatpush1.msra.mxu0 0.0
    %1420 = vmatprep.subr.mxu0 0.0
    %1421 = vmatpush1.msra.mxu0 0.0
    %1422 = vmatprep.subr.mxu0 0.0
    %1423 = vmatpush1.msra.mxu0 0.0
    %1424 = vmatprep.subr.mxu0 0.0
    %1425 = vmatpush1.msra.mxu0 0.0
    %1426 = vmatprep.subr.mxu0 0.0
    %1427 = vmatpush1.msra.mxu0 0.0
    %1428 = vmatprep.subr.mxu0 0.0
    %1429 = vmatpush1.msra.mxu0 0.0
    %1430 = vmatprep.subr.mxu0 0.0
    %1431 = vmatpush1.msra.mxu0 0.0
    %1432 = vmatprep.subr.mxu0 0.0
    %1433 = vmatpush1.msra.mxu0 0.0
    %1434 = vmatprep.subr.mxu0 0.0
    %1435 = vmatpush1.msra.mxu0 0.0
    %1436 = vmatprep.subr.mxu0 0.0
    %1437 = vmatpush1.msra.mxu0 0.0
    %1438 = vmatprep.subr.mxu0 0.0
    %1439 = vmatpush1.msra.mxu0 0.0
    %1440 = vmatprep.subr.mxu0 0.0
    %1441 = vmatpush1.msra.mxu0 0.0
    %1442 = vmatprep.subr.mxu0 0.0
    %1443 = vmatpush1.msra.mxu0 0.0
    %1444 = vmatprep.subr.mxu0 0.0
    %1445 = vmatpush1.msra.mxu0 0.0
    %1446 = vmatprep.mubr.f32.mxu0 0.0
    %1447 = vmatmul.mubr.f32.gmra.mrb[0].mxu0 %v1304
    %v1448 = vpop.f32.mrb[0].mxu0
    %v1449 = vadd.f32 0.0, %v1448
    %v1450 = vpop.f32.mrb[0].mxu0
    %1451 = vdwg.mxu0
    %v1452 = vadd.f32 %v1308, %v1378
    %v1453 = vxor.u32 %v1452, 2147483648
    %v1454 = vmul.f32 %v1453, 1.442695
    %v1455 = vpow.pop %v1454
    %v1456 = vadd.f32 %v1455, 1.0
    %v1457 = vrcp.pop %v1456
    %v1458 = vmul.f32 1.0, %v1457
    %v1459 = vadd.f32 %v1309, %v1380
    %v1460 = vxor.u32 %v1459, 2147483648
    %v1461 = vmul.f32 %v1460, 1.442695
    %v1462 = vpow.pop %v1461
    %v1463 = vadd.f32 %v1462, 1.0
    %v1464 = vrcp.pop %v1463
    %v1465 = vmul.f32 1.0, %v1464
    %v1466 = vadd.f32 %v1449, %v466
    %v1467 = vmul.f32 %v1458, %v1466
    %v1468 = vadd.f32 %v1310, %v1467
    %v1469 = vtanh.pop %v1468
    %v1470 = vsub.f32 %v1304, %v1469
    %v1471 = vmul.f32 %v1465, %v1470
    %v1472 = vadd.f32 %v1469, %v1471
    %s1473 = scalar_lea.vmem [#allocation3], 40
    %1474 = vst [vmem:[%s1473] sm:$0xff] %v1472
    %s1475 = scalar_lea.vmem [#allocation2], 144
    %v1476 = vld [vmem:[%s1475] sm:$0xff]
    %v1477 = vld [vmem:[%s1475 + $0x8] sm:$0xff]
    %v1478 = vld [vmem:[%s1475 + $0x10] sm:$0xff]
    %1479 = vmatprep.subr.mxu0 %v147
    %1480 = vmatpush1.msra.mxu0 %v146
    %1481 = vmatprep.subr.mxu0 %v150
    %1482 = vmatpush1.msra.mxu0 %v149
    %1483 = vmatprep.subr.mxu0 %v153
    %1484 = vmatpush1.msra.mxu0 %v152
    %1485 = vmatprep.subr.mxu0 %v156
    %1486 = vmatpush1.msra.mxu0 %v155
    %1487 = vmatprep.subr.mxu0 %v159
    %1488 = vmatpush1.msra.mxu0 %v158
    %1489 = vmatprep.subr.mxu0 %v162
    %1490 = vmatpush1.msra.mxu0 %v161
    %1491 = vmatprep.subr.mxu0 %v165
    %1492 = vmatpush1.msra.mxu0 %v164
    %1493 = vmatprep.subr.mxu0 %v168
    %1494 = vmatpush1.msra.mxu0 %v167
    %1495 = vmatprep.subr.mxu0 %v171
    %1496 = vmatpush1.msra.mxu0 %v170
    %1497 = vmatprep.subr.mxu0 %v174
    %1498 = vmatpush1.msra.mxu0 %v173
    %1499 = vmatprep.subr.mxu0 %v177
    %1500 = vmatpush1.msra.mxu0 %v176
    %1501 = vmatprep.subr.mxu0 %v180
    %1502 = vmatpush1.msra.mxu0 %v179
    %1503 = vmatprep.subr.mxu0 %v183
    %1504 = vmatpush1.msra.mxu0 %v182
    %1505 = vmatprep.subr.mxu0 %v186
    %1506 = vmatpush1.msra.mxu0 %v185
    %1507 = vmatprep.subr.mxu0 %v189
    %1508 = vmatpush1.msra.mxu0 %v188
    %1509 = vmatprep.subr.mxu0 %v192
    %1510 = vmatpush1.msra.mxu0 %v191
    %1511 = vmatprep.subr.mxu0 0.0
    %1512 = vmatpush1.msra.mxu0 0.0
    %1513 = vmatprep.subr.mxu0 0.0
    %1514 = vmatpush1.msra.mxu0 0.0
    %1515 = vmatprep.subr.mxu0 0.0
    %1516 = vmatpush1.msra.mxu0 0.0
    %1517 = vmatprep.subr.mxu0 0.0
    %1518 = vmatpush1.msra.mxu0 0.0
    %1519 = vmatprep.subr.mxu0 0.0
    %1520 = vmatpush1.msra.mxu0 0.0
    %1521 = vmatprep.subr.mxu0 0.0
    %1522 = vmatpush1.msra.mxu0 0.0
    %1523 = vmatprep.subr.mxu0 0.0
    %1524 = vmatpush1.msra.mxu0 0.0
    %1525 = vmatprep.subr.mxu0 0.0
    %1526 = vmatpush1.msra.mxu0 0.0
    %1527 = vmatprep.subr.mxu0 0.0
    %1528 = vmatpush1.msra.mxu0 0.0
    %1529 = vmatprep.subr.mxu0 0.0
    %1530 = vmatpush1.msra.mxu0 0.0
    %1531 = vmatprep.subr.mxu0 0.0
    %1532 = vmatpush1.msra.mxu0 0.0
    %1533 = vmatprep.subr.mxu0 0.0
    %1534 = vmatpush1.msra.mxu0 0.0
    %1535 = vmatprep.subr.mxu0 0.0
    %1536 = vmatpush1.msra.mxu0 0.0
    %1537 = vmatprep.subr.mxu0 0.0
    %1538 = vmatpush1.msra.mxu0 0.0
    %1539 = vmatprep.subr.mxu0 0.0
    %1540 = vmatpush1.msra.mxu0 0.0
    %1541 = vmatprep.subr.mxu0 0.0
    %1542 = vmatpush1.msra.mxu0 0.0
    %1543 = vmatprep.mubr.f32.mxu0 0.0
    %1544 = vmatmul.mubr.f32.gmra.mrb[0].mxu0 %v1472
    %v1545 = vpop.f32.mrb[0].mxu0
    %v1546 = vadd.f32 0.0, %v1545
    %v1547 = vpop.f32.mrb[0].mxu0
    %v1548 = vadd.f32 0.0, %v1547
    %1549 = vdwg.mxu0
    %1550 = vmatprep.subr.mxu0 0.0
    %1551 = vmatpush1.msra.mxu0 %v148
    %1552 = vmatprep.subr.mxu0 0.0
    %1553 = vmatpush1.msra.mxu0 %v151
    %1554 = vmatprep.subr.mxu0 0.0
    %1555 = vmatpush1.msra.mxu0 %v154
    %1556 = vmatprep.subr.mxu0 0.0
    %1557 = vmatpush1.msra.mxu0 %v157
    %1558 = vmatprep.subr.mxu0 0.0
    %1559 = vmatpush1.msra.mxu0 %v160
    %1560 = vmatprep.subr.mxu0 0.0
    %1561 = vmatpush1.msra.mxu0 %v163
    %1562 = vmatprep.subr.mxu0 0.0
    %1563 = vmatpush1.msra.mxu0 %v166
    %1564 = vmatprep.subr.mxu0 0.0
    %1565 = vmatpush1.msra.mxu0 %v169
    %1566 = vmatprep.subr.mxu0 0.0
    %1567 = vmatpush1.msra.mxu0 %v172
    %1568 = vmatprep.subr.mxu0 0.0
    %1569 = vmatpush1.msra.mxu0 %v175
    %1570 = vmatprep.subr.mxu0 0.0
    %1571 = vmatpush1.msra.mxu0 %v178
    %1572 = vmatprep.subr.mxu0 0.0
    %1573 = vmatpush1.msra.mxu0 %v181
    %1574 = vmatprep.subr.mxu0 0.0
    %1575 = vmatpush1.msra.mxu0 %v184
    %1576 = vmatprep.subr.mxu0 0.0
    %1577 = vmatpush1.msra.mxu0 %v187
    %1578 = vmatprep.subr.mxu0 0.0
    %1579 = vmatpush1.msra.mxu0 %v190
    %1580 = vmatprep.subr.mxu0 0.0
    %1581 = vmatpush1.msra.mxu0 %v193
    %1582 = vmatprep.subr.mxu0 0.0
    %1583 = vmatpush1.msra.mxu0 0.0
    %1584 = vmatprep.subr.mxu0 0.0
    %1585 = vmatpush1.msra.mxu0 0.0
    %1586 = vmatprep.subr.mxu0 0.0
    %1587 = vmatpush1.msra.mxu0 0.0
    %1588 = vmatprep.subr.mxu0 0.0
    %1589 = vmatpush1.msra.mxu0 0.0
    %1590 = vmatprep.subr.mxu0 0.0
    %1591 = vmatpush1.msra.mxu0 0.0
    %1592 = vmatprep.subr.mxu0 0.0
    %1593 = vmatpush1.msra.mxu0 0.0
    %1594 = vmatprep.subr.mxu0 0.0
    %1595 = vmatpush1.msra.mxu0 0.0
    %1596 = vmatprep.subr.mxu0 0.0
    %1597 = vmatpush1.msra.mxu0 0.0
    %1598 = vmatprep.subr.mxu0 0.0
    %1599 = vmatpush1.msra.mxu0 0.0
    %1600 = vmatprep.subr.mxu0 0.0
    %1601 = vmatpush1.msra.mxu0 0.0
    %1602 = vmatprep.subr.mxu0 0.0
    %1603 = vmatpush1.msra.mxu0 0.0
    %1604 = vmatprep.subr.mxu0 0.0
    %1605 = vmatpush1.msra.mxu0 0.0
    %1606 = vmatprep.subr.mxu0 0.0
    %1607 = vmatpush1.msra.mxu0 0.0
    %1608 = vmatprep.subr.mxu0 0.0
    %1609 = vmatpush1.msra.mxu0 0.0
    %1610 = vmatprep.subr.mxu0 0.0
    %1611 = vmatpush1.msra.mxu0 0.0
    %1612 = vmatprep.subr.mxu0 0.0
    %1613 = vmatpush1.msra.mxu0 0.0
    %1614 = vmatprep.mubr.f32.mxu0 0.0
    %1615 = vmatmul.mubr.f32.gmra.mrb[0].mxu0 %v1472
    %v1616 = vpop.f32.mrb[0].mxu0
    %v1617 = vadd.f32 0.0, %v1616
    %v1618 = vpop.f32.mrb[0].mxu0
    %1619 = vdwg.mxu0
    %v1620 = vadd.f32 %v1476, %v1546
    %v1621 = vxor.u32 %v1620, 2147483648
    %v1622 = vmul.f32 %v1621, 1.442695
    %v1623 = vpow.pop %v1622
    %v1624 = vadd.f32 %v1623, 1.0
    %v1625 = vrcp.pop %v1624
    %v1626 = vmul.f32 1.0, %v1625
    %v1627 = vadd.f32 %v1477, %v1548
    %v1628 = vxor.u32 %v1627, 2147483648
    %v1629 = vmul.f32 %v1628, 1.442695
    %v1630 = vpow.pop %v1629
    %v1631 = vadd.f32 %v1630, 1.0
    %v1632 = vrcp.pop %v1631
    %v1633 = vmul.f32 1.0, %v1632
    %v1634 = vadd.f32 %v1617, %v466
    %v1635 = vmul.f32 %v1626, %v1634
    %v1636 = vadd.f32 %v1478, %v1635
    %v1637 = vtanh.pop %v1636
    %v1638 = vsub.f32 %v1472, %v1637
    %v1639 = vmul.f32 %v1633, %v1638
    %v1640 = vadd.f32 %v1637, %v1639
    %s1641 = scalar_lea.vmem [#allocation3], 48
    %1642 = vst [vmem:[%s1641] sm:$0xff] %v1640
    %s1643 = scalar_lea.vmem [#allocation2], 168
    %v1644 = vld [vmem:[%s1643] sm:$0xff]
    %v1645 = vld [vmem:[%s1643 + $0x8] sm:$0xff]
    %v1646 = vld [vmem:[%s1643 + $0x10] sm:$0xff]
    %1647 = vmatprep.subr.mxu0 %v147
    %1648 = vmatpush1.msra.mxu0 %v146
    %1649 = vmatprep.subr.mxu0 %v150
    %1650 = vmatpush1.msra.mxu0 %v149
    %1651 = vmatprep.subr.mxu0 %v153
    %1652 = vmatpush1.msra.mxu0 %v152
    %1653 = vmatprep.subr.mxu0 %v156
    %1654 = vmatpush1.msra.mxu0 %v155
    %1655 = vmatprep.subr.mxu0 %v159
    %1656 = vmatpush1.msra.mxu0 %v158
    %1657 = vmatprep.subr.mxu0 %v162
    %1658 = vmatpush1.msra.mxu0 %v161
    %1659 = vmatprep.subr.mxu0 %v165
    %1660 = vmatpush1.msra.mxu0 %v164
    %1661 = vmatprep.subr.mxu0 %v168
    %1662 = vmatpush1.msra.mxu0 %v167
    %1663 = vmatprep.subr.mxu0 %v171
    %1664 = vmatpush1.msra.mxu0 %v170
    %1665 = vmatprep.subr.mxu0 %v174
    %1666 = vmatpush1.msra.mxu0 %v173
    %1667 = vmatprep.subr.mxu0 %v177
    %1668 = vmatpush1.msra.mxu0 %v176
    %1669 = vmatprep.subr.mxu0 %v180
    %1670 = vmatpush1.msra.mxu0 %v179
    %1671 = vmatprep.subr.mxu0 %v183
    %1672 = vmatpush1.msra.mxu0 %v182
    %1673 = vmatprep.subr.mxu0 %v186
    %1674 = vmatpush1.msra.mxu0 %v185
    %1675 = vmatprep.subr.mxu0 %v189
    %1676 = vmatpush1.msra.mxu0 %v188
    %1677 = vmatprep.subr.mxu0 %v192
    %1678 = vmatpush1.msra.mxu0 %v191
    %1679 = vmatprep.subr.mxu0 0.0
    %1680 = vmatpush1.msra.mxu0 0.0
    %1681 = vmatprep.subr.mxu0 0.0
    %1682 = vmatpush1.msra.mxu0 0.0
    %1683 = vmatprep.subr.mxu0 0.0
    %1684 = vmatpush1.msra.mxu0 0.0
    %1685 = vmatprep.subr.mxu0 0.0
    %1686 = vmatpush1.msra.mxu0 0.0
    %1687 = vmatprep.subr.mxu0 0.0
    %1688 = vmatpush1.msra.mxu0 0.0
    %1689 = vmatprep.subr.mxu0 0.0
    %1690 = vmatpush1.msra.mxu0 0.0
    %1691 = vmatprep.subr.mxu0 0.0
    %1692 = vmatpush1.msra.mxu0 0.0
    %1693 = vmatprep.subr.mxu0 0.0
    %1694 = vmatpush1.msra.mxu0 0.0
    %1695 = vmatprep.subr.mxu0 0.0
    %1696 = vmatpush1.msra.mxu0 0.0
    %1697 = vmatprep.subr.mxu0 0.0
    %1698 = vmatpush1.msra.mxu0 0.0
    %1699 = vmatprep.subr.mxu0 0.0
    %1700 = vmatpush1.msra.mxu0 0.0
    %1701 = vmatprep.subr.mxu0 0.0
    %1702 = vmatpush1.msra.mxu0 0.0
    %1703 = vmatprep.subr.mxu0 0.0
    %1704 = vmatpush1.msra.mxu0 0.0
    %1705 = vmatprep.subr.mxu0 0.0
    %1706 = vmatpush1.msra.mxu0 0.0
    %1707 = vmatprep.subr.mxu0 0.0
    %1708 = vmatpush1.msra.mxu0 0.0
    %1709 = vmatprep.subr.mxu0 0.0
    %1710 = vmatpush1.msra.mxu0 0.0
    %1711 = vmatprep.mubr.f32.mxu0 0.0
    %1712 = vmatmul.mubr.f32.gmra.mrb[0].mxu0 %v1640
    %v1713 = vpop.f32.mrb[0].mxu0
    %v1714 = vadd.f32 0.0, %v1713
    %v1715 = vpop.f32.mrb[0].mxu0
    %v1716 = vadd.f32 0.0, %v1715
    %1717 = vdwg.mxu0
    %1718 = vmatprep.subr.mxu0 0.0
    %1719 = vmatpush1.msra.mxu0 %v148
    %1720 = vmatprep.subr.mxu0 0.0
    %1721 = vmatpush1.msra.mxu0 %v151
    %1722 = vmatprep.subr.mxu0 0.0
    %1723 = vmatpush1.msra.mxu0 %v154
    %1724 = vmatprep.subr.mxu0 0.0
    %1725 = vmatpush1.msra.mxu0 %v157
    %1726 = vmatprep.subr.mxu0 0.0
    %1727 = vmatpush1.msra.mxu0 %v160
    %1728 = vmatprep.subr.mxu0 0.0
    %1729 = vmatpush1.msra.mxu0 %v163
    %1730 = vmatprep.subr.mxu0 0.0
    %1731 = vmatpush1.msra.mxu0 %v166
    %1732 = vmatprep.subr.mxu0 0.0
    %1733 = vmatpush1.msra.mxu0 %v169
    %1734 = vmatprep.subr.mxu0 0.0
    %1735 = vmatpush1.msra.mxu0 %v172
    %1736 = vmatprep.subr.mxu0 0.0
    %1737 = vmatpush1.msra.mxu0 %v175
    %1738 = vmatprep.subr.mxu0 0.0
    %1739 = vmatpush1.msra.mxu0 %v178
    %1740 = vmatprep.subr.mxu0 0.0
    %1741 = vmatpush1.msra.mxu0 %v181
    %1742 = vmatprep.subr.mxu0 0.0
    %1743 = vmatpush1.msra.mxu0 %v184
    %1744 = vmatprep.subr.mxu0 0.0
    %1745 = vmatpush1.msra.mxu0 %v187
    %1746 = vmatprep.subr.mxu0 0.0
    %1747 = vmatpush1.msra.mxu0 %v190
    %1748 = vmatprep.subr.mxu0 0.0
    %1749 = vmatpush1.msra.mxu0 %v193
    %1750 = vmatprep.subr.mxu0 0.0
    %1751 = vmatpush1.msra.mxu0 0.0
    %1752 = vmatprep.subr.mxu0 0.0
    %1753 = vmatpush1.msra.mxu0 0.0
    %1754 = vmatprep.subr.mxu0 0.0
    %1755 = vmatpush1.msra.mxu0 0.0
    %1756 = vmatprep.subr.mxu0 0.0
    %1757 = vmatpush1.msra.mxu0 0.0
    %1758 = vmatprep.subr.mxu0 0.0
    %1759 = vmatpush1.msra.mxu0 0.0
    %1760 = vmatprep.subr.mxu0 0.0
    %1761 = vmatpush1.msra.mxu0 0.0
    %1762 = vmatprep.subr.mxu0 0.0
    %1763 = vmatpush1.msra.mxu0 0.0
    %1764 = vmatprep.subr.mxu0 0.0
    %1765 = vmatpush1.msra.mxu0 0.0
    %1766 = vmatprep.subr.mxu0 0.0
    %1767 = vmatpush1.msra.mxu0 0.0
    %1768 = vmatprep.subr.mxu0 0.0
    %1769 = vmatpush1.msra.mxu0 0.0
    %1770 = vmatprep.subr.mxu0 0.0
    %1771 = vmatpush1.msra.mxu0 0.0
    %1772 = vmatprep.subr.mxu0 0.0
    %1773 = vmatpush1.msra.mxu0 0.0
    %1774 = vmatprep.subr.mxu0 0.0
    %1775 = vmatpush1.msra.mxu0 0.0
    %1776 = vmatprep.subr.mxu0 0.0
    %1777 = vmatpush1.msra.mxu0 0.0
    %1778 = vmatprep.subr.mxu0 0.0
    %1779 = vmatpush1.msra.mxu0 0.0
    %1780 = vmatprep.subr.mxu0 0.0
    %1781 = vmatpush1.msra.mxu0 0.0
    %1782 = vmatprep.mubr.f32.mxu0 0.0
    %1783 = vmatmul.mubr.f32.gmra.mrb[0].mxu0 %v1640
    %v1784 = vpop.f32.mrb[0].mxu0
    %v1785 = vadd.f32 0.0, %v1784
    %v1786 = vpop.f32.mrb[0].mxu0
    %1787 = vdwg.mxu0
    %v1788 = vadd.f32 %v1644, %v1714
    %v1789 = vxor.u32 %v1788, 2147483648
    %v1790 = vmul.f32 %v1789, 1.442695
    %v1791 = vpow.pop %v1790
    %v1792 = vadd.f32 %v1791, 1.0
    %v1793 = vrcp.pop %v1792
    %v1794 = vmul.f32 1.0, %v1793
    %v1795 = vadd.f32 %v1645, %v1716
    %v1796 = vxor.u32 %v1795, 2147483648
    %v1797 = vmul.f32 %v1796, 1.442695
    %v1798 = vpow.pop %v1797
    %v1799 = vadd.f32 %v1798, 1.0
    %v1800 = vrcp.pop %v1799
    %v1801 = vmul.f32 1.0, %v1800
    %v1802 = vadd.f32 %v1785, %v466
    %v1803 = vmul.f32 %v1794, %v1802
    %v1804 = vadd.f32 %v1646, %v1803
    %v1805 = vtanh.pop %v1804
    %v1806 = vsub.f32 %v1640, %v1805
    %v1807 = vmul.f32 %v1801, %v1806
    %v1808 = vadd.f32 %v1805, %v1807
    %s1809 = scalar_lea.vmem [#allocation3], 56
    %1810 = vst [vmem:[%s1809] sm:$0xff] %v1808
    %1811 = vst [vmem:[%s13] sm:$0xff] %v1808
    %v1812 = vld [vmem:[#allocation8] sm:$0xff]
    %v1813 = vld [vmem:[#allocation8 + $0x8] sm:$0xff]
    %v1814 = vld [vmem:[#allocation8 + $0x10] sm:$0xff]
    %v1815 = vld [vmem:[#allocation8 + $0x18] sm:$0xff]
    %v1816 = vld [vmem:[#allocation8 + $0x20] sm:$0xff]
    %v1817 = vld [vmem:[#allocation8 + $0x28] sm:$0xff]
    %v1818 = vld [vmem:[#allocation8 + $0x30] sm:$0xff]
    %v1819 = vld [vmem:[#allocation8 + $0x38] sm:$0xff]
    %v1820 = vld [vmem:[#allocation8 + $0x40] sm:$0xff]
    %v1821 = vld [vmem:[#allocation8 + $0x48] sm:$0xff]
    %v1822 = vld [vmem:[#allocation8 + $0x50] sm:$0xff]
    %v1823 = vld [vmem:[#allocation8 + $0x58] sm:$0xff]
    %v1824 = vld [vmem:[#allocation8 + $0x60] sm:$0xff]
    %v1825 = vld [vmem:[#allocation8 + $0x68] sm:$0xff]
    %v1826 = vld [vmem:[#allocation8 + $0x70] sm:$0xff]
    %v1827 = vld [vmem:[#allocation8 + $0x78] sm:$0xff]
    %v1828 = vld [vmem:[#allocation8 + $0x80] sm:$0xff]
    %v1829 = vld [vmem:[#allocation8 + $0x88] sm:$0xff]
    %v1830 = vld [vmem:[#allocation8 + $0x90] sm:$0xff]
    %v1831 = vld [vmem:[#allocation8 + $0x98] sm:$0xff]
    %v1832 = vld [vmem:[#allocation8 + $0xa0] sm:$0xff]
    %v1833 = vld [vmem:[#allocation8 + $0xa8] sm:$0xff]
    %v1834 = vld [vmem:[#allocation8 + $0xb0] sm:$0xff]
    %v1835 = vld [vmem:[#allocation8 + $0xb8] sm:$0xff]
    %v1836 = vld [vmem:[#allocation8 + $0xc0] sm:$0xff]
    %v1837 = vld [vmem:[#allocation8 + $0xc8] sm:$0xff]
    %v1838 = vld [vmem:[#allocation8 + $0xd0] sm:$0xff]
    %v1839 = vld [vmem:[#allocation8 + $0xd8] sm:$0xff]
    %v1840 = vld [vmem:[#allocation8 + $0xe0] sm:$0xff]
    %v1841 = vld [vmem:[#allocation8 + $0xe8] sm:$0xff]
    %v1842 = vld [vmem:[#allocation8 + $0xf0] sm:$0xff]
    %v1843 = vld [vmem:[#allocation8 + $0xf8] sm:$0xff]
    %v1844 = vld [vmem:[#allocation8 + $0x100] sm:$0xff]
    %v1845 = vld [vmem:[#allocation8 + $0x108] sm:$0xff]
    %v1846 = vld [vmem:[#allocation8 + $0x110] sm:$0xff]
    %v1847 = vld [vmem:[#allocation8 + $0x118] sm:$0xff]
    %v1848 = vld [vmem:[#allocation8 + $0x120] sm:$0xff]
    %v1849 = vld [vmem:[#allocation8 + $0x128] sm:$0xff]
    %v1850 = vld [vmem:[#allocation8 + $0x130] sm:$0xff]
    %v1851 = vld [vmem:[#allocation8 + $0x138] sm:$0xff]
    %v1852 = vld [vmem:[#allocation8 + $0x140] sm:$0xff]
    %v1853 = vld [vmem:[#allocation8 + $0x148] sm:$0xff]
    %v1854 = vld [vmem:[#allocation8 + $0x150] sm:$0xff]
    %v1855 = vld [vmem:[#allocation8 + $0x158] sm:$0xff]
    %v1856 = vld [vmem:[#allocation8 + $0x160] sm:$0xff]
    %v1857 = vld [vmem:[#allocation8 + $0x168] sm:$0xff]
    %v1858 = vld [vmem:[#allocation8 + $0x170] sm:$0xff]
    %v1859 = vld [vmem:[#allocation8 + $0x178] sm:$0xff]
    %v1860 = vld [vmem:[#allocation9] sm:$0xff]
    %v1861 = vld [vmem:[#allocation9 + $0x8] sm:$0xff]
    %v1862 = vld [vmem:[#allocation9 + $0x10] sm:$0xff]
    %v1863 = vld [vmem:[#allocation9 + $0x18] sm:$0xff]
    %v1864 = vld [vmem:[#allocation9 + $0x20] sm:$0xff]
    %v1865 = vld [vmem:[#allocation9 + $0x28] sm:$0xff]
    %v1866 = vld [vmem:[#allocation9 + $0x30] sm:$0xff]
    %v1867 = vld [vmem:[#allocation9 + $0x38] sm:$0xff]
    %v1868 = vld [vmem:[#allocation9 + $0x40] sm:$0xff]
    %v1869 = vld [vmem:[#allocation9 + $0x48] sm:$0xff]
    %v1870 = vld [vmem:[#allocation9 + $0x50] sm:$0xff]
    %v1871 = vld [vmem:[#allocation9 + $0x58] sm:$0xff]
    %v1872 = vld [vmem:[#allocation9 + $0x60] sm:$0xff]
    %v1873 = vld [vmem:[#allocation9 + $0x68] sm:$0xff]
    %v1874 = vld [vmem:[#allocation9 + $0x70] sm:$0xff]
    %v1875 = vld [vmem:[#allocation9 + $0x78] sm:$0xff]
    %v1876 = vld [vmem:[#allocation9 + $0x80] sm:$0xff]
    %v1877 = vld [vmem:[#allocation9 + $0x88] sm:$0xff]
    %v1878 = vld [vmem:[#allocation9 + $0x90] sm:$0xff]
    %v1879 = vld [vmem:[#allocation9 + $0x98] sm:$0xff]
    %v1880 = vld [vmem:[#allocation9 + $0xa0] sm:$0xff]
    %v1881 = vld [vmem:[#allocation9 + $0xa8] sm:$0xff]
    %v1882 = vld [vmem:[#allocation9 + $0xb0] sm:$0xff]
    %v1883 = vld [vmem:[#allocation9 + $0xb8] sm:$0xff]
    %v1884 = vld [vmem:[#allocation9 + $0xc0] sm:$0xff]
    %v1885 = vld [vmem:[#allocation9 + $0xc8] sm:$0xff]
    %v1886 = vld [vmem:[#allocation9 + $0xd0] sm:$0xff]
    %v1887 = vld [vmem:[#allocation9 + $0xd8] sm:$0xff]
    %v1888 = vld [vmem:[#allocation9 + $0xe0] sm:$0xff]
    %v1889 = vld [vmem:[#allocation9 + $0xe8] sm:$0xff]
    %v1890 = vld [vmem:[#allocation9 + $0xf0] sm:$0xff]
    %v1891 = vld [vmem:[#allocation9 + $0xf8] sm:$0xff]
    %v1892 = vld [vmem:[#allocation9 + $0x100] sm:$0xff]
    %v1893 = vld [vmem:[#allocation9 + $0x108] sm:$0xff]
    %v1894 = vld [vmem:[#allocation9 + $0x110] sm:$0xff]
    %v1895 = vld [vmem:[#allocation9 + $0x118] sm:$0xff]
    %v1896 = vld [vmem:[#allocation9 + $0x120] sm:$0xff]
    %v1897 = vld [vmem:[#allocation9 + $0x128] sm:$0xff]
    %v1898 = vld [vmem:[#allocation9 + $0x130] sm:$0xff]
    %v1899 = vld [vmem:[#allocation9 + $0x138] sm:$0xff]
    %v1900 = vld [vmem:[#allocation9 + $0x140] sm:$0xff]
    %v1901 = vld [vmem:[#allocation9 + $0x148] sm:$0xff]
    %v1902 = vld [vmem:[#allocation9 + $0x150] sm:$0xff]
    %v1903 = vld [vmem:[#allocation9 + $0x158] sm:$0xff]
    %v1904 = vld [vmem:[#allocation9 + $0x160] sm:$0xff]
    %v1905 = vld [vmem:[#allocation9 + $0x168] sm:$0xff]
    %v1906 = vld [vmem:[#allocation9 + $0x170] sm:$0xff]
    %v1907 = vld [vmem:[#allocation9 + $0x178] sm:$0xff]
    %v1908 = vld [vmem:[%s8] sm:$0x7]
    %v1909 = vld [vmem:[%s9] sm:$0x1]
    %v1910 = vld [vmem:[#allocation3] sm:$0xff]
    %v1911 = vld [vmem:[#allocation3 + $0x8] sm:$0xff]
    %v1912 = vld [vmem:[#allocation3 + $0x10] sm:$0xff]
    %v1913 = vld [vmem:[#allocation3 + $0x18] sm:$0xff]
    %v1914 = vld [vmem:[#allocation3 + $0x20] sm:$0xff]
    %v1915 = vld [vmem:[#allocation3 + $0x28] sm:$0xff]
    %v1916 = vld [vmem:[#allocation3 + $0x30] sm:$0xff]
    %v1917 = vld [vmem:[#allocation3 + $0x38] sm:$0xff]
    %v1919 = vlaneseq
    %v1920 = vshrl.u32 %v1919, 7
    %v1921 = vsub.s32 0, %v1920
    %v1922 = vrot.slane %v1908, %v1921
    %v1923 = vlaneseq
    %v1924 = vshrl.u32 %v1923, 7
    %v1925 = vsub.s32 1, %v1924
    %v1926 = vrot.slane %v1908, %v1925
    %v1927 = vlaneseq
    %v1928 = vshrl.u32 %v1927, 7
    %v1929 = vsub.s32 2, %v1928
    %v1930 = vrot.slane %v1908, %v1929
    %1934 = vmatprep.subr.mxu0 %v1813
    %1935 = vmatpush1.msra.mxu0 %v1812
    %1936 = vmatprep.subr.mxu0 %v1816
    %1937 = vmatpush1.msra.mxu0 %v1815
    %1938 = vmatprep.subr.mxu0 %v1819
    %1939 = vmatpush1.msra.mxu0 %v1818
    %1940 = vmatprep.subr.mxu0 %v1822
    %1941 = vmatpush1.msra.mxu0 %v1821
    %1942 = vmatprep.subr.mxu0 %v1825
    %1943 = vmatpush1.msra.mxu0 %v1824
    %1944 = vmatprep.subr.mxu0 %v1828
    %1945 = vmatpush1.msra.mxu0 %v1827
    %1946 = vmatprep.subr.mxu0 %v1831
    %1947 = vmatpush1.msra.mxu0 %v1830
    %1948 = vmatprep.subr.mxu0 %v1834
    %1949 = vmatpush1.msra.mxu0 %v1833
    %1950 = vmatprep.subr.mxu0 %v1837
    %1951 = vmatpush1.msra.mxu0 %v1836
    %1952 = vmatprep.subr.mxu0 %v1840
    %1953 = vmatpush1.msra.mxu0 %v1839
    %1954 = vmatprep.subr.mxu0 %v1843
    %1955 = vmatpush1.msra.mxu0 %v1842
    %1956 = vmatprep.subr.mxu0 %v1846
    %1957 = vmatpush1.msra.mxu0 %v1845
    %1958 = vmatprep.subr.mxu0 %v1849
    %1959 = vmatpush1.msra.mxu0 %v1848
    %1960 = vmatprep.subr.mxu0 %v1852
    %1961 = vmatpush1.msra.mxu0 %v1851
    %1962 = vmatprep.subr.mxu0 %v1855
    %1963 = vmatpush1.msra.mxu0 %v1854
    %1964 = vmatprep.subr.mxu0 %v1858
    %1965 = vmatpush1.msra.mxu0 %v1857
    %1966 = vmatprep.subr.mxu0 0.0
    %1967 = vmatpush1.msra.mxu0 0.0
    %1968 = vmatprep.subr.mxu0 0.0
    %1969 = vmatpush1.msra.mxu0 0.0
    %1970 = vmatprep.subr.mxu0 0.0
    %1971 = vmatpush1.msra.mxu0 0.0
    %1972 = vmatprep.subr.mxu0 0.0
    %1973 = vmatpush1.msra.mxu0 0.0
    %1974 = vmatprep.subr.mxu0 0.0
    %1975 = vmatpush1.msra.mxu0 0.0
    %1976 = vmatprep.subr.mxu0 0.0
    %1977 = vmatpush1.msra.mxu0 0.0
    %1978 = vmatprep.subr.mxu0 0.0
    %1979 = vmatpush1.msra.mxu0 0.0
    %1980 = vmatprep.subr.mxu0 0.0
    %1981 = vmatpush1.msra.mxu0 0.0
    %1982 = vmatprep.subr.mxu0 0.0
    %1983 = vmatpush1.msra.mxu0 0.0
    %1984 = vmatprep.subr.mxu0 0.0
    %1985 = vmatpush1.msra.mxu0 0.0
    %1986 = vmatprep.subr.mxu0 0.0
    %1987 = vmatpush1.msra.mxu0 0.0
    %1988 = vmatprep.subr.mxu0 0.0
    %1989 = vmatpush1.msra.mxu0 0.0
    %1990 = vmatprep.subr.mxu0 0.0
    %1991 = vmatpush1.msra.mxu0 0.0
    %1992 = vmatprep.subr.mxu0 0.0
    %1993 = vmatpush1.msra.mxu0 0.0
    %1994 = vmatprep.subr.mxu0 0.0
    %1995 = vmatpush1.msra.mxu0 0.0
    %1996 = vmatprep.subr.mxu0 0.0
    %1997 = vmatpush1.msra.mxu0 0.0
    %1998 = vmatprep.mubr.f32.mxu0 0.0
    %1999 = vmatmul.mubr.f32.gmra.mrb[0].mxu0 %v1910
    %v2000 = vpop.f32.mrb[0].mxu0
    %v2001 = vadd.f32 %v1922, %v2000
    %v2002 = vpop.f32.mrb[0].mxu0
    %v2003 = vadd.f32 %v1926, %v2002
    %2004 = vmatprep.mubr.f32.mxu0 0.0
    %2005 = vmatmul.mubr.f32.gmra.mrb[0].mxu0 %v1911
    %v2006 = vpop.f32.mrb[0].mxu0
    %v2007 = vadd.f32 %v1922, %v2006
    %v2008 = vpop.f32.mrb[0].mxu0
    %v2009 = vadd.f32 %v1926, %v2008
    %2010 = vmatprep.mubr.f32.mxu0 0.0
    %2011 = vmatmul.mubr.f32.gmra.mrb[0].mxu0 %v1912
    %v2012 = vpop.f32.mrb[0].mxu0
    %v2013 = vadd.f32 %v1922, %v2012
    %v2014 = vpop.f32.mrb[0].mxu0
    %v2015 = vadd.f32 %v1926, %v2014
    %2016 = vmatprep.mubr.f32.mxu0 0.0
    %2017 = vmatmul.mubr.f32.gmra.mrb[0].mxu0 %v1913
    %v2018 = vpop.f32.mrb[0].mxu0
    %v2019 = vadd.f32 %v1922, %v2018
    %v2020 = vpop.f32.mrb[0].mxu0
    %v2021 = vadd.f32 %v1926, %v2020
    %2022 = vmatprep.mubr.f32.mxu0 0.0
    %2023 = vmatmul.mubr.f32.gmra.mrb[0].mxu0 %v1914
    %v2024 = vpop.f32.mrb[0].mxu0
    %v2025 = vadd.f32 %v1922, %v2024
    %v2026 = vpop.f32.mrb[0].mxu0
    %v2027 = vadd.f32 %v1926, %v2026
    %2028 = vmatprep.mubr.f32.mxu0 0.0
    %2029 = vmatmul.mubr.f32.gmra.mrb[0].mxu0 %v1915
    %v2030 = vpop.f32.mrb[0].mxu0
    %v2031 = vadd.f32 %v1922, %v2030
    %v2032 = vpop.f32.mrb[0].mxu0
    %v2033 = vadd.f32 %v1926, %v2032
    %2034 = vmatprep.mubr.f32.mxu0 0.0
    %2035 = vmatmul.mubr.f32.gmra.mrb[0].mxu0 %v1916
    %v2036 = vpop.f32.mrb[0].mxu0
    %v2037 = vadd.f32 %v1922, %v2036
    %v2038 = vpop.f32.mrb[0].mxu0
    %v2039 = vadd.f32 %v1926, %v2038
    %2040 = vmatprep.mubr.f32.mxu0 0.0
    %2041 = vmatmul.mubr.f32.gmra.mrb[0].mxu0 %v1917
    %v2042 = vpop.f32.mrb[0].mxu0
    %v2043 = vadd.f32 %v1922, %v2042
    %v2044 = vpop.f32.mrb[0].mxu0
    %v2045 = vadd.f32 %v1926, %v2044
    %2046 = vdwg.mxu0
    %2047 = vmatprep.subr.mxu0 0.0
    %2048 = vmatpush1.msra.mxu0 %v1814
    %2049 = vmatprep.subr.mxu0 0.0
    %2050 = vmatpush1.msra.mxu0 %v1817
    %2051 = vmatprep.subr.mxu0 0.0
    %2052 = vmatpush1.msra.mxu0 %v1820
    %2053 = vmatprep.subr.mxu0 0.0
    %2054 = vmatpush1.msra.mxu0 %v1823
    %2055 = vmatprep.subr.mxu0 0.0
    %2056 = vmatpush1.msra.mxu0 %v1826
    %2057 = vmatprep.subr.mxu0 0.0
    %2058 = vmatpush1.msra.mxu0 %v1829
    %2059 = vmatprep.subr.mxu0 0.0
    %2060 = vmatpush1.msra.mxu0 %v1832
    %2061 = vmatprep.subr.mxu0 0.0
    %2062 = vmatpush1.msra.mxu0 %v1835
    %2063 = vmatprep.subr.mxu0 0.0
    %2064 = vmatpush1.msra.mxu0 %v1838
    %2065 = vmatprep.subr.mxu0 0.0
    %2066 = vmatpush1.msra.mxu0 %v1841
    %2067 = vmatprep.subr.mxu0 0.0
    %2068 = vmatpush1.msra.mxu0 %v1844
    %2069 = vmatprep.subr.mxu0 0.0
    %2070 = vmatpush1.msra.mxu0 %v1847
    %2071 = vmatprep.subr.mxu0 0.0
    %2072 = vmatpush1.msra.mxu0 %v1850
    %2073 = vmatprep.subr.mxu0 0.0
    %2074 = vmatpush1.msra.mxu0 %v1853
    %2075 = vmatprep.subr.mxu0 0.0
    %2076 = vmatpush1.msra.mxu0 %v1856
    %2077 = vmatprep.subr.mxu0 0.0
    %2078 = vmatpush1.msra.mxu0 %v1859
    %2079 = vmatprep.subr.mxu0 0.0
    %2080 = vmatpush1.msra.mxu0 0.0
    %2081 = vmatprep.subr.mxu0 0.0
    %2082 = vmatpush1.msra.mxu0 0.0
    %2083 = vmatprep.subr.mxu0 0.0
    %2084 = vmatpush1.msra.mxu0 0.0
    %2085 = vmatprep.subr.mxu0 0.0
    %2086 = vmatpush1.msra.mxu0 0.0
    %2087 = vmatprep.subr.mxu0 0.0
    %2088 = vmatpush1.msra.mxu0 0.0
    %2089 = vmatprep.subr.mxu0 0.0
    %2090 = vmatpush1.msra.mxu0 0.0
    %2091 = vmatprep.subr.mxu0 0.0
    %2092 = vmatpush1.msra.mxu0 0.0
    %2093 = vmatprep.subr.mxu0 0.0
    %2094 = vmatpush1.msra.mxu0 0.0
    %2095 = vmatprep.subr.mxu0 0.0
    %2096 = vmatpush1.msra.mxu0 0.0
    %2097 = vmatprep.subr.mxu0 0.0
    %2098 = vmatpush1.msra.mxu0 0.0
    %2099 = vmatprep.subr.mxu0 0.0
    %2100 = vmatpush1.msra.mxu0 0.0
    %2101 = vmatprep.subr.mxu0 0.0
    %2102 = vmatpush1.msra.mxu0 0.0
    %2103 = vmatprep.subr.mxu0 0.0
    %2104 = vmatpush1.msra.mxu0 0.0
    %2105 = vmatprep.subr.mxu0 0.0
    %2106 = vmatpush1.msra.mxu0 0.0
    %2107 = vmatprep.subr.mxu0 0.0
    %2108 = vmatpush1.msra.mxu0 0.0
    %2109 = vmatprep.subr.mxu0 0.0
    %2110 = vmatpush1.msra.mxu0 0.0
    %2111 = vmatprep.mubr.f32.mxu0 0.0
    %2112 = vmatmul.mubr.f32.gmra.mrb[0].mxu0 %v1910
    %v2113 = vpop.f32.mrb[0].mxu0
    %v2114 = vadd.f32 %v1930, %v2113
    %v2115 = vpop.f32.mrb[0].mxu0
    %2116 = vmatprep.mubr.f32.mxu0 0.0
    %2117 = vmatmul.mubr.f32.gmra.mrb[0].mxu0 %v1911
    %v2118 = vpop.f32.mrb[0].mxu0
    %v2119 = vadd.f32 %v1930, %v2118
    %v2120 = vpop.f32.mrb[0].mxu0
    %2121 = vmatprep.mubr.f32.mxu0 0.0
    %2122 = vmatmul.mubr.f32.gmra.mrb[0].mxu0 %v1912
    %v2123 = vpop.f32.mrb[0].mxu0
    %v2124 = vadd.f32 %v1930, %v2123
    %v2125 = vpop.f32.mrb[0].mxu0
    %2126 = vmatprep.mubr.f32.mxu0 0.0
    %2127 = vmatmul.mubr.f32.gmra.mrb[0].mxu0 %v1913
    %v2128 = vpop.f32.mrb[0].mxu0
    %v2129 = vadd.f32 %v1930, %v2128
    %v2130 = vpop.f32.mrb[0].mxu0
    %2131 = vmatprep.mubr.f32.mxu0 0.0
    %2132 = vmatmul.mubr.f32.gmra.mrb[0].mxu0 %v1914
    %v2133 = vpop.f32.mrb[0].mxu0
    %v2134 = vadd.f32 %v1930, %v2133
    %v2135 = vpop.f32.mrb[0].mxu0
    %2136 = vmatprep.mubr.f32.mxu0 0.0
    %2137 = vmatmul.mubr.f32.gmra.mrb[0].mxu0 %v1915
    %v2138 = vpop.f32.mrb[0].mxu0
    %v2139 = vadd.f32 %v1930, %v2138
    %v2140 = vpop.f32.mrb[0].mxu0
    %2141 = vmatprep.mubr.f32.mxu0 0.0
    %2142 = vmatmul.mubr.f32.gmra.mrb[0].mxu0 %v1916
    %v2143 = vpop.f32.mrb[0].mxu0
    %v2144 = vadd.f32 %v1930, %v2143
    %v2145 = vpop.f32.mrb[0].mxu0
    %2146 = vmatprep.mubr.f32.mxu0 0.0
    %2147 = vmatmul.mubr.f32.gmra.mrb[0].mxu0 %v1917
    %v2148 = vpop.f32.mrb[0].mxu0
    %v2149 = vadd.f32 %v1930, %v2148
    %v2150 = vpop.f32.mrb[0].mxu0
    %2151 = vdwg.mxu0
    %2152 = vst [vmem:[#allocation2] sm:$0xff] %v2001
    %2153 = vst [vmem:[#allocation2 + $0x8] sm:$0xff] %v2003
    %2154 = vst [vmem:[#allocation2 + $0x10] sm:$0xff] %v2114
    %2155 = vst [vmem:[#allocation2 + $0x18] sm:$0xff] %v2007
    %2156 = vst [vmem:[#allocation2 + $0x20] sm:$0xff] %v2009
    %2157 = vst [vmem:[#allocation2 + $0x28] sm:$0xff] %v2119
    %2158 = vst [vmem:[#allocation2 + $0x30] sm:$0xff] %v2013
    %2159 = vst [vmem:[#allocation2 + $0x38] sm:$0xff] %v2015
    %2160 = vst [vmem:[#allocation2 + $0x40] sm:$0xff] %v2124
    %2161 = vst [vmem:[#allocation2 + $0x48] sm:$0xff] %v2019
    %2162 = vst [vmem:[#allocation2 + $0x50] sm:$0xff] %v2021
    %2163 = vst [vmem:[#allocation2 + $0x58] sm:$0xff] %v2129
    %2164 = vst [vmem:[#allocation2 + $0x60] sm:$0xff] %v2025
    %2165 = vst [vmem:[#allocation2 + $0x68] sm:$0xff] %v2027
    %2166 = vst [vmem:[#allocation2 + $0x70] sm:$0xff] %v2134
    %2167 = vst [vmem:[#allocation2 + $0x78] sm:$0xff] %v2031
    %2168 = vst [vmem:[#allocation2 + $0x80] sm:$0xff] %v2033
    %2169 = vst [vmem:[#allocation2 + $0x88] sm:$0xff] %v2139
    %2170 = vst [vmem:[#allocation2 + $0x90] sm:$0xff] %v2037
    %2171 = vst [vmem:[#allocation2 + $0x98] sm:$0xff] %v2039
    %2172 = vst [vmem:[#allocation2 + $0xa0] sm:$0xff] %v2144
    %2173 = vst [vmem:[#allocation2 + $0xa8] sm:$0xff] %v2043
    %2174 = vst [vmem:[#allocation2 + $0xb0] sm:$0xff] %v2045
    %2175 = vst [vmem:[#allocation2 + $0xb8] sm:$0xff] %v2149
    %v2177 = vlaneseq
    %v2178 = vshrl.u32 %v2177, 7
    %v2179 = vsub.s32 0, %v2178
    %v2180 = vrot.slane %v1909, %v2179
    %s2182 = scalar_lea.vmem %s1, 8
    %v2183 = vld [vmem:[%s2182] sm:$0xff]
    %v2184 = vld [vmem:[#allocation2] sm:$0xff]
    %v2185 = vld [vmem:[#allocation2 + $0x8] sm:$0xff]
    %v2186 = vld [vmem:[#allocation2 + $0x10] sm:$0xff]
    %2187 = vmatprep.subr.mxu0 %v1861
    %2188 = vmatpush1.msra.mxu0 %v1860
    %2189 = vmatprep.subr.mxu0 %v1864
    %2190 = vmatpush1.msra.mxu0 %v1863
    %2191 = vmatprep.subr.mxu0 %v1867
    %2192 = vmatpush1.msra.mxu0 %v1866
    %2193 = vmatprep.subr.mxu0 %v1870
    %2194 = vmatpush1.msra.mxu0 %v1869
    %2195 = vmatprep.subr.mxu0 %v1873
    %2196 = vmatpush1.msra.mxu0 %v1872
    %2197 = vmatprep.subr.mxu0 %v1876
    %2198 = vmatpush1.msra.mxu0 %v1875
    %2199 = vmatprep.subr.mxu0 %v1879
    %2200 = vmatpush1.msra.mxu0 %v1878
    %2201 = vmatprep.subr.mxu0 %v1882
    %2202 = vmatpush1.msra.mxu0 %v1881
    %2203 = vmatprep.subr.mxu0 %v1885
    %2204 = vmatpush1.msra.mxu0 %v1884
    %2205 = vmatprep.subr.mxu0 %v1888
    %2206 = vmatpush1.msra.mxu0 %v1887
    %2207 = vmatprep.subr.mxu0 %v1891
    %2208 = vmatpush1.msra.mxu0 %v1890
    %2209 = vmatprep.subr.mxu0 %v1894
    %2210 = vmatpush1.msra.mxu0 %v1893
    %2211 = vmatprep.subr.mxu0 %v1897
    %2212 = vmatpush1.msra.mxu0 %v1896
    %2213 = vmatprep.subr.mxu0 %v1900
    %2214 = vmatpush1.msra.mxu0 %v1899
    %2215 = vmatprep.subr.mxu0 %v1903
    %2216 = vmatpush1.msra.mxu0 %v1902
    %2217 = vmatprep.subr.mxu0 %v1906
    %2218 = vmatpush1.msra.mxu0 %v1905
    %2219 = vmatprep.subr.mxu0 0.0
    %2220 = vmatpush1.msra.mxu0 0.0
    %2221 = vmatprep.subr.mxu0 0.0
    %2222 = vmatpush1.msra.mxu0 0.0
    %2223 = vmatprep.subr.mxu0 0.0
    %2224 = vmatpush1.msra.mxu0 0.0
    %2225 = vmatprep.subr.mxu0 0.0
    %2226 = vmatpush1.msra.mxu0 0.0
    %2227 = vmatprep.subr.mxu0 0.0
    %2228 = vmatpush1.msra.mxu0 0.0
    %2229 = vmatprep.subr.mxu0 0.0
    %2230 = vmatpush1.msra.mxu0 0.0
    %2231 = vmatprep.subr.mxu0 0.0
    %2232 = vmatpush1.msra.mxu0 0.0
    %2233 = vmatprep.subr.mxu0 0.0
    %2234 = vmatpush1.msra.mxu0 0.0
    %2235 = vmatprep.subr.mxu0 0.0
    %2236 = vmatpush1.msra.mxu0 0.0
    %2237 = vmatprep.subr.mxu0 0.0
    %2238 = vmatpush1.msra.mxu0 0.0
    %2239 = vmatprep.subr.mxu0 0.0
    %2240 = vmatpush1.msra.mxu0 0.0
    %2241 = vmatprep.subr.mxu0 0.0
    %2242 = vmatpush1.msra.mxu0 0.0
    %2243 = vmatprep.subr.mxu0 0.0
    %2244 = vmatpush1.msra.mxu0 0.0
    %2245 = vmatprep.subr.mxu0 0.0
    %2246 = vmatpush1.msra.mxu0 0.0
    %2247 = vmatprep.subr.mxu0 0.0
    %2248 = vmatpush1.msra.mxu0 0.0
    %2249 = vmatprep.subr.mxu0 0.0
    %2250 = vmatpush1.msra.mxu0 0.0
    %2251 = vmatprep.mubr.f32.mxu0 0.0
    %2252 = vmatmul.mubr.f32.gmra.mrb[0].mxu0 %v2183
    %v2253 = vpop.f32.mrb[0].mxu0
    %v2254 = vadd.f32 0.0, %v2253
    %v2255 = vpop.f32.mrb[0].mxu0
    %v2256 = vadd.f32 0.0, %v2255
    %2257 = vdwg.mxu0
    %2258 = vmatprep.subr.mxu0 0.0
    %2259 = vmatpush1.msra.mxu0 %v1862
    %2260 = vmatprep.subr.mxu0 0.0
    %2261 = vmatpush1.msra.mxu0 %v1865
    %2262 = vmatprep.subr.mxu0 0.0
    %2263 = vmatpush1.msra.mxu0 %v1868
    %2264 = vmatprep.subr.mxu0 0.0
    %2265 = vmatpush1.msra.mxu0 %v1871
    %2266 = vmatprep.subr.mxu0 0.0
    %2267 = vmatpush1.msra.mxu0 %v1874
    %2268 = vmatprep.subr.mxu0 0.0
    %2269 = vmatpush1.msra.mxu0 %v1877
    %2270 = vmatprep.subr.mxu0 0.0
    %2271 = vmatpush1.msra.mxu0 %v1880
    %2272 = vmatprep.subr.mxu0 0.0
    %2273 = vmatpush1.msra.mxu0 %v1883
    %2274 = vmatprep.subr.mxu0 0.0
    %2275 = vmatpush1.msra.mxu0 %v1886
    %2276 = vmatprep.subr.mxu0 0.0
    %2277 = vmatpush1.msra.mxu0 %v1889
    %2278 = vmatprep.subr.mxu0 0.0
    %2279 = vmatpush1.msra.mxu0 %v1892
    %2280 = vmatprep.subr.mxu0 0.0
    %2281 = vmatpush1.msra.mxu0 %v1895
    %2282 = vmatprep.subr.mxu0 0.0
    %2283 = vmatpush1.msra.mxu0 %v1898
    %2284 = vmatprep.subr.mxu0 0.0
    %2285 = vmatpush1.msra.mxu0 %v1901
    %2286 = vmatprep.subr.mxu0 0.0
    %2287 = vmatpush1.msra.mxu0 %v1904
    %2288 = vmatprep.subr.mxu0 0.0
    %2289 = vmatpush1.msra.mxu0 %v1907
    %2290 = vmatprep.subr.mxu0 0.0
    %2291 = vmatpush1.msra.mxu0 0.0
    %2292 = vmatprep.subr.mxu0 0.0
    %2293 = vmatpush1.msra.mxu0 0.0
    %2294 = vmatprep.subr.mxu0 0.0
    %2295 = vmatpush1.msra.mxu0 0.0
    %2296 = vmatprep.subr.mxu0 0.0
    %2297 = vmatpush1.msra.mxu0 0.0
    %2298 = vmatprep.subr.mxu0 0.0
    %2299 = vmatpush1.msra.mxu0 0.0
    %2300 = vmatprep.subr.mxu0 0.0
    %2301 = vmatpush1.msra.mxu0 0.0
    %2302 = vmatprep.subr.mxu0 0.0
    %2303 = vmatpush1.msra.mxu0 0.0
    %2304 = vmatprep.subr.mxu0 0.0
    %2305 = vmatpush1.msra.mxu0 0.0
    %2306 = vmatprep.subr.mxu0 0.0
    %2307 = vmatpush1.msra.mxu0 0.0
    %2308 = vmatprep.subr.mxu0 0.0
    %2309 = vmatpush1.msra.mxu0 0.0
    %2310 = vmatprep.subr.mxu0 0.0
    %2311 = vmatpush1.msra.mxu0 0.0
    %2312 = vmatprep.subr.mxu0 0.0
    %2313 = vmatpush1.msra.mxu0 0.0
    %2314 = vmatprep.subr.mxu0 0.0
    %2315 = vmatpush1.msra.mxu0 0.0
    %2316 = vmatprep.subr.mxu0 0.0
    %2317 = vmatpush1.msra.mxu0 0.0
    %2318 = vmatprep.subr.mxu0 0.0
    %2319 = vmatpush1.msra.mxu0 0.0
    %2320 = vmatprep.subr.mxu0 0.0
    %2321 = vmatpush1.msra.mxu0 0.0
    %2322 = vmatprep.mubr.f32.mxu0 0.0
    %2323 = vmatmul.mubr.f32.gmra.mrb[0].mxu0 %v2183
    %v2324 = vpop.f32.mrb[0].mxu0
    %v2325 = vadd.f32 0.0, %v2324
    %v2326 = vpop.f32.mrb[0].mxu0
    %2327 = vdwg.mxu0
    %v2328 = vadd.f32 %v2184, %v2254
    %v2329 = vxor.u32 %v2328, 2147483648
    %v2330 = vmul.f32 %v2329, 1.442695
    %v2331 = vpow.pop %v2330
    %v2332 = vadd.f32 %v2331, 1.0
    %v2333 = vrcp.pop %v2332
    %v2334 = vmul.f32 1.0, %v2333
    %v2335 = vadd.f32 %v2185, %v2256
    %v2336 = vxor.u32 %v2335, 2147483648
    %v2337 = vmul.f32 %v2336, 1.442695
    %v2338 = vpow.pop %v2337
    %v2339 = vadd.f32 %v2338, 1.0
    %v2340 = vrcp.pop %v2339
    %v2341 = vmul.f32 1.0, %v2340
    %v2342 = vadd.f32 %v2325, %v2180
    %v2343 = vmul.f32 %v2334, %v2342
    %v2344 = vadd.f32 %v2186, %v2343
    %v2345 = vtanh.pop %v2344
    %v2346 = vsub.f32 %v2183, %v2345
    %v2347 = vmul.f32 %v2341, %v2346
    %v2348 = vadd.f32 %v2345, %v2347
    %2349 = vst [vmem:[#allocation3] sm:$0xff] %v2348
    %v2350 = vld [vmem:[%s635] sm:$0xff]
    %v2351 = vld [vmem:[%s635 + $0x8] sm:$0xff]
    %v2352 = vld [vmem:[%s635 + $0x10] sm:$0xff]
    %2353 = vmatprep.subr.mxu0 %v1861
    %2354 = vmatpush1.msra.mxu0 %v1860
    %2355 = vmatprep.subr.mxu0 %v1864
    %2356 = vmatpush1.msra.mxu0 %v1863
    %2357 = vmatprep.subr.mxu0 %v1867
    %2358 = vmatpush1.msra.mxu0 %v1866
    %2359 = vmatprep.subr.mxu0 %v1870
    %2360 = vmatpush1.msra.mxu0 %v1869
    %2361 = vmatprep.subr.mxu0 %v1873
    %2362 = vmatpush1.msra.mxu0 %v1872
    %2363 = vmatprep.subr.mxu0 %v1876
    %2364 = vmatpush1.msra.mxu0 %v1875
    %2365 = vmatprep.subr.mxu0 %v1879
    %2366 = vmatpush1.msra.mxu0 %v1878
    %2367 = vmatprep.subr.mxu0 %v1882
    %2368 = vmatpush1.msra.mxu0 %v1881
    %2369 = vmatprep.subr.mxu0 %v1885
    %2370 = vmatpush1.msra.mxu0 %v1884
    %2371 = vmatprep.subr.mxu0 %v1888
    %2372 = vmatpush1.msra.mxu0 %v1887
    %2373 = vmatprep.subr.mxu0 %v1891
    %2374 = vmatpush1.msra.mxu0 %v1890
    %2375 = vmatprep.subr.mxu0 %v1894
    %2376 = vmatpush1.msra.mxu0 %v1893
    %2377 = vmatprep.subr.mxu0 %v1897
    %2378 = vmatpush1.msra.mxu0 %v1896
    %2379 = vmatprep.subr.mxu0 %v1900
    %2380 = vmatpush1.msra.mxu0 %v1899
    %2381 = vmatprep.subr.mxu0 %v1903
    %2382 = vmatpush1.msra.mxu0 %v1902
    %2383 = vmatprep.subr.mxu0 %v1906
    %2384 = vmatpush1.msra.mxu0 %v1905
    %2385 = vmatprep.subr.mxu0 0.0
    %2386 = vmatpush1.msra.mxu0 0.0
    %2387 = vmatprep.subr.mxu0 0.0
    %2388 = vmatpush1.msra.mxu0 0.0
    %2389 = vmatprep.subr.mxu0 0.0
    %2390 = vmatpush1.msra.mxu0 0.0
    %2391 = vmatprep.subr.mxu0 0.0
    %2392 = vmatpush1.msra.mxu0 0.0
    %2393 = vmatprep.subr.mxu0 0.0
    %2394 = vmatpush1.msra.mxu0 0.0
    %2395 = vmatprep.subr.mxu0 0.0
    %2396 = vmatpush1.msra.mxu0 0.0
    %2397 = vmatprep.subr.mxu0 0.0
    %2398 = vmatpush1.msra.mxu0 0.0
    %2399 = vmatprep.subr.mxu0 0.0
    %2400 = vmatpush1.msra.mxu0 0.0
    %2401 = vmatprep.subr.mxu0 0.0
    %2402 = vmatpush1.msra.mxu0 0.0
    %2403 = vmatprep.subr.mxu0 0.0
    %2404 = vmatpush1.msra.mxu0 0.0
    %2405 = vmatprep.subr.mxu0 0.0
    %2406 = vmatpush1.msra.mxu0 0.0
    %2407 = vmatprep.subr.mxu0 0.0
    %2408 = vmatpush1.msra.mxu0 0.0
    %2409 = vmatprep.subr.mxu0 0.0
    %2410 = vmatpush1.msra.mxu0 0.0
    %2411 = vmatprep.subr.mxu0 0.0
    %2412 = vmatpush1.msra.mxu0 0.0
    %2413 = vmatprep.subr.mxu0 0.0
    %2414 = vmatpush1.msra.mxu0 0.0
    %2415 = vmatprep.subr.mxu0 0.0
    %2416 = vmatpush1.msra.mxu0 0.0
    %2417 = vmatprep.mubr.f32.mxu0 0.0
    %2418 = vmatmul.mubr.f32.gmra.mrb[0].mxu0 %v2348
    %v2419 = vpop.f32.mrb[0].mxu0
    %v2420 = vadd.f32 0.0, %v2419
    %v2421 = vpop.f32.mrb[0].mxu0
    %v2422 = vadd.f32 0.0, %v2421
    %2423 = vdwg.mxu0
    %2424 = vmatprep.subr.mxu0 0.0
    %2425 = vmatpush1.msra.mxu0 %v1862
    %2426 = vmatprep.subr.mxu0 0.0
    %2427 = vmatpush1.msra.mxu0 %v1865
    %2428 = vmatprep.subr.mxu0 0.0
    %2429 = vmatpush1.msra.mxu0 %v1868
    %2430 = vmatprep.subr.mxu0 0.0
    %2431 = vmatpush1.msra.mxu0 %v1871
    %2432 = vmatprep.subr.mxu0 0.0
    %2433 = vmatpush1.msra.mxu0 %v1874
    %2434 = vmatprep.subr.mxu0 0.0
    %2435 = vmatpush1.msra.mxu0 %v1877
    %2436 = vmatprep.subr.mxu0 0.0
    %2437 = vmatpush1.msra.mxu0 %v1880
    %2438 = vmatprep.subr.mxu0 0.0
    %2439 = vmatpush1.msra.mxu0 %v1883
    %2440 = vmatprep.subr.mxu0 0.0
    %2441 = vmatpush1.msra.mxu0 %v1886
    %2442 = vmatprep.subr.mxu0 0.0
    %2443 = vmatpush1.msra.mxu0 %v1889
    %2444 = vmatprep.subr.mxu0 0.0
    %2445 = vmatpush1.msra.mxu0 %v1892
    %2446 = vmatprep.subr.mxu0 0.0
    %2447 = vmatpush1.msra.mxu0 %v1895
    %2448 = vmatprep.subr.mxu0 0.0
    %2449 = vmatpush1.msra.mxu0 %v1898
    %2450 = vmatprep.subr.mxu0 0.0
    %2451 = vmatpush1.msra.mxu0 %v1901
    %2452 = vmatprep.subr.mxu0 0.0
    %2453 = vmatpush1.msra.mxu0 %v1904
    %2454 = vmatprep.subr.mxu0 0.0
    %2455 = vmatpush1.msra.mxu0 %v1907
    %2456 = vmatprep.subr.mxu0 0.0
    %2457 = vmatpush1.msra.mxu0 0.0
    %2458 = vmatprep.subr.mxu0 0.0
    %2459 = vmatpush1.msra.mxu0 0.0
    %2460 = vmatprep.subr.mxu0 0.0
    %2461 = vmatpush1.msra.mxu0 0.0
    %2462 = vmatprep.subr.mxu0 0.0
    %2463 = vmatpush1.msra.mxu0 0.0
    %2464 = vmatprep.subr.mxu0 0.0
    %2465 = vmatpush1.msra.mxu0 0.0
    %2466 = vmatprep.subr.mxu0 0.0
    %2467 = vmatpush1.msra.mxu0 0.0
    %2468 = vmatprep.subr.mxu0 0.0
    %2469 = vmatpush1.msra.mxu0 0.0
    %2470 = vmatprep.subr.mxu0 0.0
    %2471 = vmatpush1.msra.mxu0 0.0
    %2472 = vmatprep.subr.mxu0 0.0
    %2473 = vmatpush1.msra.mxu0 0.0
    %2474 = vmatprep.subr.mxu0 0.0
    %2475 = vmatpush1.msra.mxu0 0.0
    %2476 = vmatprep.subr.mxu0 0.0
    %2477 = vmatpush1.msra.mxu0 0.0
    %2478 = vmatprep.subr.mxu0 0.0
    %2479 = vmatpush1.msra.mxu0 0.0
    %2480 = vmatprep.subr.mxu0 0.0
    %2481 = vmatpush1.msra.mxu0 0.0
    %2482 = vmatprep.subr.mxu0 0.0
    %2483 = vmatpush1.msra.mxu0 0.0
    %2484 = vmatprep.subr.mxu0 0.0
    %2485 = vmatpush1.msra.mxu0 0.0
    %2486 = vmatprep.subr.mxu0 0.0
    %2487 = vmatpush1.msra.mxu0 0.0
    %2488 = vmatprep.mubr.f32.mxu0 0.0
    %2489 = vmatmul.mubr.f32.gmra.mrb[0].mxu0 %v2348
    %v2490 = vpop.f32.mrb[0].mxu0
    %v2491 = vadd.f32 0.0, %v2490
    %v2492 = vpop.f32.mrb[0].mxu0
    %2493 = vdwg.mxu0
    %v2494 = vadd.f32 %v2350, %v2420
    %v2495 = vxor.u32 %v2494, 2147483648
    %v2496 = vmul.f32 %v2495, 1.442695
    %v2497 = vpow.pop %v2496
    %v2498 = vadd.f32 %v2497, 1.0
    %v2499 = vrcp.pop %v2498
    %v2500 = vmul.f32 1.0, %v2499
    %v2501 = vadd.f32 %v2351, %v2422
    %v2502 = vxor.u32 %v2501, 2147483648
    %v2503 = vmul.f32 %v2502, 1.442695
    %v2504 = vpow.pop %v2503
    %v2505 = vadd.f32 %v2504, 1.0
    %v2506 = vrcp.pop %v2505
    %v2507 = vmul.f32 1.0, %v2506
    %v2508 = vadd.f32 %v2491, %v2180
    %v2509 = vmul.f32 %v2500, %v2508
    %v2510 = vadd.f32 %v2352, %v2509
    %v2511 = vtanh.pop %v2510
    %v2512 = vsub.f32 %v2348, %v2511
    %v2513 = vmul.f32 %v2507, %v2512
    %v2514 = vadd.f32 %v2511, %v2513
    %2515 = vst [vmem:[%s801] sm:$0xff] %v2514
    %v2516 = vld [vmem:[%s803] sm:$0xff]
    %v2517 = vld [vmem:[%s803 + $0x8] sm:$0xff]
    %v2518 = vld [vmem:[%s803 + $0x10] sm:$0xff]
    %2519 = vmatprep.subr.mxu0 %v1861
    %2520 = vmatpush1.msra.mxu0 %v1860
    %2521 = vmatprep.subr.mxu0 %v1864
    %2522 = vmatpush1.msra.mxu0 %v1863
    %2523 = vmatprep.subr.mxu0 %v1867
    %2524 = vmatpush1.msra.mxu0 %v1866
    %2525 = vmatprep.subr.mxu0 %v1870
    %2526 = vmatpush1.msra.mxu0 %v1869
    %2527 = vmatprep.subr.mxu0 %v1873
    %2528 = vmatpush1.msra.mxu0 %v1872
    %2529 = vmatprep.subr.mxu0 %v1876
    %2530 = vmatpush1.msra.mxu0 %v1875
    %2531 = vmatprep.subr.mxu0 %v1879
    %2532 = vmatpush1.msra.mxu0 %v1878
    %2533 = vmatprep.subr.mxu0 %v1882
    %2534 = vmatpush1.msra.mxu0 %v1881
    %2535 = vmatprep.subr.mxu0 %v1885
    %2536 = vmatpush1.msra.mxu0 %v1884
    %2537 = vmatprep.subr.mxu0 %v1888
    %2538 = vmatpush1.msra.mxu0 %v1887
    %2539 = vmatprep.subr.mxu0 %v1891
    %2540 = vmatpush1.msra.mxu0 %v1890
    %2541 = vmatprep.subr.mxu0 %v1894
    %2542 = vmatpush1.msra.mxu0 %v1893
    %2543 = vmatprep.subr.mxu0 %v1897
    %2544 = vmatpush1.msra.mxu0 %v1896
    %2545 = vmatprep.subr.mxu0 %v1900
    %2546 = vmatpush1.msra.mxu0 %v1899
    %2547 = vmatprep.subr.mxu0 %v1903
    %2548 = vmatpush1.msra.mxu0 %v1902
    %2549 = vmatprep.subr.mxu0 %v1906
    %2550 = vmatpush1.msra.mxu0 %v1905
    %2551 = vmatprep.subr.mxu0 0.0
    %2552 = vmatpush1.msra.mxu0 0.0
    %2553 = vmatprep.subr.mxu0 0.0
    %2554 = vmatpush1.msra.mxu0 0.0
    %2555 = vmatprep.subr.mxu0 0.0
    %2556 = vmatpush1.msra.mxu0 0.0
    %2557 = vmatprep.subr.mxu0 0.0
    %2558 = vmatpush1.msra.mxu0 0.0
    %2559 = vmatprep.subr.mxu0 0.0
    %2560 = vmatpush1.msra.mxu0 0.0
    %2561 = vmatprep.subr.mxu0 0.0
    %2562 = vmatpush1.msra.mxu0 0.0
    %2563 = vmatprep.subr.mxu0 0.0
    %2564 = vmatpush1.msra.mxu0 0.0
    %2565 = vmatprep.subr.mxu0 0.0
    %2566 = vmatpush1.msra.mxu0 0.0
    %2567 = vmatprep.subr.mxu0 0.0
    %2568 = vmatpush1.msra.mxu0 0.0
    %2569 = vmatprep.subr.mxu0 0.0
    %2570 = vmatpush1.msra.mxu0 0.0
    %2571 = vmatprep.subr.mxu0 0.0
    %2572 = vmatpush1.msra.mxu0 0.0
    %2573 = vmatprep.subr.mxu0 0.0
    %2574 = vmatpush1.msra.mxu0 0.0
    %2575 = vmatprep.subr.mxu0 0.0
    %2576 = vmatpush1.msra.mxu0 0.0
    %2577 = vmatprep.subr.mxu0 0.0
    %2578 = vmatpush1.msra.mxu0 0.0
    %2579 = vmatprep.subr.mxu0 0.0
    %2580 = vmatpush1.msra.mxu0 0.0
    %2581 = vmatprep.subr.mxu0 0.0
    %2582 = vmatpush1.msra.mxu0 0.0
    %2583 = vmatprep.mubr.f32.mxu0 0.0
    %2584 = vmatmul.mubr.f32.gmra.mrb[0].mxu0 %v2514
    %v2585 = vpop.f32.mrb[0].mxu0
    %v2586 = vadd.f32 0.0, %v2585
    %v2587 = vpop.f32.mrb[0].mxu0
    %v2588 = vadd.f32 0.0, %v2587
    %2589 = vdwg.mxu0
    %2590 = vmatprep.subr.mxu0 0.0
    %2591 = vmatpush1.msra.mxu0 %v1862
    %2592 = vmatprep.subr.mxu0 0.0
    %2593 = vmatpush1.msra.mxu0 %v1865
    %2594 = vmatprep.subr.mxu0 0.0
    %2595 = vmatpush1.msra.mxu0 %v1868
    %2596 = vmatprep.subr.mxu0 0.0
    %2597 = vmatpush1.msra.mxu0 %v1871
    %2598 = vmatprep.subr.mxu0 0.0
    %2599 = vmatpush1.msra.mxu0 %v1874
    %2600 = vmatprep.subr.mxu0 0.0
    %2601 = vmatpush1.msra.mxu0 %v1877
    %2602 = vmatprep.subr.mxu0 0.0
    %2603 = vmatpush1.msra.mxu0 %v1880
    %2604 = vmatprep.subr.mxu0 0.0
    %2605 = vmatpush1.msra.mxu0 %v1883
    %2606 = vmatprep.subr.mxu0 0.0
    %2607 = vmatpush1.msra.mxu0 %v1886
    %2608 = vmatprep.subr.mxu0 0.0
    %2609 = vmatpush1.msra.mxu0 %v1889
    %2610 = vmatprep.subr.mxu0 0.0
    %2611 = vmatpush1.msra.mxu0 %v1892
    %2612 = vmatprep.subr.mxu0 0.0
    %2613 = vmatpush1.msra.mxu0 %v1895
    %2614 = vmatprep.subr.mxu0 0.0
    %2615 = vmatpush1.msra.mxu0 %v1898
    %2616 = vmatprep.subr.mxu0 0.0
    %2617 = vmatpush1.msra.mxu0 %v1901
    %2618 = vmatprep.subr.mxu0 0.0
    %2619 = vmatpush1.msra.mxu0 %v1904
    %2620 = vmatprep.subr.mxu0 0.0
    %2621 = vmatpush1.msra.mxu0 %v1907
    %2622 = vmatprep.subr.mxu0 0.0
    %2623 = vmatpush1.msra.mxu0 0.0
    %2624 = vmatprep.subr.mxu0 0.0
    %2625 = vmatpush1.msra.mxu0 0.0
    %2626 = vmatprep.subr.mxu0 0.0
    %2627 = vmatpush1.msra.mxu0 0.0
    %2628 = vmatprep.subr.mxu0 0.0
    %2629 = vmatpush1.msra.mxu0 0.0
    %2630 = vmatprep.subr.mxu0 0.0
    %2631 = vmatpush1.msra.mxu0 0.0
    %2632 = vmatprep.subr.mxu0 0.0
    %2633 = vmatpush1.msra.mxu0 0.0
    %2634 = vmatprep.subr.mxu0 0.0
    %2635 = vmatpush1.msra.mxu0 0.0
    %2636 = vmatprep.subr.mxu0 0.0
    %2637 = vmatpush1.msra.mxu0 0.0
    %2638 = vmatprep.subr.mxu0 0.0
    %2639 = vmatpush1.msra.mxu0 0.0
    %2640 = vmatprep.subr.mxu0 0.0
    %2641 = vmatpush1.msra.mxu0 0.0
    %2642 = vmatprep.subr.mxu0 0.0
    %2643 = vmatpush1.msra.mxu0 0.0
    %2644 = vmatprep.subr.mxu0 0.0
    %2645 = vmatpush1.msra.mxu0 0.0
    %2646 = vmatprep.subr.mxu0 0.0
    %2647 = vmatpush1.msra.mxu0 0.0
    %2648 = vmatprep.subr.mxu0 0.0
    %2649 = vmatpush1.msra.mxu0 0.0
    %2650 = vmatprep.subr.mxu0 0.0
    %2651 = vmatpush1.msra.mxu0 0.0
    %2652 = vmatprep.subr.mxu0 0.0
    %2653 = vmatpush1.msra.mxu0 0.0
    %2654 = vmatprep.mubr.f32.mxu0 0.0
    %2655 = vmatmul.mubr.f32.gmra.mrb[0].mxu0 %v2514
    %v2656 = vpop.f32.mrb[0].mxu0
    %v2657 = vadd.f32 0.0, %v2656
    %v2658 = vpop.f32.mrb[0].mxu0
    %2659 = vdwg.mxu0
    %v2660 = vadd.f32 %v2516, %v2586
    %v2661 = vxor.u32 %v2660, 2147483648
    %v2662 = vmul.f32 %v2661, 1.442695
    %v2663 = vpow.pop %v2662
    %v2664 = vadd.f32 %v2663, 1.0
    %v2665 = vrcp.pop %v2664
    %v2666 = vmul.f32 1.0, %v2665
    %v2667 = vadd.f32 %v2517, %v2588
    %v2668 = vxor.u32 %v2667, 2147483648
    %v2669 = vmul.f32 %v2668, 1.442695
    %v2670 = vpow.pop %v2669
    %v2671 = vadd.f32 %v2670, 1.0
    %v2672 = vrcp.pop %v2671
    %v2673 = vmul.f32 1.0, %v2672
    %v2674 = vadd.f32 %v2657, %v2180
    %v2675 = vmul.f32 %v2666, %v2674
    %v2676 = vadd.f32 %v2518, %v2675
    %v2677 = vtanh.pop %v2676
    %v2678 = vsub.f32 %v2514, %v2677
    %v2679 = vmul.f32 %v2673, %v2678
    %v2680 = vadd.f32 %v2677, %v2679
    %2681 = vst [vmem:[%s969] sm:$0xff] %v2680
    %v2682 = vld [vmem:[%s971] sm:$0xff]
    %v2683 = vld [vmem:[%s971 + $0x8] sm:$0xff]
    %v2684 = vld [vmem:[%s971 + $0x10] sm:$0xff]
    %2685 = vmatprep.subr.mxu0 %v1861
    %2686 = vmatpush1.msra.mxu0 %v1860
    %2687 = vmatprep.subr.mxu0 %v1864
    %2688 = vmatpush1.msra.mxu0 %v1863
    %2689 = vmatprep.subr.mxu0 %v1867
    %2690 = vmatpush1.msra.mxu0 %v1866
    %2691 = vmatprep.subr.mxu0 %v1870
    %2692 = vmatpush1.msra.mxu0 %v1869
    %2693 = vmatprep.subr.mxu0 %v1873
    %2694 = vmatpush1.msra.mxu0 %v1872
    %2695 = vmatprep.subr.mxu0 %v1876
    %2696 = vmatpush1.msra.mxu0 %v1875
    %2697 = vmatprep.subr.mxu0 %v1879
    %2698 = vmatpush1.msra.mxu0 %v1878
    %2699 = vmatprep.subr.mxu0 %v1882
    %2700 = vmatpush1.msra.mxu0 %v1881
    %2701 = vmatprep.subr.mxu0 %v1885
    %2702 = vmatpush1.msra.mxu0 %v1884
    %2703 = vmatprep.subr.mxu0 %v1888
    %2704 = vmatpush1.msra.mxu0 %v1887
    %2705 = vmatprep.subr.mxu0 %v1891
    %2706 = vmatpush1.msra.mxu0 %v1890
    %2707 = vmatprep.subr.mxu0 %v1894
    %2708 = vmatpush1.msra.mxu0 %v1893
    %2709 = vmatprep.subr.mxu0 %v1897
    %2710 = vmatpush1.msra.mxu0 %v1896
    %2711 = vmatprep.subr.mxu0 %v1900
    %2712 = vmatpush1.msra.mxu0 %v1899
    %2713 = vmatprep.subr.mxu0 %v1903
    %2714 = vmatpush1.msra.mxu0 %v1902
    %2715 = vmatprep.subr.mxu0 %v1906
    %2716 = vmatpush1.msra.mxu0 %v1905
    %2717 = vmatprep.subr.mxu0 0.0
    %2718 = vmatpush1.msra.mxu0 0.0
    %2719 = vmatprep.subr.mxu0 0.0
    %2720 = vmatpush1.msra.mxu0 0.0
    %2721 = vmatprep.subr.mxu0 0.0
    %2722 = vmatpush1.msra.mxu0 0.0
    %2723 = vmatprep.subr.mxu0 0.0
    %2724 = vmatpush1.msra.mxu0 0.0
    %2725 = vmatprep.subr.mxu0 0.0
    %2726 = vmatpush1.msra.mxu0 0.0
    %2727 = vmatprep.subr.mxu0 0.0
    %2728 = vmatpush1.msra.mxu0 0.0
    %2729 = vmatprep.subr.mxu0 0.0
    %2730 = vmatpush1.msra.mxu0 0.0
    %2731 = vmatprep.subr.mxu0 0.0
    %2732 = vmatpush1.msra.mxu0 0.0
    %2733 = vmatprep.subr.mxu0 0.0
    %2734 = vmatpush1.msra.mxu0 0.0
    %2735 = vmatprep.subr.mxu0 0.0
    %2736 = vmatpush1.msra.mxu0 0.0
    %2737 = vmatprep.subr.mxu0 0.0
    %2738 = vmatpush1.msra.mxu0 0.0
    %2739 = vmatprep.subr.mxu0 0.0
    %2740 = vmatpush1.msra.mxu0 0.0
    %2741 = vmatprep.subr.mxu0 0.0
    %2742 = vmatpush1.msra.mxu0 0.0
    %2743 = vmatprep.subr.mxu0 0.0
    %2744 = vmatpush1.msra.mxu0 0.0
    %2745 = vmatprep.subr.mxu0 0.0
    %2746 = vmatpush1.msra.mxu0 0.0
    %2747 = vmatprep.subr.mxu0 0.0
    %2748 = vmatpush1.msra.mxu0 0.0
    %2749 = vmatprep.mubr.f32.mxu0 0.0
    %2750 = vmatmul.mubr.f32.gmra.mrb[0].mxu0 %v2680
    %v2751 = vpop.f32.mrb[0].mxu0
    %v2752 = vadd.f32 0.0, %v2751
    %v2753 = vpop.f32.mrb[0].mxu0
    %v2754 = vadd.f32 0.0, %v2753
    %2755 = vdwg.mxu0
    %2756 = vmatprep.subr.mxu0 0.0
    %2757 = vmatpush1.msra.mxu0 %v1862
    %2758 = vmatprep.subr.mxu0 0.0
    %2759 = vmatpush1.msra.mxu0 %v1865
    %2760 = vmatprep.subr.mxu0 0.0
    %2761 = vmatpush1.msra.mxu0 %v1868
    %2762 = vmatprep.subr.mxu0 0.0
    %2763 = vmatpush1.msra.mxu0 %v1871
    %2764 = vmatprep.subr.mxu0 0.0
    %2765 = vmatpush1.msra.mxu0 %v1874
    %2766 = vmatprep.subr.mxu0 0.0
    %2767 = vmatpush1.msra.mxu0 %v1877
    %2768 = vmatprep.subr.mxu0 0.0
    %2769 = vmatpush1.msra.mxu0 %v1880
    %2770 = vmatprep.subr.mxu0 0.0
    %2771 = vmatpush1.msra.mxu0 %v1883
    %2772 = vmatprep.subr.mxu0 0.0
    %2773 = vmatpush1.msra.mxu0 %v1886
    %2774 = vmatprep.subr.mxu0 0.0
    %2775 = vmatpush1.msra.mxu0 %v1889
    %2776 = vmatprep.subr.mxu0 0.0
    %2777 = vmatpush1.msra.mxu0 %v1892
    %2778 = vmatprep.subr.mxu0 0.0
    %2779 = vmatpush1.msra.mxu0 %v1895
    %2780 = vmatprep.subr.mxu0 0.0
    %2781 = vmatpush1.msra.mxu0 %v1898
    %2782 = vmatprep.subr.mxu0 0.0
    %2783 = vmatpush1.msra.mxu0 %v1901
    %2784 = vmatprep.subr.mxu0 0.0
    %2785 = vmatpush1.msra.mxu0 %v1904
    %2786 = vmatprep.subr.mxu0 0.0
    %2787 = vmatpush1.msra.mxu0 %v1907
    %2788 = vmatprep.subr.mxu0 0.0
    %2789 = vmatpush1.msra.mxu0 0.0
    %2790 = vmatprep.subr.mxu0 0.0
    %2791 = vmatpush1.msra.mxu0 0.0
    %2792 = vmatprep.subr.mxu0 0.0
    %2793 = vmatpush1.msra.mxu0 0.0
    %2794 = vmatprep.subr.mxu0 0.0
    %2795 = vmatpush1.msra.mxu0 0.0
    %2796 = vmatprep.subr.mxu0 0.0
    %2797 = vmatpush1.msra.mxu0 0.0
    %2798 = vmatprep.subr.mxu0 0.0
    %2799 = vmatpush1.msra.mxu0 0.0
    %2800 = vmatprep.subr.mxu0 0.0
    %2801 = vmatpush1.msra.mxu0 0.0
    %2802 = vmatprep.subr.mxu0 0.0
    %2803 = vmatpush1.msra.mxu0 0.0
    %2804 = vmatprep.subr.mxu0 0.0
    %2805 = vmatpush1.msra.mxu0 0.0
    %2806 = vmatprep.subr.mxu0 0.0
    %2807 = vmatpush1.msra.mxu0 0.0
    %2808 = vmatprep.subr.mxu0 0.0
    %2809 = vmatpush1.msra.mxu0 0.0
    %2810 = vmatprep.subr.mxu0 0.0
    %2811 = vmatpush1.msra.mxu0 0.0
    %2812 = vmatprep.subr.mxu0 0.0
    %2813 = vmatpush1.msra.mxu0 0.0
    %2814 = vmatprep.subr.mxu0 0.0
    %2815 = vmatpush1.msra.mxu0 0.0
    %2816 = vmatprep.subr.mxu0 0.0
    %2817 = vmatpush1.msra.mxu0 0.0
    %2818 = vmatprep.subr.mxu0 0.0
    %2819 = vmatpush1.msra.mxu0 0.0
    %2820 = vmatprep.mubr.f32.mxu0 0.0
    %2821 = vmatmul.mubr.f32.gmra.mrb[0].mxu0 %v2680
    %v2822 = vpop.f32.mrb[0].mxu0
    %v2823 = vadd.f32 0.0, %v2822
    %v2824 = vpop.f32.mrb[0].mxu0
    %2825 = vdwg.mxu0
    %v2826 = vadd.f32 %v2682, %v2752
    %v2827 = vxor.u32 %v2826, 2147483648
    %v2828 = vmul.f32 %v2827, 1.442695
    %v2829 = vpow.pop %v2828
    %v2830 = vadd.f32 %v2829, 1.0
    %v2831 = vrcp.pop %v2830
    %v2832 = vmul.f32 1.0, %v2831
    %v2833 = vadd.f32 %v2683, %v2754
    %v2834 = vxor.u32 %v2833, 2147483648
    %v2835 = vmul.f32 %v2834, 1.442695
    %v2836 = vpow.pop %v2835
    %v2837 = vadd.f32 %v2836, 1.0
    %v2838 = vrcp.pop %v2837
    %v2839 = vmul.f32 1.0, %v2838
    %v2840 = vadd.f32 %v2823, %v2180
    %v2841 = vmul.f32 %v2832, %v2840
    %v2842 = vadd.f32 %v2684, %v2841
    %v2843 = vtanh.pop %v2842
    %v2844 = vsub.f32 %v2680, %v2843
    %v2845 = vmul.f32 %v2839, %v2844
    %v2846 = vadd.f32 %v2843, %v2845
    %2847 = vst [vmem:[%s1137] sm:$0xff] %v2846
    %v2848 = vld [vmem:[%s1139] sm:$0xff]
    %v2849 = vld [vmem:[%s1139 + $0x8] sm:$0xff]
    %v2850 = vld [vmem:[%s1139 + $0x10] sm:$0xff]
    %2851 = vmatprep.subr.mxu0 %v1861
    %2852 = vmatpush1.msra.mxu0 %v1860
    %2853 = vmatprep.subr.mxu0 %v1864
    %2854 = vmatpush1.msra.mxu0 %v1863
    %2855 = vmatprep.subr.mxu0 %v1867
    %2856 = vmatpush1.msra.mxu0 %v1866
    %2857 = vmatprep.subr.mxu0 %v1870
    %2858 = vmatpush1.msra.mxu0 %v1869
    %2859 = vmatprep.subr.mxu0 %v1873
    %2860 = vmatpush1.msra.mxu0 %v1872
    %2861 = vmatprep.subr.mxu0 %v1876
    %2862 = vmatpush1.msra.mxu0 %v1875
    %2863 = vmatprep.subr.mxu0 %v1879
    %2864 = vmatpush1.msra.mxu0 %v1878
    %2865 = vmatprep.subr.mxu0 %v1882
    %2866 = vmatpush1.msra.mxu0 %v1881
    %2867 = vmatprep.subr.mxu0 %v1885
    %2868 = vmatpush1.msra.mxu0 %v1884
    %2869 = vmatprep.subr.mxu0 %v1888
    %2870 = vmatpush1.msra.mxu0 %v1887
    %2871 = vmatprep.subr.mxu0 %v1891
    %2872 = vmatpush1.msra.mxu0 %v1890
    %2873 = vmatprep.subr.mxu0 %v1894
    %2874 = vmatpush1.msra.mxu0 %v1893
    %2875 = vmatprep.subr.mxu0 %v1897
    %2876 = vmatpush1.msra.mxu0 %v1896
    %2877 = vmatprep.subr.mxu0 %v1900
    %2878 = vmatpush1.msra.mxu0 %v1899
    %2879 = vmatprep.subr.mxu0 %v1903
    %2880 = vmatpush1.msra.mxu0 %v1902
    %2881 = vmatprep.subr.mxu0 %v1906
    %2882 = vmatpush1.msra.mxu0 %v1905
    %2883 = vmatprep.subr.mxu0 0.0
    %2884 = vmatpush1.msra.mxu0 0.0
    %2885 = vmatprep.subr.mxu0 0.0
    %2886 = vmatpush1.msra.mxu0 0.0
    %2887 = vmatprep.subr.mxu0 0.0
    %2888 = vmatpush1.msra.mxu0 0.0
    %2889 = vmatprep.subr.mxu0 0.0
    %2890 = vmatpush1.msra.mxu0 0.0
    %2891 = vmatprep.subr.mxu0 0.0
    %2892 = vmatpush1.msra.mxu0 0.0
    %2893 = vmatprep.subr.mxu0 0.0
    %2894 = vmatpush1.msra.mxu0 0.0
    %2895 = vmatprep.subr.mxu0 0.0
    %2896 = vmatpush1.msra.mxu0 0.0
    %2897 = vmatprep.subr.mxu0 0.0
    %2898 = vmatpush1.msra.mxu0 0.0
    %2899 = vmatprep.subr.mxu0 0.0
    %2900 = vmatpush1.msra.mxu0 0.0
    %2901 = vmatprep.subr.mxu0 0.0
    %2902 = vmatpush1.msra.mxu0 0.0
    %2903 = vmatprep.subr.mxu0 0.0
    %2904 = vmatpush1.msra.mxu0 0.0
    %2905 = vmatprep.subr.mxu0 0.0
    %2906 = vmatpush1.msra.mxu0 0.0
    %2907 = vmatprep.subr.mxu0 0.0
    %2908 = vmatpush1.msra.mxu0 0.0
    %2909 = vmatprep.subr.mxu0 0.0
    %2910 = vmatpush1.msra.mxu0 0.0
    %2911 = vmatprep.subr.mxu0 0.0
    %2912 = vmatpush1.msra.mxu0 0.0
    %2913 = vmatprep.subr.mxu0 0.0
    %2914 = vmatpush1.msra.mxu0 0.0
    %2915 = vmatprep.mubr.f32.mxu0 0.0
    %2916 = vmatmul.mubr.f32.gmra.mrb[0].mxu0 %v2846
    %v2917 = vpop.f32.mrb[0].mxu0
    %v2918 = vadd.f32 0.0, %v2917
    %v2919 = vpop.f32.mrb[0].mxu0
    %v2920 = vadd.f32 0.0, %v2919
    %2921 = vdwg.mxu0
    %2922 = vmatprep.subr.mxu0 0.0
    %2923 = vmatpush1.msra.mxu0 %v1862
    %2924 = vmatprep.subr.mxu0 0.0
    %2925 = vmatpush1.msra.mxu0 %v1865
    %2926 = vmatprep.subr.mxu0 0.0
    %2927 = vmatpush1.msra.mxu0 %v1868
    %2928 = vmatprep.subr.mxu0 0.0
    %2929 = vmatpush1.msra.mxu0 %v1871
    %2930 = vmatprep.subr.mxu0 0.0
    %2931 = vmatpush1.msra.mxu0 %v1874
    %2932 = vmatprep.subr.mxu0 0.0
    %2933 = vmatpush1.msra.mxu0 %v1877
    %2934 = vmatprep.subr.mxu0 0.0
    %2935 = vmatpush1.msra.mxu0 %v1880
    %2936 = vmatprep.subr.mxu0 0.0
    %2937 = vmatpush1.msra.mxu0 %v1883
    %2938 = vmatprep.subr.mxu0 0.0
    %2939 = vmatpush1.msra.mxu0 %v1886
    %2940 = vmatprep.subr.mxu0 0.0
    %2941 = vmatpush1.msra.mxu0 %v1889
    %2942 = vmatprep.subr.mxu0 0.0
    %2943 = vmatpush1.msra.mxu0 %v1892
    %2944 = vmatprep.subr.mxu0 0.0
    %2945 = vmatpush1.msra.mxu0 %v1895
    %2946 = vmatprep.subr.mxu0 0.0
    %2947 = vmatpush1.msra.mxu0 %v1898
    %2948 = vmatprep.subr.mxu0 0.0
    %2949 = vmatpush1.msra.mxu0 %v1901
    %2950 = vmatprep.subr.mxu0 0.0
    %2951 = vmatpush1.msra.mxu0 %v1904
    %2952 = vmatprep.subr.mxu0 0.0
    %2953 = vmatpush1.msra.mxu0 %v1907
    %2954 = vmatprep.subr.mxu0 0.0
    %2955 = vmatpush1.msra.mxu0 0.0
    %2956 = vmatprep.subr.mxu0 0.0
    %2957 = vmatpush1.msra.mxu0 0.0
    %2958 = vmatprep.subr.mxu0 0.0
    %2959 = vmatpush1.msra.mxu0 0.0
    %2960 = vmatprep.subr.mxu0 0.0
    %2961 = vmatpush1.msra.mxu0 0.0
    %2962 = vmatprep.subr.mxu0 0.0
    %2963 = vmatpush1.msra.mxu0 0.0
    %2964 = vmatprep.subr.mxu0 0.0
    %2965 = vmatpush1.msra.mxu0 0.0
    %2966 = vmatprep.subr.mxu0 0.0
    %2967 = vmatpush1.msra.mxu0 0.0
    %2968 = vmatprep.subr.mxu0 0.0
    %2969 = vmatpush1.msra.mxu0 0.0
    %2970 = vmatprep.subr.mxu0 0.0
    %2971 = vmatpush1.msra.mxu0 0.0
    %2972 = vmatprep.subr.mxu0 0.0
    %2973 = vmatpush1.msra.mxu0 0.0
    %2974 = vmatprep.subr.mxu0 0.0
    %2975 = vmatpush1.msra.mxu0 0.0
    %2976 = vmatprep.subr.mxu0 0.0
    %2977 = vmatpush1.msra.mxu0 0.0
    %2978 = vmatprep.subr.mxu0 0.0
    %2979 = vmatpush1.msra.mxu0 0.0
    %2980 = vmatprep.subr.mxu0 0.0
    %2981 = vmatpush1.msra.mxu0 0.0
    %2982 = vmatprep.subr.mxu0 0.0
    %2983 = vmatpush1.msra.mxu0 0.0
    %2984 = vmatprep.subr.mxu0 0.0
    %2985 = vmatpush1.msra.mxu0 0.0
    %2986 = vmatprep.mubr.f32.mxu0 0.0
    %2987 = vmatmul.mubr.f32.gmra.mrb[0].mxu0 %v2846
    %v2988 = vpop.f32.mrb[0].mxu0
    %v2989 = vadd.f32 0.0, %v2988
    %v2990 = vpop.f32.mrb[0].mxu0
    %2991 = vdwg.mxu0
    %v2992 = vadd.f32 %v2848, %v2918
    %v2993 = vxor.u32 %v2992, 2147483648
    %v2994 = vmul.f32 %v2993, 1.442695
    %v2995 = vpow.pop %v2994
    %v2996 = vadd.f32 %v2995, 1.0
    %v2997 = vrcp.pop %v2996
    %v2998 = vmul.f32 1.0, %v2997
    %v2999 = vadd.f32 %v2849, %v2920
    %v3000 = vxor.u32 %v2999, 2147483648
    %v3001 = vmul.f32 %v3000, 1.442695
    %v3002 = vpow.pop %v3001
    %v3003 = vadd.f32 %v3002, 1.0
    %v3004 = vrcp.pop %v3003
    %v3005 = vmul.f32 1.0, %v3004
    %v3006 = vadd.f32 %v2989, %v2180
    %v3007 = vmul.f32 %v2998, %v3006
    %v3008 = vadd.f32 %v2850, %v3007
    %v3009 = vtanh.pop %v3008
    %v3010 = vsub.f32 %v2846, %v3009
    %v3011 = vmul.f32 %v3005, %v3010
    %v3012 = vadd.f32 %v3009, %v3011
    %3013 = vst [vmem:[%s1305] sm:$0xff] %v3012
    %v3014 = vld [vmem:[%s1307] sm:$0xff]
    %v3015 = vld [vmem:[%s1307 + $0x8] sm:$0xff]
    %v3016 = vld [vmem:[%s1307 + $0x10] sm:$0xff]
    %3017 = vmatprep.subr.mxu0 %v1861
    %3018 = vmatpush1.msra.mxu0 %v1860
    %3019 = vmatprep.subr.mxu0 %v1864
    %3020 = vmatpush1.msra.mxu0 %v1863
    %3021 = vmatprep.subr.mxu0 %v1867
    %3022 = vmatpush1.msra.mxu0 %v1866
    %3023 = vmatprep.subr.mxu0 %v1870
    %3024 = vmatpush1.msra.mxu0 %v1869
    %3025 = vmatprep.subr.mxu0 %v1873
    %3026 = vmatpush1.msra.mxu0 %v1872
    %3027 = vmatprep.subr.mxu0 %v1876
    %3028 = vmatpush1.msra.mxu0 %v1875
    %3029 = vmatprep.subr.mxu0 %v1879
    %3030 = vmatpush1.msra.mxu0 %v1878
    %3031 = vmatprep.subr.mxu0 %v1882
    %3032 = vmatpush1.msra.mxu0 %v1881
    %3033 = vmatprep.subr.mxu0 %v1885
    %3034 = vmatpush1.msra.mxu0 %v1884
    %3035 = vmatprep.subr.mxu0 %v1888
    %3036 = vmatpush1.msra.mxu0 %v1887
    %3037 = vmatprep.subr.mxu0 %v1891
    %3038 = vmatpush1.msra.mxu0 %v1890
    %3039 = vmatprep.subr.mxu0 %v1894
    %3040 = vmatpush1.msra.mxu0 %v1893
    %3041 = vmatprep.subr.mxu0 %v1897
    %3042 = vmatpush1.msra.mxu0 %v1896
    %3043 = vmatprep.subr.mxu0 %v1900
    %3044 = vmatpush1.msra.mxu0 %v1899
    %3045 = vmatprep.subr.mxu0 %v1903
    %3046 = vmatpush1.msra.mxu0 %v1902
    %3047 = vmatprep.subr.mxu0 %v1906
    %3048 = vmatpush1.msra.mxu0 %v1905
    %3049 = vmatprep.subr.mxu0 0.0
    %3050 = vmatpush1.msra.mxu0 0.0
    %3051 = vmatprep.subr.mxu0 0.0
    %3052 = vmatpush1.msra.mxu0 0.0
    %3053 = vmatprep.subr.mxu0 0.0
    %3054 = vmatpush1.msra.mxu0 0.0
    %3055 = vmatprep.subr.mxu0 0.0
    %3056 = vmatpush1.msra.mxu0 0.0
    %3057 = vmatprep.subr.mxu0 0.0
    %3058 = vmatpush1.msra.mxu0 0.0
    %3059 = vmatprep.subr.mxu0 0.0
    %3060 = vmatpush1.msra.mxu0 0.0
    %3061 = vmatprep.subr.mxu0 0.0
    %3062 = vmatpush1.msra.mxu0 0.0
    %3063 = vmatprep.subr.mxu0 0.0
    %3064 = vmatpush1.msra.mxu0 0.0
    %3065 = vmatprep.subr.mxu0 0.0
    %3066 = vmatpush1.msra.mxu0 0.0
    %3067 = vmatprep.subr.mxu0 0.0
    %3068 = vmatpush1.msra.mxu0 0.0
    %3069 = vmatprep.subr.mxu0 0.0
    %3070 = vmatpush1.msra.mxu0 0.0
    %3071 = vmatprep.subr.mxu0 0.0
    %3072 = vmatpush1.msra.mxu0 0.0
    %3073 = vmatprep.subr.mxu0 0.0
    %3074 = vmatpush1.msra.mxu0 0.0
    %3075 = vmatprep.subr.mxu0 0.0
    %3076 = vmatpush1.msra.mxu0 0.0
    %3077 = vmatprep.subr.mxu0 0.0
    %3078 = vmatpush1.msra.mxu0 0.0
    %3079 = vmatprep.subr.mxu0 0.0
    %3080 = vmatpush1.msra.mxu0 0.0
    %3081 = vmatprep.mubr.f32.mxu0 0.0
    %3082 = vmatmul.mubr.f32.gmra.mrb[0].mxu0 %v3012
    %v3083 = vpop.f32.mrb[0].mxu0
    %v3084 = vadd.f32 0.0, %v3083
    %v3085 = vpop.f32.mrb[0].mxu0
    %v3086 = vadd.f32 0.0, %v3085
    %3087 = vdwg.mxu0
    %3088 = vmatprep.subr.mxu0 0.0
    %3089 = vmatpush1.msra.mxu0 %v1862
    %3090 = vmatprep.subr.mxu0 0.0
    %3091 = vmatpush1.msra.mxu0 %v1865
    %3092 = vmatprep.subr.mxu0 0.0
    %3093 = vmatpush1.msra.mxu0 %v1868
    %3094 = vmatprep.subr.mxu0 0.0
    %3095 = vmatpush1.msra.mxu0 %v1871
    %3096 = vmatprep.subr.mxu0 0.0
    %3097 = vmatpush1.msra.mxu0 %v1874
    %3098 = vmatprep.subr.mxu0 0.0
    %3099 = vmatpush1.msra.mxu0 %v1877
    %3100 = vmatprep.subr.mxu0 0.0
    %3101 = vmatpush1.msra.mxu0 %v1880
    %3102 = vmatprep.subr.mxu0 0.0
    %3103 = vmatpush1.msra.mxu0 %v1883
    %3104 = vmatprep.subr.mxu0 0.0
    %3105 = vmatpush1.msra.mxu0 %v1886
    %3106 = vmatprep.subr.mxu0 0.0
    %3107 = vmatpush1.msra.mxu0 %v1889
    %3108 = vmatprep.subr.mxu0 0.0
    %3109 = vmatpush1.msra.mxu0 %v1892
    %3110 = vmatprep.subr.mxu0 0.0
    %3111 = vmatpush1.msra.mxu0 %v1895
    %3112 = vmatprep.subr.mxu0 0.0
    %3113 = vmatpush1.msra.mxu0 %v1898
    %3114 = vmatprep.subr.mxu0 0.0
    %3115 = vmatpush1.msra.mxu0 %v1901
    %3116 = vmatprep.subr.mxu0 0.0
    %3117 = vmatpush1.msra.mxu0 %v1904
    %3118 = vmatprep.subr.mxu0 0.0
    %3119 = vmatpush1.msra.mxu0 %v1907
    %3120 = vmatprep.subr.mxu0 0.0
    %3121 = vmatpush1.msra.mxu0 0.0
    %3122 = vmatprep.subr.mxu0 0.0
    %3123 = vmatpush1.msra.mxu0 0.0
    %3124 = vmatprep.subr.mxu0 0.0
    %3125 = vmatpush1.msra.mxu0 0.0
    %3126 = vmatprep.subr.mxu0 0.0
    %3127 = vmatpush1.msra.mxu0 0.0
    %3128 = vmatprep.subr.mxu0 0.0
    %3129 = vmatpush1.msra.mxu0 0.0
    %3130 = vmatprep.subr.mxu0 0.0
    %3131 = vmatpush1.msra.mxu0 0.0
    %3132 = vmatprep.subr.mxu0 0.0
    %3133 = vmatpush1.msra.mxu0 0.0
    %3134 = vmatprep.subr.mxu0 0.0
    %3135 = vmatpush1.msra.mxu0 0.0
    %3136 = vmatprep.subr.mxu0 0.0
    %3137 = vmatpush1.msra.mxu0 0.0
    %3138 = vmatprep.subr.mxu0 0.0
    %3139 = vmatpush1.msra.mxu0 0.0
    %3140 = vmatprep.subr.mxu0 0.0
    %3141 = vmatpush1.msra.mxu0 0.0
    %3142 = vmatprep.subr.mxu0 0.0
    %3143 = vmatpush1.msra.mxu0 0.0
    %3144 = vmatprep.subr.mxu0 0.0
    %3145 = vmatpush1.msra.mxu0 0.0
    %3146 = vmatprep.subr.mxu0 0.0
    %3147 = vmatpush1.msra.mxu0 0.0
    %3148 = vmatprep.subr.mxu0 0.0
    %3149 = vmatpush1.msra.mxu0 0.0
    %3150 = vmatprep.subr.mxu0 0.0
    %3151 = vmatpush1.msra.mxu0 0.0
    %3152 = vmatprep.mubr.f32.mxu0 0.0
    %3153 = vmatmul.mubr.f32.gmra.mrb[0].mxu0 %v3012
    %v3154 = vpop.f32.mrb[0].mxu0
    %v3155 = vadd.f32 0.0, %v3154
    %v3156 = vpop.f32.mrb[0].mxu0
    %3157 = vdwg.mxu0
    %v3158 = vadd.f32 %v3014, %v3084
    %v3159 = vxor.u32 %v3158, 2147483648
    %v3160 = vmul.f32 %v3159, 1.442695
    %v3161 = vpow.pop %v3160
    %v3162 = vadd.f32 %v3161, 1.0
    %v3163 = vrcp.pop %v3162
    %v3164 = vmul.f32 1.0, %v3163
    %v3165 = vadd.f32 %v3015, %v3086
    %v3166 = vxor.u32 %v3165, 2147483648
    %v3167 = vmul.f32 %v3166, 1.442695
    %v3168 = vpow.pop %v3167
    %v3169 = vadd.f32 %v3168, 1.0
    %v3170 = vrcp.pop %v3169
    %v3171 = vmul.f32 1.0, %v3170
    %v3172 = vadd.f32 %v3155, %v2180
    %v3173 = vmul.f32 %v3164, %v3172
    %v3174 = vadd.f32 %v3016, %v3173
    %v3175 = vtanh.pop %v3174
    %v3176 = vsub.f32 %v3012, %v3175
    %v3177 = vmul.f32 %v3171, %v3176
    %v3178 = vadd.f32 %v3175, %v3177
    %3179 = vst [vmem:[%s1473] sm:$0xff] %v3178
    %v3180 = vld [vmem:[%s1475] sm:$0xff]
    %v3181 = vld [vmem:[%s1475 + $0x8] sm:$0xff]
    %v3182 = vld [vmem:[%s1475 + $0x10] sm:$0xff]
    %3183 = vmatprep.subr.mxu0 %v1861
    %3184 = vmatpush1.msra.mxu0 %v1860
    %3185 = vmatprep.subr.mxu0 %v1864
    %3186 = vmatpush1.msra.mxu0 %v1863
    %3187 = vmatprep.subr.mxu0 %v1867
    %3188 = vmatpush1.msra.mxu0 %v1866
    %3189 = vmatprep.subr.mxu0 %v1870
    %3190 = vmatpush1.msra.mxu0 %v1869
    %3191 = vmatprep.subr.mxu0 %v1873
    %3192 = vmatpush1.msra.mxu0 %v1872
    %3193 = vmatprep.subr.mxu0 %v1876
    %3194 = vmatpush1.msra.mxu0 %v1875
    %3195 = vmatprep.subr.mxu0 %v1879
    %3196 = vmatpush1.msra.mxu0 %v1878
    %3197 = vmatprep.subr.mxu0 %v1882
    %3198 = vmatpush1.msra.mxu0 %v1881
    %3199 = vmatprep.subr.mxu0 %v1885
    %3200 = vmatpush1.msra.mxu0 %v1884
    %3201 = vmatprep.subr.mxu0 %v1888
    %3202 = vmatpush1.msra.mxu0 %v1887
    %3203 = vmatprep.subr.mxu0 %v1891
    %3204 = vmatpush1.msra.mxu0 %v1890
    %3205 = vmatprep.subr.mxu0 %v1894
    %3206 = vmatpush1.msra.mxu0 %v1893
    %3207 = vmatprep.subr.mxu0 %v1897
    %3208 = vmatpush1.msra.mxu0 %v1896
    %3209 = vmatprep.subr.mxu0 %v1900
    %3210 = vmatpush1.msra.mxu0 %v1899
    %3211 = vmatprep.subr.mxu0 %v1903
    %3212 = vmatpush1.msra.mxu0 %v1902
    %3213 = vmatprep.subr.mxu0 %v1906
    %3214 = vmatpush1.msra.mxu0 %v1905
    %3215 = vmatprep.subr.mxu0 0.0
    %3216 = vmatpush1.msra.mxu0 0.0
    %3217 = vmatprep.subr.mxu0 0.0
    %3218 = vmatpush1.msra.mxu0 0.0
    %3219 = vmatprep.subr.mxu0 0.0
    %3220 = vmatpush1.msra.mxu0 0.0
    %3221 = vmatprep.subr.mxu0 0.0
    %3222 = vmatpush1.msra.mxu0 0.0
    %3223 = vmatprep.subr.mxu0 0.0
    %3224 = vmatpush1.msra.mxu0 0.0
    %3225 = vmatprep.subr.mxu0 0.0
    %3226 = vmatpush1.msra.mxu0 0.0
    %3227 = vmatprep.subr.mxu0 0.0
    %3228 = vmatpush1.msra.mxu0 0.0
    %3229 = vmatprep.subr.mxu0 0.0
    %3230 = vmatpush1.msra.mxu0 0.0
    %3231 = vmatprep.subr.mxu0 0.0
    %3232 = vmatpush1.msra.mxu0 0.0
    %3233 = vmatprep.subr.mxu0 0.0
    %3234 = vmatpush1.msra.mxu0 0.0
    %3235 = vmatprep.subr.mxu0 0.0
    %3236 = vmatpush1.msra.mxu0 0.0
    %3237 = vmatprep.subr.mxu0 0.0
    %3238 = vmatpush1.msra.mxu0 0.0
    %3239 = vmatprep.subr.mxu0 0.0
    %3240 = vmatpush1.msra.mxu0 0.0
    %3241 = vmatprep.subr.mxu0 0.0
    %3242 = vmatpush1.msra.mxu0 0.0
    %3243 = vmatprep.subr.mxu0 0.0
    %3244 = vmatpush1.msra.mxu0 0.0
    %3245 = vmatprep.subr.mxu0 0.0
    %3246 = vmatpush1.msra.mxu0 0.0
    %3247 = vmatprep.mubr.f32.mxu0 0.0
    %3248 = vmatmul.mubr.f32.gmra.mrb[0].mxu0 %v3178
    %v3249 = vpop.f32.mrb[0].mxu0
    %v3250 = vadd.f32 0.0, %v3249
    %v3251 = vpop.f32.mrb[0].mxu0
    %v3252 = vadd.f32 0.0, %v3251
    %3253 = vdwg.mxu0
    %3254 = vmatprep.subr.mxu0 0.0
    %3255 = vmatpush1.msra.mxu0 %v1862
    %3256 = vmatprep.subr.mxu0 0.0
    %3257 = vmatpush1.msra.mxu0 %v1865
    %3258 = vmatprep.subr.mxu0 0.0
    %3259 = vmatpush1.msra.mxu0 %v1868
    %3260 = vmatprep.subr.mxu0 0.0
    %3261 = vmatpush1.msra.mxu0 %v1871
    %3262 = vmatprep.subr.mxu0 0.0
    %3263 = vmatpush1.msra.mxu0 %v1874
    %3264 = vmatprep.subr.mxu0 0.0
    %3265 = vmatpush1.msra.mxu0 %v1877
    %3266 = vmatprep.subr.mxu0 0.0
    %3267 = vmatpush1.msra.mxu0 %v1880
    %3268 = vmatprep.subr.mxu0 0.0
    %3269 = vmatpush1.msra.mxu0 %v1883
    %3270 = vmatprep.subr.mxu0 0.0
    %3271 = vmatpush1.msra.mxu0 %v1886
    %3272 = vmatprep.subr.mxu0 0.0
    %3273 = vmatpush1.msra.mxu0 %v1889
    %3274 = vmatprep.subr.mxu0 0.0
    %3275 = vmatpush1.msra.mxu0 %v1892
    %3276 = vmatprep.subr.mxu0 0.0
    %3277 = vmatpush1.msra.mxu0 %v1895
    %3278 = vmatprep.subr.mxu0 0.0
    %3279 = vmatpush1.msra.mxu0 %v1898
    %3280 = vmatprep.subr.mxu0 0.0
    %3281 = vmatpush1.msra.mxu0 %v1901
    %3282 = vmatprep.subr.mxu0 0.0
    %3283 = vmatpush1.msra.mxu0 %v1904
    %3284 = vmatprep.subr.mxu0 0.0
    %3285 = vmatpush1.msra.mxu0 %v1907
    %3286 = vmatprep.subr.mxu0 0.0
    %3287 = vmatpush1.msra.mxu0 0.0
    %3288 = vmatprep.subr.mxu0 0.0
    %3289 = vmatpush1.msra.mxu0 0.0
    %3290 = vmatprep.subr.mxu0 0.0
    %3291 = vmatpush1.msra.mxu0 0.0
    %3292 = vmatprep.subr.mxu0 0.0
    %3293 = vmatpush1.msra.mxu0 0.0
    %3294 = vmatprep.subr.mxu0 0.0
    %3295 = vmatpush1.msra.mxu0 0.0
    %3296 = vmatprep.subr.mxu0 0.0
    %3297 = vmatpush1.msra.mxu0 0.0
    %3298 = vmatprep.subr.mxu0 0.0
    %3299 = vmatpush1.msra.mxu0 0.0
    %3300 = vmatprep.subr.mxu0 0.0
    %3301 = vmatpush1.msra.mxu0 0.0
    %3302 = vmatprep.subr.mxu0 0.0
    %3303 = vmatpush1.msra.mxu0 0.0
    %3304 = vmatprep.subr.mxu0 0.0
    %3305 = vmatpush1.msra.mxu0 0.0
    %3306 = vmatprep.subr.mxu0 0.0
    %3307 = vmatpush1.msra.mxu0 0.0
    %3308 = vmatprep.subr.mxu0 0.0
    %3309 = vmatpush1.msra.mxu0 0.0
    %3310 = vmatprep.subr.mxu0 0.0
    %3311 = vmatpush1.msra.mxu0 0.0
    %3312 = vmatprep.subr.mxu0 0.0
    %3313 = vmatpush1.msra.mxu0 0.0
    %3314 = vmatprep.subr.mxu0 0.0
    %3315 = vmatpush1.msra.mxu0 0.0
    %3316 = vmatprep.subr.mxu0 0.0
    %3317 = vmatpush1.msra.mxu0 0.0
    %3318 = vmatprep.mubr.f32.mxu0 0.0
    %3319 = vmatmul.mubr.f32.gmra.mrb[0].mxu0 %v3178
    %v3320 = vpop.f32.mrb[0].mxu0
    %v3321 = vadd.f32 0.0, %v3320
    %v3322 = vpop.f32.mrb[0].mxu0
    %3323 = vdwg.mxu0
    %v3324 = vadd.f32 %v3180, %v3250
    %v3325 = vxor.u32 %v3324, 2147483648
    %v3326 = vmul.f32 %v3325, 1.442695
    %v3327 = vpow.pop %v3326
    %v3328 = vadd.f32 %v3327, 1.0
    %v3329 = vrcp.pop %v3328
    %v3330 = vmul.f32 1.0, %v3329
    %v3331 = vadd.f32 %v3181, %v3252
    %v3332 = vxor.u32 %v3331, 2147483648
    %v3333 = vmul.f32 %v3332, 1.442695
    %v3334 = vpow.pop %v3333
    %v3335 = vadd.f32 %v3334, 1.0
    %v3336 = vrcp.pop %v3335
    %v3337 = vmul.f32 1.0, %v3336
    %v3338 = vadd.f32 %v3321, %v2180
    %v3339 = vmul.f32 %v3330, %v3338
    %v3340 = vadd.f32 %v3182, %v3339
    %v3341 = vtanh.pop %v3340
    %v3342 = vsub.f32 %v3178, %v3341
    %v3343 = vmul.f32 %v3337, %v3342
    %v3344 = vadd.f32 %v3341, %v3343
    %3345 = vst [vmem:[%s1641] sm:$0xff] %v3344
    %v3346 = vld [vmem:[%s1643] sm:$0xff]
    %v3347 = vld [vmem:[%s1643 + $0x8] sm:$0xff]
    %v3348 = vld [vmem:[%s1643 + $0x10] sm:$0xff]
    %3349 = vmatprep.subr.mxu0 %v1861
    %3350 = vmatpush1.msra.mxu0 %v1860
    %3351 = vmatprep.subr.mxu0 %v1864
    %3352 = vmatpush1.msra.mxu0 %v1863
    %3353 = vmatprep.subr.mxu0 %v1867
    %3354 = vmatpush1.msra.mxu0 %v1866
    %3355 = vmatprep.subr.mxu0 %v1870
    %3356 = vmatpush1.msra.mxu0 %v1869
    %3357 = vmatprep.subr.mxu0 %v1873
    %3358 = vmatpush1.msra.mxu0 %v1872
    %3359 = vmatprep.subr.mxu0 %v1876
    %3360 = vmatpush1.msra.mxu0 %v1875
    %3361 = vmatprep.subr.mxu0 %v1879
    %3362 = vmatpush1.msra.mxu0 %v1878
    %3363 = vmatprep.subr.mxu0 %v1882
    %3364 = vmatpush1.msra.mxu0 %v1881
    %3365 = vmatprep.subr.mxu0 %v1885
    %3366 = vmatpush1.msra.mxu0 %v1884
    %3367 = vmatprep.subr.mxu0 %v1888
    %3368 = vmatpush1.msra.mxu0 %v1887
    %3369 = vmatprep.subr.mxu0 %v1891
    %3370 = vmatpush1.msra.mxu0 %v1890
    %3371 = vmatprep.subr.mxu0 %v1894
    %3372 = vmatpush1.msra.mxu0 %v1893
    %3373 = vmatprep.subr.mxu0 %v1897
    %3374 = vmatpush1.msra.mxu0 %v1896
    %3375 = vmatprep.subr.mxu0 %v1900
    %3376 = vmatpush1.msra.mxu0 %v1899
    %3377 = vmatprep.subr.mxu0 %v1903
    %3378 = vmatpush1.msra.mxu0 %v1902
    %3379 = vmatprep.subr.mxu0 %v1906
    %3380 = vmatpush1.msra.mxu0 %v1905
    %3381 = vmatprep.subr.mxu0 0.0
    %3382 = vmatpush1.msra.mxu0 0.0
    %3383 = vmatprep.subr.mxu0 0.0
    %3384 = vmatpush1.msra.mxu0 0.0
    %3385 = vmatprep.subr.mxu0 0.0
    %3386 = vmatpush1.msra.mxu0 0.0
    %3387 = vmatprep.subr.mxu0 0.0
    %3388 = vmatpush1.msra.mxu0 0.0
    %3389 = vmatprep.subr.mxu0 0.0
    %3390 = vmatpush1.msra.mxu0 0.0
    %3391 = vmatprep.subr.mxu0 0.0
    %3392 = vmatpush1.msra.mxu0 0.0
    %3393 = vmatprep.subr.mxu0 0.0
    %3394 = vmatpush1.msra.mxu0 0.0
    %3395 = vmatprep.subr.mxu0 0.0
    %3396 = vmatpush1.msra.mxu0 0.0
    %3397 = vmatprep.subr.mxu0 0.0
    %3398 = vmatpush1.msra.mxu0 0.0
    %3399 = vmatprep.subr.mxu0 0.0
    %3400 = vmatpush1.msra.mxu0 0.0
    %3401 = vmatprep.subr.mxu0 0.0
    %3402 = vmatpush1.msra.mxu0 0.0
    %3403 = vmatprep.subr.mxu0 0.0
    %3404 = vmatpush1.msra.mxu0 0.0
    %3405 = vmatprep.subr.mxu0 0.0
    %3406 = vmatpush1.msra.mxu0 0.0
    %3407 = vmatprep.subr.mxu0 0.0
    %3408 = vmatpush1.msra.mxu0 0.0
    %3409 = vmatprep.subr.mxu0 0.0
    %3410 = vmatpush1.msra.mxu0 0.0
    %3411 = vmatprep.subr.mxu0 0.0
    %3412 = vmatpush1.msra.mxu0 0.0
    %3413 = vmatprep.mubr.f32.mxu0 0.0
    %3414 = vmatmul.mubr.f32.gmra.mrb[0].mxu0 %v3344
    %v3415 = vpop.f32.mrb[0].mxu0
    %v3416 = vadd.f32 0.0, %v3415
    %v3417 = vpop.f32.mrb[0].mxu0
    %v3418 = vadd.f32 0.0, %v3417
    %3419 = vdwg.mxu0
    %3420 = vmatprep.subr.mxu0 0.0
    %3421 = vmatpush1.msra.mxu0 %v1862
    %3422 = vmatprep.subr.mxu0 0.0
    %3423 = vmatpush1.msra.mxu0 %v1865
    %3424 = vmatprep.subr.mxu0 0.0
    %3425 = vmatpush1.msra.mxu0 %v1868
    %3426 = vmatprep.subr.mxu0 0.0
    %3427 = vmatpush1.msra.mxu0 %v1871
    %3428 = vmatprep.subr.mxu0 0.0
    %3429 = vmatpush1.msra.mxu0 %v1874
    %3430 = vmatprep.subr.mxu0 0.0
    %3431 = vmatpush1.msra.mxu0 %v1877
    %3432 = vmatprep.subr.mxu0 0.0
    %3433 = vmatpush1.msra.mxu0 %v1880
    %3434 = vmatprep.subr.mxu0 0.0
    %3435 = vmatpush1.msra.mxu0 %v1883
    %3436 = vmatprep.subr.mxu0 0.0
    %3437 = vmatpush1.msra.mxu0 %v1886
    %3438 = vmatprep.subr.mxu0 0.0
    %3439 = vmatpush1.msra.mxu0 %v1889
    %3440 = vmatprep.subr.mxu0 0.0
    %3441 = vmatpush1.msra.mxu0 %v1892
    %3442 = vmatprep.subr.mxu0 0.0
    %3443 = vmatpush1.msra.mxu0 %v1895
    %3444 = vmatprep.subr.mxu0 0.0
    %3445 = vmatpush1.msra.mxu0 %v1898
    %3446 = vmatprep.subr.mxu0 0.0
    %3447 = vmatpush1.msra.mxu0 %v1901
    %3448 = vmatprep.subr.mxu0 0.0
    %3449 = vmatpush1.msra.mxu0 %v1904
    %3450 = vmatprep.subr.mxu0 0.0
    %3451 = vmatpush1.msra.mxu0 %v1907
    %3452 = vmatprep.subr.mxu0 0.0
    %3453 = vmatpush1.msra.mxu0 0.0
    %3454 = vmatprep.subr.mxu0 0.0
    %3455 = vmatpush1.msra.mxu0 0.0
    %3456 = vmatprep.subr.mxu0 0.0
    %3457 = vmatpush1.msra.mxu0 0.0
    %3458 = vmatprep.subr.mxu0 0.0
    %3459 = vmatpush1.msra.mxu0 0.0
    %3460 = vmatprep.subr.mxu0 0.0
    %3461 = vmatpush1.msra.mxu0 0.0
    %3462 = vmatprep.subr.mxu0 0.0
    %3463 = vmatpush1.msra.mxu0 0.0
    %3464 = vmatprep.subr.mxu0 0.0
    %3465 = vmatpush1.msra.mxu0 0.0
    %3466 = vmatprep.subr.mxu0 0.0
    %3467 = vmatpush1.msra.mxu0 0.0
    %3468 = vmatprep.subr.mxu0 0.0
    %3469 = vmatpush1.msra.mxu0 0.0
    %3470 = vmatprep.subr.mxu0 0.0
    %3471 = vmatpush1.msra.mxu0 0.0
    %3472 = vmatprep.subr.mxu0 0.0
    %3473 = vmatpush1.msra.mxu0 0.0
    %3474 = vmatprep.subr.mxu0 0.0
    %3475 = vmatpush1.msra.mxu0 0.0
    %3476 = vmatprep.subr.mxu0 0.0
    %3477 = vmatpush1.msra.mxu0 0.0
    %3478 = vmatprep.subr.mxu0 0.0
    %3479 = vmatpush1.msra.mxu0 0.0
    %3480 = vmatprep.subr.mxu0 0.0
    %3481 = vmatpush1.msra.mxu0 0.0
    %3482 = vmatprep.subr.mxu0 0.0
    %3483 = vmatpush1.msra.mxu0 0.0
    %3484 = vmatprep.mubr.f32.mxu0 0.0
    %3485 = vmatmul.mubr.f32.gmra.mrb[0].mxu0 %v3344
    %v3486 = vpop.f32.mrb[0].mxu0
    %v3487 = vadd.f32 0.0, %v3486
    %v3488 = vpop.f32.mrb[0].mxu0
    %3489 = vdwg.mxu0
    %v3490 = vadd.f32 %v3346, %v3416
    %v3491 = vxor.u32 %v3490, 2147483648
    %v3492 = vmul.f32 %v3491, 1.442695
    %v3493 = vpow.pop %v3492
    %v3494 = vadd.f32 %v3493, 1.0
    %v3495 = vrcp.pop %v3494
    %v3496 = vmul.f32 1.0, %v3495
    %v3497 = vadd.f32 %v3347, %v3418
    %v3498 = vxor.u32 %v3497, 2147483648
    %v3499 = vmul.f32 %v3498, 1.442695
    %v3500 = vpow.pop %v3499
    %v3501 = vadd.f32 %v3500, 1.0
    %v3502 = vrcp.pop %v3501
    %v3503 = vmul.f32 1.0, %v3502
    %v3504 = vadd.f32 %v3487, %v2180
    %v3505 = vmul.f32 %v3496, %v3504
    %v3506 = vadd.f32 %v3348, %v3505
    %v3507 = vtanh.pop %v3506
    %v3508 = vsub.f32 %v3344, %v3507
    %v3509 = vmul.f32 %v3503, %v3508
    %v3510 = vadd.f32 %v3507, %v3509
    %3511 = vst [vmem:[%s1809] sm:$0xff] %v3510
    %s3512 = scalar_lea.vmem %s13, 8
    %3513 = vst [vmem:[%s3512] sm:$0xff] %v3510
    %v3514 = vld [vmem:[#allocation3] sm:$0xff]
    %v3515 = vld [vmem:[#allocation3 + $0x8] sm:$0xff]
    %v3516 = vld [vmem:[#allocation3 + $0x10] sm:$0xff]
    %v3517 = vld [vmem:[#allocation3 + $0x18] sm:$0xff]
    %v3518 = vld [vmem:[#allocation3 + $0x20] sm:$0xff]
    %v3519 = vld [vmem:[#allocation3 + $0x28] sm:$0xff]
    %v3520 = vld [vmem:[#allocation3 + $0x30] sm:$0xff]
    %v3521 = vld [vmem:[#allocation3 + $0x38] sm:$0xff]
    %v3522 = vld [vmem:[%s10] sm:$0xff]
    %v3523 = vld [vmem:[%s10 + $0x8] sm:$0xff]
    %v3524 = vld [vmem:[%s10 + $0x10] sm:$0xff]
    %v3525 = vld [vmem:[%s10 + $0x18] sm:$0xff]
    %v3526 = vld [vmem:[%s10 + $0x20] sm:$0xff]
    %v3527 = vld [vmem:[%s10 + $0x28] sm:$0xff]
    %v3528 = vld [vmem:[%s10 + $0x30] sm:$0xff]
    %v3529 = vld [vmem:[%s10 + $0x38] sm:$0xff]
    %v3530 = vld [vmem:[%s10 + $0x40] sm:$0xff]
    %v3531 = vld [vmem:[%s10 + $0x48] sm:$0xff]
    %v3532 = vld [vmem:[%s10 + $0x50] sm:$0xff]
    %v3533 = vld [vmem:[%s10 + $0x58] sm:$0xff]
    %v3534 = vld [vmem:[%s10 + $0x60] sm:$0xff]
    %v3535 = vld [vmem:[%s10 + $0x68] sm:$0xff]
    %v3536 = vld [vmem:[%s10 + $0x70] sm:$0xff]
    %v3537 = vld [vmem:[%s10 + $0x78] sm:$0xff]
    %v3538 = vld [vmem:[%s11] sm:$0x1]
    %v3540 = vlaneseq
    %v3541 = vshrl.u32 %v3540, 7
    %v3542 = vsub.s32 0, %v3541
    %v3543 = vrot.slane %v3538, %v3542
    %3545 = vmatprep.subr.mxu0 0.0
    %3546 = vmatpush1.msra.mxu0 %v3522
    %3547 = vmatprep.subr.mxu0 0.0
    %3548 = vmatpush1.msra.mxu0 %v3523
    %3549 = vmatprep.subr.mxu0 0.0
    %3550 = vmatpush1.msra.mxu0 %v3524
    %3551 = vmatprep.subr.mxu0 0.0
    %3552 = vmatpush1.msra.mxu0 %v3525
    %3553 = vmatprep.subr.mxu0 0.0
    %3554 = vmatpush1.msra.mxu0 %v3526
    %3555 = vmatprep.subr.mxu0 0.0
    %3556 = vmatpush1.msra.mxu0 %v3527
    %3557 = vmatprep.subr.mxu0 0.0
    %3558 = vmatpush1.msra.mxu0 %v3528
    %3559 = vmatprep.subr.mxu0 0.0
    %3560 = vmatpush1.msra.mxu0 %v3529
    %3561 = vmatprep.subr.mxu0 0.0
    %3562 = vmatpush1.msra.mxu0 %v3530
    %3563 = vmatprep.subr.mxu0 0.0
    %3564 = vmatpush1.msra.mxu0 %v3531
    %3565 = vmatprep.subr.mxu0 0.0
    %3566 = vmatpush1.msra.mxu0 %v3532
    %3567 = vmatprep.subr.mxu0 0.0
    %3568 = vmatpush1.msra.mxu0 %v3533
    %3569 = vmatprep.subr.mxu0 0.0
    %3570 = vmatpush1.msra.mxu0 %v3534
    %3571 = vmatprep.subr.mxu0 0.0
    %3572 = vmatpush1.msra.mxu0 %v3535
    %3573 = vmatprep.subr.mxu0 0.0
    %3574 = vmatpush1.msra.mxu0 %v3536
    %3575 = vmatprep.subr.mxu0 0.0
    %3576 = vmatpush1.msra.mxu0 %v3537
    %3577 = vmatprep.subr.mxu0 0.0
    %3578 = vmatpush1.msra.mxu0 0.0
    %3579 = vmatprep.subr.mxu0 0.0
    %3580 = vmatpush1.msra.mxu0 0.0
    %3581 = vmatprep.subr.mxu0 0.0
    %3582 = vmatpush1.msra.mxu0 0.0
    %3583 = vmatprep.subr.mxu0 0.0
    %3584 = vmatpush1.msra.mxu0 0.0
    %3585 = vmatprep.subr.mxu0 0.0
    %3586 = vmatpush1.msra.mxu0 0.0
    %3587 = vmatprep.subr.mxu0 0.0
    %3588 = vmatpush1.msra.mxu0 0.0
    %3589 = vmatprep.subr.mxu0 0.0
    %3590 = vmatpush1.msra.mxu0 0.0
    %3591 = vmatprep.subr.mxu0 0.0
    %3592 = vmatpush1.msra.mxu0 0.0
    %3593 = vmatprep.subr.mxu0 0.0
    %3594 = vmatpush1.msra.mxu0 0.0
    %3595 = vmatprep.subr.mxu0 0.0
    %3596 = vmatpush1.msra.mxu0 0.0
    %3597 = vmatprep.subr.mxu0 0.0
    %3598 = vmatpush1.msra.mxu0 0.0
    %3599 = vmatprep.subr.mxu0 0.0
    %3600 = vmatpush1.msra.mxu0 0.0
    %3601 = vmatprep.subr.mxu0 0.0
    %3602 = vmatpush1.msra.mxu0 0.0
    %3603 = vmatprep.subr.mxu0 0.0
    %3604 = vmatpush1.msra.mxu0 0.0
    %3605 = vmatprep.subr.mxu0 0.0
    %3606 = vmatpush1.msra.mxu0 0.0
    %3607 = vmatprep.subr.mxu0 0.0
    %3608 = vmatpush1.msra.mxu0 0.0
    %3609 = vmatprep.mubr.f32.mxu0 0.0
    %3610 = vmatmul.mubr.f32.gmra.mrb[0].mxu0 %v3514
    %v3611 = vpop.f32.mrb[0].mxu0
    %v3612 = vadd.f32 %v3543, %v3611
    %v3613 = vpop.f32.mrb[0].mxu0
    %3614 = vmatprep.mubr.f32.mxu0 0.0
    %3615 = vmatmul.mubr.f32.gmra.mrb[0].mxu0 %v3515
    %v3616 = vpop.f32.mrb[0].mxu0
    %v3617 = vadd.f32 %v3543, %v3616
    %v3618 = vpop.f32.mrb[0].mxu0
    %3619 = vmatprep.mubr.f32.mxu0 0.0
    %3620 = vmatmul.mubr.f32.gmra.mrb[0].mxu0 %v3516
    %v3621 = vpop.f32.mrb[0].mxu0
    %v3622 = vadd.f32 %v3543, %v3621
    %v3623 = vpop.f32.mrb[0].mxu0
    %3624 = vmatprep.mubr.f32.mxu0 0.0
    %3625 = vmatmul.mubr.f32.gmra.mrb[0].mxu0 %v3517
    %v3626 = vpop.f32.mrb[0].mxu0
    %v3627 = vadd.f32 %v3543, %v3626
    %v3628 = vpop.f32.mrb[0].mxu0
    %3629 = vmatprep.mubr.f32.mxu0 0.0
    %3630 = vmatmul.mubr.f32.gmra.mrb[0].mxu0 %v3518
    %v3631 = vpop.f32.mrb[0].mxu0
    %v3632 = vadd.f32 %v3543, %v3631
    %v3633 = vpop.f32.mrb[0].mxu0
    %3634 = vmatprep.mubr.f32.mxu0 0.0
    %3635 = vmatmul.mubr.f32.gmra.mrb[0].mxu0 %v3519
    %v3636 = vpop.f32.mrb[0].mxu0
    %v3637 = vadd.f32 %v3543, %v3636
    %v3638 = vpop.f32.mrb[0].mxu0
    %3639 = vmatprep.mubr.f32.mxu0 0.0
    %3640 = vmatmul.mubr.f32.gmra.mrb[0].mxu0 %v3520
    %v3641 = vpop.f32.mrb[0].mxu0
    %v3642 = vadd.f32 %v3543, %v3641
    %v3643 = vpop.f32.mrb[0].mxu0
    %3644 = vmatprep.mubr.f32.mxu0 0.0
    %3645 = vmatmul.mubr.f32.gmra.mrb[0].mxu0 %v3521
    %v3646 = vpop.f32.mrb[0].mxu0
    %v3647 = vadd.f32 %v3543, %v3646
    %v3648 = vpop.f32.mrb[0].mxu0
    %3649 = vdwg.mxu0
    %3650 = vst [vmem:[%s12] sm:$0xff] %v3612
    %3651 = vst [vmem:[%s12 + $0x8] sm:$0xff] %v3617
    %3652 = vst [vmem:[%s12 + $0x10] sm:$0xff] %v3622
    %3653 = vst [vmem:[%s12 + $0x18] sm:$0xff] %v3627
    %3654 = vst [vmem:[%s12 + $0x20] sm:$0xff] %v3632
    %3655 = vst [vmem:[%s12 + $0x28] sm:$0xff] %v3637
    %3656 = vst [vmem:[%s12 + $0x30] sm:$0xff] %v3642
    %3657 = vst [vmem:[%s12 + $0x38] sm:$0xff] %v3647
    // Predicated region
    $region66: #{char_rnn_forward.1} parent=1 // pred_check
      _
    $region67: #{char_rnn_forward.1} parent=1 // pred_check_branch
      %3659 = sbr.rel (0) target = $region69
    $region68: #{char_rnn_forward.1} parent=1 // pred_region
      _
    $region69: #{char_rnn_forward.1} parent=1 // pred_fallthru
      _
    // Predicated region
    $region70: #{char_rnn_forward.1} parent=1 // pred_check
      _
    $region71: #{char_rnn_forward.1} parent=1 // pred_check_branch
      %3661 = sbr.rel (0) target = $region73
    $region72: #{char_rnn_forward.1} parent=1 // pred_region
      _
    $region73: #{char_rnn_forward.1} parent=1 // pred_fallthru
      _
    // Predicated region
    $region74: #{char_rnn_forward.1} parent=1 // pred_check
      _
    $region75: #{char_rnn_forward.1} parent=1 // pred_check_branch
      %3663 = sbr.rel (0) target = $region77
    $region76: #{char_rnn_forward.1} parent=1 // pred_region
      _
    $region77: #{char_rnn_forward.1} parent=1 // pred_fallthru
      _
    // Predicated region
    $region78: #{char_rnn_forward.1} parent=1 // pred_check
      _
    $region79: #{char_rnn_forward.1} parent=1 // pred_check_branch
      %3665 = sbr.rel (0) target = $region81
    $region80: #{char_rnn_forward.1} parent=1 // pred_region
      _
    $region81: #{char_rnn_forward.1} parent=1 // pred_fallthru
      _
    %3666 = vsyncpa [#allocation5], 1
    %3667 = vsyncpa [#allocation7], 1
    %3668 = vsyncpa [#allocation10], 1

</llo_original>
